<compile_context>
chip_gen: v6e
topology: v6e:2x2x1
jax: 0.10.0
libtpu: 0.0.40
codegen_flags: <defaults>
</compile_context>

<pallas_src>
import functools

import jax
import jax.numpy as jnp
from jax.experimental import pallas as pl
from jax.experimental.pallas import tpu as pltpu


def _fourier_net_kernel(x_ref, wf_ref, w1s_ref, w1c_ref, b1_ref, *rest,
                        num_rest_layers, compute_dtype):
    # Per grid step:
    #   x_ref:   (TB, in_features)        f32   (batch-tiled)
    #   wf_ref:  (in_features, hidden//2) f32
    #   w1s_ref: (hidden//2, hidden)      compute_dtype  (sin half of first hidden W)
    #   w1c_ref: (hidden//2, hidden)      compute_dtype  (cos half of first hidden W)
    #   b1_ref:  (1, hidden)              f32
    #   [wh_ref: (L-1, hidden, hidden) compute_dtype, bh_ref: (L-1, hidden) f32]
    #   wo_ref:  (hidden, out_features)   compute_dtype
    #   bo_ref:  (1, out_features)        f32
    #   o_ref:   (TB, out_features)
    if num_rest_layers > 0:
        wh_ref, bh_ref, wo_ref, bo_ref, o_ref = rest
    else:
        wo_ref, bo_ref, o_ref = rest

    x = x_ref[...].astype(jnp.float32)
    wf = wf_ref[...].astype(jnp.float32)

    # ---- Fourier embedding on the VPU (K = in_features is tiny) -------------
    in_features = x.shape[1]
    z = x[:, 0:1] * wf[0:1, :]
    for k in range(1, in_features):
        z = z + x[:, k:k + 1] * wf[k:k + 1, :]

    # sin/cos in f32; tanh (EUP-bound) in compute_dtype.  No lane-axis concat:
    # the consuming weight was split into sin/cos halves host-side.
    hs = jnp.tanh(jnp.sin(z).astype(compute_dtype))
    hc = jnp.tanh(jnp.cos(z).astype(compute_dtype))

    pre = (jnp.dot(hs, w1s_ref[...], preferred_element_type=jnp.float32)
           + jnp.dot(hc, w1c_ref[...], preferred_element_type=jnp.float32)
           + b1_ref[...])
    h = jnp.tanh(pre.astype(compute_dtype))

    # Remaining hidden layers (static unroll; layer count is a compile-time constant).
    for l in range(num_rest_layers):
        pre = (jnp.dot(h, wh_ref[l], preferred_element_type=jnp.float32)
               + bh_ref[l:l + 1, :])
        h = jnp.tanh(pre.astype(compute_dtype))

    # Output linear, no activation, f32 accumulation.
    y = jnp.dot(h, wo_ref[...], preferred_element_type=jnp.float32) + bo_ref[...]
    o_ref[...] = y.astype(o_ref.dtype)


def _pick_batch_tile(B):
    """Largest multiple-of-8 tile <= 2048 that divides B while keeping at least
    two grid steps (v7x has 2 TensorCores); fall back to the whole batch."""
    upper = min(B // 2, 2048)
    start = upper - (upper % 8)
    for t in range(start, 7, -8):
        if B % t == 0:
            return t
    return B


def fourier_net_forward(x, wf, wh, bh, wo, bo, *, batch_tile=None,
                        compute_dtype=jnp.float32):
    """x: (B, in); wf: (in, hidden//2); wh: (L, hidden, hidden); bh: (L, hidden);
    wo: (hidden, out); bo: (out,). Weights are pre-transposed to (in_features, out_features)."""
    B, in_features = x.shape
    hidden, out_features = wo.shape
    half = hidden // 2
    L = wh.shape[0]
    assert L >= 1, "fourier_net_forward expects num_hidden_layers >= 1"

    if batch_tile is None:
        batch_tile = _pick_batch_tile(B)
    assert B % batch_tile == 0, f"batch {B} not divisible by batch_tile {batch_tile}"

    # Host-side parameter prep: split the first hidden weight into the halves that consume
    # sin(z)/cos(z); reshape biases to 2-D; cast matmul weights to compute_dtype.
    bh = jnp.reshape(bh, (L, hidden)).astype(jnp.float32)
    w1_sin = wh[0, :half, :].astype(compute_dtype)
    w1_cos = wh[0, half:, :].astype(compute_dtype)
    b1 = bh[0:1, :]                                   # (1, hidden)
    L_rest = L - 1
    wf_f32 = wf.astype(jnp.float32)
    wo_c = wo.astype(compute_dtype)
    bo_2d = jnp.reshape(bo, (1, out_features)).astype(jnp.float32)

    kernel = functools.partial(_fourier_net_kernel,
                               num_rest_layers=L_rest,
                               compute_dtype=compute_dtype)

    args = [x, wf_f32, w1_sin, w1_cos, b1]
    in_specs = [
        pl.BlockSpec((batch_tile, in_features), lambda i: (i, 0)),   # x (batch-tiled)
        pl.BlockSpec((in_features, half), lambda i: (0, 0)),         # Wf
        pl.BlockSpec((half, hidden), lambda i: (0, 0)),              # W1 sin half
        pl.BlockSpec((half, hidden), lambda i: (0, 0)),              # W1 cos half
        pl.BlockSpec((1, hidden), lambda i: (0, 0)),                 # b1
    ]
    if L_rest > 0:
        wh_rest = wh[1:].astype(compute_dtype)
        bh_rest = bh[1:]
        args += [wh_rest, bh_rest]
        in_specs += [
            pl.BlockSpec((L_rest, hidden, hidden), lambda i: (0, 0, 0)),  # hidden Ws
            pl.BlockSpec((L_rest, hidden), lambda i: (0, 0)),             # hidden bs
        ]
    args += [wo_c, bo_2d]
    in_specs += [
        pl.BlockSpec((hidden, out_features), lambda i: (0, 0)),      # Wo
        pl.BlockSpec((1, out_features), lambda i: (0, 0)),           # bo
    ]

    return pl.pallas_call(
        kernel,
        out_shape=jax.ShapeDtypeStruct((B, out_features), x.dtype),
        grid_spec=pltpu.PrefetchScalarGridSpec(
            num_scalar_prefetch=0,
            grid=(B // batch_tile,),
            in_specs=in_specs,
            out_specs=pl.BlockSpec((batch_tile, out_features), lambda i: (i, 0)),
        ),
        compiler_params=pltpu.CompilerParams(
            dimension_semantics=("parallel",),   # batch axis -> both v7x TensorCores
        ),
    )(*args)


def fourier_net_reference(x, wf, wh, bh, wo, bo):
    hp = jax.lax.Precision.HIGHEST
    z = jnp.dot(x, wf, precision=hp)
    h = jnp.tanh(jnp.concatenate([jnp.sin(z), jnp.cos(z)], axis=-1))
    for l in range(wh.shape[0]):
        h = jnp.tanh(jnp.dot(h, wh[l], precision=hp) + bh[l])
    return jnp.dot(h, wo, precision=hp) + bo


if __name__ == "__main__":
    # Module hyperparameters (consistent with Fourier_Net's __init__), small demo shapes.
    in_features = 2
    out_features = 4
    hidden_features = 64
    num_hidden_layers = 2
    fourier_std = 3.0

    B = 256   # default tiling -> batch_tile=128, grid=(2,)  (>=2 steps for v7x megacore)
    key = jax.random.PRNGKey(0)
    k_x, k_wf, k_wh, k_bh, k_wo, k_bo = jax.random.split(key, 6)

    dtype = jnp.float32
    x = jax.random.normal(k_x, (B, in_features), dtype=dtype)

    # Deterministic synthetic parameters (shapes match the PyTorch module, pre-transposed).
    wf = (fourier_std * jax.random.normal(k_wf, (in_features, hidden_features // 2))).astype(dtype)
    bound_h = 1.0 / jnp.sqrt(hidden_features)
    wh = (bound_h * jax.random.normal(
        k_wh, (num_hidden_layers, hidden_features, hidden_features))).astype(dtype)
    bh = jax.random.uniform(
        k_bh, (num_hidden_layers, hidden_features),
        minval=-bound_h, maxval=bound_h).astype(dtype)
    wo = (bound_h * jax.random.normal(k_wo, (hidden_features, out_features))).astype(dtype)
    bo = jax.random.uniform(
        k_bo, (out_features,), minval=-bound_h, maxval=bound_h).astype(dtype)

    # f32 path (all TPU generations) — check vs pure-JAX reference.
    out = jax.block_until_ready(fourier_net_forward(x, wf, wh, bh, wo, bo))
    ref = jax.block_until_ready(fourier_net_reference(x, wf, wh, bh, wo, bo))
    assert out.shape == (B, out_features)
    assert jnp.allclose(out, ref, atol=5e-3, rtol=5e-3), "mismatch vs JAX reference (f32 path)"

    # bf16-activation path: worthwhile on v6e/v7x (native bf16 VPU/EUP); skipped on
    # v5e and older where bf16 elementwise math is not supported / not beneficial.
    kind = jax.devices()[0].device_kind.lower()
    if not any(v in kind for v in ("v2", "v3", "v4", "v5")):
        out_bf16 = jax.block_until_ready(
            fourier_net_forward(x, wf, wh, bh, wo, bo, compute_dtype=jnp.bfloat16))
        assert jnp.allclose(out_bf16, ref, atol=1e-1, rtol=1e-1), \
            "mismatch vs JAX reference (bf16 path)"

    print("KERNEL_OK")
</pallas_src>

<mosaic_0001>
module attributes {stable_mosaic.version = 11 : i64} {
  func.func @_fourier_net_kernel(%arg0: i32, %arg1: memref<128x2xf32, #tpu.memory_space<vmem>>, %arg2: memref<2x32xf32, #tpu.memory_space<vmem>>, %arg3: memref<32x64xf32, #tpu.memory_space<vmem>>, %arg4: memref<32x64xf32, #tpu.memory_space<vmem>>, %arg5: memref<1x64xf32, #tpu.memory_space<vmem>>, %arg6: memref<1x64x64xf32, #tpu.memory_space<vmem>>, %arg7: memref<1x64xf32, #tpu.memory_space<vmem>>, %arg8: memref<64x4xf32, #tpu.memory_space<vmem>>, %arg9: memref<1x4xf32, #tpu.memory_space<vmem>>, %arg10: memref<128x4xf32, #tpu.memory_space<vmem>>) attributes {dimension_semantics = [#tpu.dimension_semantics<parallel>], iteration_bounds = array<i64: 2>, scalar_prefetch = 0 : i64, scratch_operands = 0 : i64, tpu.core_type = #tpu.core_type<tc>, window_params = [{transform_indices = @transform_0, window_bounds = array<i64: 128, 2>}, {pipeline_mode = #tpu.pipeline_mode<synchronous>, transform_indices = @transform_1, window_bounds = array<i64: 2, 32>}, {pipeline_mode = #tpu.pipeline_mode<synchronous>, transform_indices = @transform_2, window_bounds = array<i64: 32, 64>}, {pipeline_mode = #tpu.pipeline_mode<synchronous>, transform_indices = @transform_3, window_bounds = array<i64: 32, 64>}, {pipeline_mode = #tpu.pipeline_mode<synchronous>, transform_indices = @transform_4, window_bounds = array<i64: 1, 64>}, {pipeline_mode = #tpu.pipeline_mode<synchronous>, transform_indices = @transform_5, window_bounds = array<i64: 1, 64, 64>}, {pipeline_mode = #tpu.pipeline_mode<synchronous>, transform_indices = @transform_6, window_bounds = array<i64: 1, 64>}, {pipeline_mode = #tpu.pipeline_mode<synchronous>, transform_indices = @transform_7, window_bounds = array<i64: 64, 4>}, {pipeline_mode = #tpu.pipeline_mode<synchronous>, transform_indices = @transform_8, window_bounds = array<i64: 1, 4>}, {transform_indices = @transform_9, window_bounds = array<i64: 128, 4>}]} {
    %c0 = arith.constant 0 : index
    %c0_0 = arith.constant 0 : index
    %0 = vector.load %arg1[%c0, %c0_0] : memref<128x2xf32, #tpu.memory_space<vmem>>, vector<128x2xf32>
    %c0_1 = arith.constant 0 : index
    %c0_2 = arith.constant 0 : index
    %1 = vector.load %arg2[%c0_1, %c0_2] : memref<2x32xf32, #tpu.memory_space<vmem>>, vector<2x32xf32>
    %2 = vector.extract_strided_slice %0 {offsets = [0, 0], sizes = [128, 1], strides = [1, 1]} : vector<128x2xf32> to vector<128x1xf32>
    %3 = vector.extract_strided_slice %1 {offsets = [0, 0], sizes = [1, 32], strides = [1, 1]} : vector<2x32xf32> to vector<1x32xf32>
    %4 = vector.broadcast %2 : vector<128x1xf32> to vector<128x32xf32>
    %5 = vector.broadcast %3 : vector<1x32xf32> to vector<128x32xf32>
    %6 = arith.mulf %4, %5 : vector<128x32xf32>
    %7 = vector.extract_strided_slice %0 {offsets = [0, 1], sizes = [128, 1], strides = [1, 1]} : vector<128x2xf32> to vector<128x1xf32>
    %8 = vector.extract_strided_slice %1 {offsets = [1, 0], sizes = [1, 32], strides = [1, 1]} : vector<2x32xf32> to vector<1x32xf32>
    %9 = vector.broadcast %7 : vector<128x1xf32> to vector<128x32xf32>
    %10 = vector.broadcast %8 : vector<1x32xf32> to vector<128x32xf32>
    %11 = arith.mulf %9, %10 : vector<128x32xf32>
    %12 = arith.addf %6, %11 : vector<128x32xf32>
    %13 = math.sin %12 : vector<128x32xf32>
    %14 = math.tanh %13 : vector<128x32xf32>
    %15 = math.cos %12 : vector<128x32xf32>
    %16 = math.tanh %15 : vector<128x32xf32>
    %c0_3 = arith.constant 0 : index
    %c0_4 = arith.constant 0 : index
    %17 = vector.load %arg3[%c0_3, %c0_4] : memref<32x64xf32, #tpu.memory_space<vmem>>, vector<32x64xf32>
    %cst = arith.constant dense<0.000000e+00> : vector<128x64xf32>
    %18 = tpu.matmul %14, %17, %cst {dimension_numbers = #tpu.dot_dimension_numbers<[1], [0], [0], [1], [0, 0, 1, 1], [], []>} : vector<128x32xf32>, vector<32x64xf32>, vector<128x64xf32> -> vector<128x64xf32>
    %c0_5 = arith.constant 0 : index
    %c0_6 = arith.constant 0 : index
    %19 = vector.load %arg4[%c0_5, %c0_6] : memref<32x64xf32, #tpu.memory_space<vmem>>, vector<32x64xf32>
    %cst_7 = arith.constant dense<0.000000e+00> : vector<128x64xf32>
    %20 = tpu.matmul %16, %19, %cst_7 {dimension_numbers = #tpu.dot_dimension_numbers<[1], [0], [0], [1], [0, 0, 1, 1], [], []>} : vector<128x32xf32>, vector<32x64xf32>, vector<128x64xf32> -> vector<128x64xf32>
    %21 = arith.addf %18, %20 : vector<128x64xf32>
    %c0_8 = arith.constant 0 : index
    %c0_9 = arith.constant 0 : index
    %22 = vector.load %arg5[%c0_8, %c0_9] : memref<1x64xf32, #tpu.memory_space<vmem>>, vector<1x64xf32>
    %23 = vector.broadcast %22 : vector<1x64xf32> to vector<128x64xf32>
    %24 = arith.addf %21, %23 : vector<128x64xf32>
    %25 = math.tanh %24 : vector<128x64xf32>
    %c0_10 = arith.constant 0 : index
    %c0_11 = arith.constant 0 : index
    %c0_12 = arith.constant 0 : index
    %26 = vector.load %arg6[%c0_10, %c0_11, %c0_12] : memref<1x64x64xf32, #tpu.memory_space<vmem>>, vector<1x64x64xf32>
    %27 = vector.shape_cast %26 : vector<1x64x64xf32> to vector<64x64xf32>
    %cst_13 = arith.constant dense<0.000000e+00> : vector<128x64xf32>
    %28 = tpu.matmul %25, %27, %cst_13 {dimension_numbers = #tpu.dot_dimension_numbers<[1], [0], [0], [1], [0, 0, 1, 1], [], []>} : vector<128x64xf32>, vector<64x64xf32>, vector<128x64xf32> -> vector<128x64xf32>
    %c0_14 = arith.constant 0 : index
    %c0_15 = arith.constant 0 : index
    %29 = vector.load %arg7[%c0_14, %c0_15] : memref<1x64xf32, #tpu.memory_space<vmem>>, vector<1x64xf32>
    %30 = vector.broadcast %29 : vector<1x64xf32> to vector<128x64xf32>
    %31 = arith.addf %28, %30 : vector<128x64xf32>
    %32 = math.tanh %31 : vector<128x64xf32>
    %c0_16 = arith.constant 0 : index
    %c0_17 = arith.constant 0 : index
    %33 = vector.load %arg8[%c0_16, %c0_17] : memref<64x4xf32, #tpu.memory_space<vmem>>, vector<64x4xf32>
    %cst_18 = arith.constant dense<0.000000e+00> : vector<128x4xf32>
    %34 = tpu.matmul %32, %33, %cst_18 {dimension_numbers = #tpu.dot_dimension_numbers<[1], [0], [0], [1], [0, 0, 1, 1], [], []>} : vector<128x64xf32>, vector<64x4xf32>, vector<128x4xf32> -> vector<128x4xf32>
    %c0_19 = arith.constant 0 : index
    %c0_20 = arith.constant 0 : index
    %35 = vector.load %arg9[%c0_19, %c0_20] : memref<1x4xf32, #tpu.memory_space<vmem>>, vector<1x4xf32>
    %36 = vector.broadcast %35 : vector<1x4xf32> to vector<128x4xf32>
    %37 = arith.addf %34, %36 : vector<128x4xf32>
    %c0_21 = arith.constant 0 : index
    %c0_22 = arith.constant 0 : index
    %38 = vector.load %arg10[%c0_21, %c0_22] : memref<128x4xf32, #tpu.memory_space<vmem>>, vector<128x4xf32>
    tpu.vector_store %arg10[%c0_21, %c0_22], %37 {strides = array<i32>} : memref<128x4xf32, #tpu.memory_space<vmem>>, vector<128x4xf32>,
    return
  }
  func.func @transform_0(%arg0: i32) -> (i32, i32) {
    %c0_i32 = arith.constant 0 : i32
    %c0_i32_0 = arith.constant 0 : i32
    return %arg0, %c0_i32 : i32, i32
  }
  func.func @transform_1(%arg0: i32) -> (i32, i32) {
    %c0_i32 = arith.constant 0 : i32
    %c0_i32_0 = arith.constant 0 : i32
    %c0_i32_1 = arith.constant 0 : i32
    return %c0_i32, %c0_i32_0 : i32, i32
  }
  func.func @transform_2(%arg0: i32) -> (i32, i32) {
    %c0_i32 = arith.constant 0 : i32
    %c0_i32_0 = arith.constant 0 : i32
    %c0_i32_1 = arith.constant 0 : i32
    return %c0_i32, %c0_i32_0 : i32, i32
  }
  func.func @transform_3(%arg0: i32) -> (i32, i32) {
    %c0_i32 = arith.constant 0 : i32
    %c0_i32_0 = arith.constant 0 : i32
    %c0_i32_1 = arith.constant 0 : i32
    return %c0_i32, %c0_i32_0 : i32, i32
  }
  func.func @transform_4(%arg0: i32) -> (i32, i32) {
    %c0_i32 = arith.constant 0 : i32
    %c0_i32_0 = arith.constant 0 : i32
    %c0_i32_1 = arith.constant 0 : i32
    return %c0_i32, %c0_i32_0 : i32, i32
  }
  func.func @transform_5(%arg0: i32) -> (i32, i32, i32) {
    %c0_i32 = arith.constant 0 : i32
    %c0_i32_0 = arith.constant 0 : i32
    %c0_i32_1 = arith.constant 0 : i32
    %c0_i32_2 = arith.constant 0 : i32
    return %c0_i32, %c0_i32_0, %c0_i32_1 : i32, i32, i32
  }
  func.func @transform_6(%arg0: i32) -> (i32, i32) {
    %c0_i32 = arith.constant 0 : i32
    %c0_i32_0 = arith.constant 0 : i32
    %c0_i32_1 = arith.constant 0 : i32
    return %c0_i32, %c0_i32_0 : i32, i32
  }
  func.func @transform_7(%arg0: i32) -> (i32, i32) {
    %c0_i32 = arith.constant 0 : i32
    %c0_i32_0 = arith.constant 0 : i32
    %c0_i32_1 = arith.constant 0 : i32
    return %c0_i32, %c0_i32_0 : i32, i32
  }
  func.func @transform_8(%arg0: i32) -> (i32, i32) {
    %c0_i32 = arith.constant 0 : i32
    %c0_i32_0 = arith.constant 0 : i32
    %c0_i32_1 = arith.constant 0 : i32
    return %c0_i32, %c0_i32_0 : i32, i32
  }
  func.func @transform_9(%arg0: i32) -> (i32, i32) {
    %c0_i32 = arith.constant 0 : i32
    %c0_i32_0 = arith.constant 0 : i32
    return %arg0, %c0_i32 : i32, i32
  }
}

</mosaic_0001>

<llo_original>
// kernel: tpu_custom_call.1
$region0: #{tpu_custom_call.1}
  #allocation0 [shape = 'u32[]', space=smem, size = 0x4, offset = 0x4, fixed_abs, tag = 'smem constant byte address 0x4 - core index']
  #allocation1 [shape = 'u32[144,128]{1,0:T(1,128)}', space=vmem, size = 0x12000, scoped, tag = 'internal scratch']
  %s0 = inlined_call_operand.vmem [shape: f32[256,2], index: 0, kind: input, shape index: {}]
  %s1 = inlined_call_operand.vmem [shape: f32[2,32], index: 1, kind: input, shape index: {}]
  %s2 = inlined_call_operand.vmem [shape: f32[32,64], index: 2, kind: input, shape index: {}]
  %s3 = inlined_call_operand.vmem [shape: f32[32,64], index: 3, kind: input, shape index: {}]
  %s4 = inlined_call_operand.vmem [shape: f32[1,64], index: 4, kind: input, shape index: {}]
  %s5 = inlined_call_operand.vmem [shape: f32[1,64,64], index: 5, kind: input, shape index: {}]
  %s6 = inlined_call_operand.vmem [shape: f32[1,64], index: 6, kind: input, shape index: {}]
  %s7 = inlined_call_operand.vmem [shape: f32[64,4], index: 7, kind: input, shape index: {}]
  %s8 = inlined_call_operand.vmem [shape: f32[1,4], index: 8, kind: input, shape index: {}]
  %s9 = inlined_call_operand.vmem [shape: f32[256,4], index: 9, kind: output, shape index: {}]
  %s10 = sld [smem:[#allocation0]]
  $region69: #{tpu_custom_call.1} parent=0
    _
  %s12 = ssub.s32 1, %s10
  %s13 = scalar_select 0, %s12, %s10
  loop: start=0, step=1, limit=4
  $region2: #{tpu_custom_call.1} parent=0 // loop_pre_header
    _
  $region3: #{tpu_custom_call.1} parent=0 // loop_header
    %s15 = sphi 0, %s19
    %p16 = scmp.ge.s32.totalorder %s15, 4
    %s25 = sphi 0, %s27
    %s28 = sphi 0, %s25
    %s29 = sphi 0, %s28
    %s45 = sphi 0, %s29
    %s49 = sphi 0, %s49
    %s51 = sphi 0, %s49
    %s52 = sphi 0, %s51
    %s66 = sphi 0, %s52
    %s70 = sphi 0, %s70
    %s72 = sphi 0, %s70
    %s73 = sphi 0, %s72
    %s87 = sphi 0, %s73
    %s91 = sphi 0, %s91
    %s93 = sphi 0, %s91
    %s94 = sphi 0, %s93
    %s108 = sphi 0, %s94
    %s112 = sphi 0, %s112
    %s114 = sphi 0, %s112
    %s115 = sphi 0, %s114
    %s129 = sphi 0, %s115
    %s133 = sphi 0, %s133
    %s135 = sphi 0, %s133
    %s136 = sphi 0, %s135
    %s150 = sphi 0, %s136
    %s154 = sphi 0, %s154
    %s156 = sphi 0, %s154
    %s157 = sphi 0, %s156
    %s171 = sphi 0, %s157
    %s175 = sphi 0, %s175
    %s177 = sphi 0, %s175
    %s178 = sphi 0, %s177
    %s192 = sphi 0, %s178
    %s196 = sphi 0, %s196
    %s198 = sphi 0, %s196
    %s199 = sphi 0, %s198
    %s213 = sphi 0, %s199
    %s219 = sphi 0, %s221
    %s222 = sphi 0, %s219
    %s223 = sphi 0, %s222
    %s239 = sphi 0, %s223
  $region4: #{tpu_custom_call.1} parent=0 // loop_header_branch
    %18 = sbr.rel (%p16) target = $region8
  $region5: #{tpu_custom_call.1} parent=0 // loop_body
    %s20 = ssub.s32 %s15, 1
    %s21 = ssub.s32 %s15, 2
    %s22 = sadd.s32 %s15, 1
    %s23 = ssub.s32 %s15, %s22
    %p24 = scmp.eq.s32.totalorder %s23, 0
    %s26 = sadd.s32 %s25, 1
    %s27 = scalar_select %p24, %s25, %s26
    %p30 = pneg %p24
    %p31 = scmp.eq.s32.totalorder %s15, 1
    %p32 = por %p30, %p31
    %p33 = scmp.ne.s32.totalorder %s25, %s28
    %p34 = scmp.eq.s32.totalorder %s15, 0
    %p35 = por %p33, %p34
    %p36 = scmp.ne.s32.totalorder %s25, %s28
    %p37 = scmp.eq.s32.totalorder %s20, 1
    %p38 = por %p36, %p37
    %p39 = scmp.ne.s32.totalorder %s28, %s29
    %p40 = scmp.eq.s32.totalorder %s20, 0
    %p41 = por %p39, %p40
    %p42 = scmp.ne.s32.totalorder %s28, %s29
    %p43 = scmp.eq.s32.totalorder %s21, 1
    %p44 = por %p42, %p43
    %p46 = scmp.ne.s32.totalorder %s29, %s45
    %p47 = scmp.eq.s32.totalorder %s21, 0
    %p48 = por %p46, %p47
    %s50 = sadd.s32 %s49, 1
    %p53 = scmp.eq.s32.totalorder %s15, 1
    %p54 = scmp.ne.s32.totalorder %s49, %s51
    %p55 = scmp.eq.s32.totalorder %s15, 0
    %p56 = por %p54, %p55
    %p57 = scmp.ne.s32.totalorder %s49, %s51
    %p58 = scmp.eq.s32.totalorder %s20, 1
    %p59 = por %p57, %p58
    %p60 = scmp.ne.s32.totalorder %s51, %s52
    %p61 = scmp.eq.s32.totalorder %s20, 0
    %p62 = por %p60, %p61
    %p63 = scmp.ne.s32.totalorder %s51, %s52
    %p64 = scmp.eq.s32.totalorder %s21, 1
    %p65 = por %p63, %p64
    %p67 = scmp.ne.s32.totalorder %s52, %s66
    %p68 = scmp.eq.s32.totalorder %s21, 0
    %p69 = por %p67, %p68
    %s71 = sadd.s32 %s70, 1
    %p74 = scmp.eq.s32.totalorder %s15, 1
    %p75 = scmp.ne.s32.totalorder %s70, %s72
    %p76 = scmp.eq.s32.totalorder %s15, 0
    %p77 = por %p75, %p76
    %p78 = scmp.ne.s32.totalorder %s70, %s72
    %p79 = scmp.eq.s32.totalorder %s20, 1
    %p80 = por %p78, %p79
    %p81 = scmp.ne.s32.totalorder %s72, %s73
    %p82 = scmp.eq.s32.totalorder %s20, 0
    %p83 = por %p81, %p82
    %p84 = scmp.ne.s32.totalorder %s72, %s73
    %p85 = scmp.eq.s32.totalorder %s21, 1
    %p86 = por %p84, %p85
    %p88 = scmp.ne.s32.totalorder %s73, %s87
    %p89 = scmp.eq.s32.totalorder %s21, 0
    %p90 = por %p88, %p89
    %s92 = sadd.s32 %s91, 1
    %p95 = scmp.eq.s32.totalorder %s15, 1
    %p96 = scmp.ne.s32.totalorder %s91, %s93
    %p97 = scmp.eq.s32.totalorder %s15, 0
    %p98 = por %p96, %p97
    %p99 = scmp.ne.s32.totalorder %s91, %s93
    %p100 = scmp.eq.s32.totalorder %s20, 1
    %p101 = por %p99, %p100
    %p102 = scmp.ne.s32.totalorder %s93, %s94
    %p103 = scmp.eq.s32.totalorder %s20, 0
    %p104 = por %p102, %p103
    %p105 = scmp.ne.s32.totalorder %s93, %s94
    %p106 = scmp.eq.s32.totalorder %s21, 1
    %p107 = por %p105, %p106
    %p109 = scmp.ne.s32.totalorder %s94, %s108
    %p110 = scmp.eq.s32.totalorder %s21, 0
    %p111 = por %p109, %p110
    %s113 = sadd.s32 %s112, 1
    %p116 = scmp.eq.s32.totalorder %s15, 1
    %p117 = scmp.ne.s32.totalorder %s112, %s114
    %p118 = scmp.eq.s32.totalorder %s15, 0
    %p119 = por %p117, %p118
    %p120 = scmp.ne.s32.totalorder %s112, %s114
    %p121 = scmp.eq.s32.totalorder %s20, 1
    %p122 = por %p120, %p121
    %p123 = scmp.ne.s32.totalorder %s114, %s115
    %p124 = scmp.eq.s32.totalorder %s20, 0
    %p125 = por %p123, %p124
    %p126 = scmp.ne.s32.totalorder %s114, %s115
    %p127 = scmp.eq.s32.totalorder %s21, 1
    %p128 = por %p126, %p127
    %p130 = scmp.ne.s32.totalorder %s115, %s129
    %p131 = scmp.eq.s32.totalorder %s21, 0
    %p132 = por %p130, %p131
    %s134 = sadd.s32 %s133, 1
    %p137 = scmp.eq.s32.totalorder %s15, 1
    %p138 = scmp.ne.s32.totalorder %s133, %s135
    %p139 = scmp.eq.s32.totalorder %s15, 0
    %p140 = por %p138, %p139
    %p141 = scmp.ne.s32.totalorder %s133, %s135
    %p142 = scmp.eq.s32.totalorder %s20, 1
    %p143 = por %p141, %p142
    %p144 = scmp.ne.s32.totalorder %s135, %s136
    %p145 = scmp.eq.s32.totalorder %s20, 0
    %p146 = por %p144, %p145
    %p147 = scmp.ne.s32.totalorder %s135, %s136
    %p148 = scmp.eq.s32.totalorder %s21, 1
    %p149 = por %p147, %p148
    %p151 = scmp.ne.s32.totalorder %s136, %s150
    %p152 = scmp.eq.s32.totalorder %s21, 0
    %p153 = por %p151, %p152
    %s155 = sadd.s32 %s154, 1
    %p158 = scmp.eq.s32.totalorder %s15, 1
    %p159 = scmp.ne.s32.totalorder %s154, %s156
    %p160 = scmp.eq.s32.totalorder %s15, 0
    %p161 = por %p159, %p160
    %p162 = scmp.ne.s32.totalorder %s154, %s156
    %p163 = scmp.eq.s32.totalorder %s20, 1
    %p164 = por %p162, %p163
    %p165 = scmp.ne.s32.totalorder %s156, %s157
    %p166 = scmp.eq.s32.totalorder %s20, 0
    %p167 = por %p165, %p166
    %p168 = scmp.ne.s32.totalorder %s156, %s157
    %p169 = scmp.eq.s32.totalorder %s21, 1
    %p170 = por %p168, %p169
    %p172 = scmp.ne.s32.totalorder %s157, %s171
    %p173 = scmp.eq.s32.totalorder %s21, 0
    %p174 = por %p172, %p173
    %s176 = sadd.s32 %s175, 1
    %p179 = scmp.eq.s32.totalorder %s15, 1
    %p180 = scmp.ne.s32.totalorder %s175, %s177
    %p181 = scmp.eq.s32.totalorder %s15, 0
    %p182 = por %p180, %p181
    %p183 = scmp.ne.s32.totalorder %s175, %s177
    %p184 = scmp.eq.s32.totalorder %s20, 1
    %p185 = por %p183, %p184
    %p186 = scmp.ne.s32.totalorder %s177, %s178
    %p187 = scmp.eq.s32.totalorder %s20, 0
    %p188 = por %p186, %p187
    %p189 = scmp.ne.s32.totalorder %s177, %s178
    %p190 = scmp.eq.s32.totalorder %s21, 1
    %p191 = por %p189, %p190
    %p193 = scmp.ne.s32.totalorder %s178, %s192
    %p194 = scmp.eq.s32.totalorder %s21, 0
    %p195 = por %p193, %p194
    %s197 = sadd.s32 %s196, 1
    %p200 = scmp.eq.s32.totalorder %s15, 1
    %p201 = scmp.ne.s32.totalorder %s196, %s198
    %p202 = scmp.eq.s32.totalorder %s15, 0
    %p203 = por %p201, %p202
    %p204 = scmp.ne.s32.totalorder %s196, %s198
    %p205 = scmp.eq.s32.totalorder %s20, 1
    %p206 = por %p204, %p205
    %p207 = scmp.ne.s32.totalorder %s198, %s199
    %p208 = scmp.eq.s32.totalorder %s20, 0
    %p209 = por %p207, %p208
    %p210 = scmp.ne.s32.totalorder %s198, %s199
    %p211 = scmp.eq.s32.totalorder %s21, 1
    %p212 = por %p210, %p211
    %p214 = scmp.ne.s32.totalorder %s199, %s213
    %p215 = scmp.eq.s32.totalorder %s21, 0
    %p216 = por %p214, %p215
    %s217 = ssub.s32 %s15, %s22
    %p218 = scmp.eq.s32.totalorder %s217, 0
    %s220 = sadd.s32 %s219, 1
    %s221 = scalar_select %p218, %s219, %s220
    %p224 = pneg %p218
    %p225 = scmp.eq.s32.totalorder %s15, 1
    %p226 = por %p224, %p225
    %p227 = scmp.ne.s32.totalorder %s219, %s222
    %p228 = scmp.eq.s32.totalorder %s15, 0
    %p229 = por %p227, %p228
    %p230 = scmp.ne.s32.totalorder %s219, %s222
    %p231 = scmp.eq.s32.totalorder %s20, 1
    %p232 = por %p230, %p231
    %p233 = scmp.ne.s32.totalorder %s222, %s223
    %p234 = scmp.eq.s32.totalorder %s20, 0
    %p235 = por %p233, %p234
    %p236 = scmp.ne.s32.totalorder %s222, %s223
    %p237 = scmp.eq.s32.totalorder %s21, 1
    %p238 = por %p236, %p237
    %p240 = scmp.ne.s32.totalorder %s223, %s239
    %p241 = scmp.eq.s32.totalorder %s21, 0
    %p242 = por %p240, %p241
    %p243 = scmp.le.s32.totalorder 1, %s15
    %p244 = scmp.lt.s32.totalorder %s15, 3
    %p245 = pnand %p243, %p244
    %p246 = pneg %p245
    // Predicated region
    $region9: #{tpu_custom_call.1} parent=5 // pred_check
      _
    $region10: #{tpu_custom_call.1} parent=5 // pred_check_branch
      %248 = sbr.rel (%p245) target = $region12
    $region11: #{tpu_custom_call.1} parent=5 // pred_region
      %s249 = ssub.s32 %s15, 1
      // Predicated region
      $region13: #{tpu_custom_call.1} parent=11 // pred_check
        %p250 = pneg %p62
      $region14: #{tpu_custom_call.1} parent=11 // pred_check_branch
        %252 = sbr.rel (%p250) target = $region16
      $region15: #{tpu_custom_call.1} parent=11 // pred_region
        _
      $region16: #{tpu_custom_call.1} parent=11 // pred_fallthru
        _
      // Predicated region
      $region17: #{tpu_custom_call.1} parent=11 // pred_check
        %p253 = pneg %p83
      $region18: #{tpu_custom_call.1} parent=11 // pred_check_branch
        %255 = sbr.rel (%p253) target = $region20
      $region19: #{tpu_custom_call.1} parent=11 // pred_region
        _
      $region20: #{tpu_custom_call.1} parent=11 // pred_fallthru
        _
      // Predicated region
      $region21: #{tpu_custom_call.1} parent=11 // pred_check
        %p256 = pneg %p104
      $region22: #{tpu_custom_call.1} parent=11 // pred_check_branch
        %258 = sbr.rel (%p256) target = $region24
      $region23: #{tpu_custom_call.1} parent=11 // pred_region
        _
      $region24: #{tpu_custom_call.1} parent=11 // pred_fallthru
        _
      // Predicated region
      $region25: #{tpu_custom_call.1} parent=11 // pred_check
        %p259 = pneg %p125
      $region26: #{tpu_custom_call.1} parent=11 // pred_check_branch
        %261 = sbr.rel (%p259) target = $region28
      $region27: #{tpu_custom_call.1} parent=11 // pred_region
        _
      $region28: #{tpu_custom_call.1} parent=11 // pred_fallthru
        _
      // Predicated region
      $region29: #{tpu_custom_call.1} parent=11 // pred_check
        %p262 = pneg %p146
      $region30: #{tpu_custom_call.1} parent=11 // pred_check_branch
        %264 = sbr.rel (%p262) target = $region32
      $region31: #{tpu_custom_call.1} parent=11 // pred_region
        _
      $region32: #{tpu_custom_call.1} parent=11 // pred_fallthru
        _
      // Predicated region
      $region33: #{tpu_custom_call.1} parent=11 // pred_check
        %p265 = pneg %p167
      $region34: #{tpu_custom_call.1} parent=11 // pred_check_branch
        %267 = sbr.rel (%p265) target = $region36
      $region35: #{tpu_custom_call.1} parent=11 // pred_region
        _
      $region36: #{tpu_custom_call.1} parent=11 // pred_fallthru
        _
      // Predicated region
      $region37: #{tpu_custom_call.1} parent=11 // pred_check
        %p268 = pneg %p188
      $region38: #{tpu_custom_call.1} parent=11 // pred_check_branch
        %270 = sbr.rel (%p268) target = $region40
      $region39: #{tpu_custom_call.1} parent=11 // pred_region
        _
      $region40: #{tpu_custom_call.1} parent=11 // pred_fallthru
        _
      // Predicated region
      $region41: #{tpu_custom_call.1} parent=11 // pred_check
        %p271 = pneg %p209
      $region42: #{tpu_custom_call.1} parent=11 // pred_check_branch
        %273 = sbr.rel (%p271) target = $region44
      $region43: #{tpu_custom_call.1} parent=11 // pred_region
        _
      $region44: #{tpu_custom_call.1} parent=11 // pred_fallthru
        _
    $region12: #{tpu_custom_call.1} parent=5 // pred_fallthru
      _
    %p274 = scmp.lt.s32.totalorder %s15, 2
    // Predicated region
    $region45: #{tpu_custom_call.1} parent=5 // pred_check
      %p275 = pneg %p274
    $region46: #{tpu_custom_call.1} parent=5 // pred_check_branch
      %277 = sbr.rel (%p275) target = $region48
    $region47: #{tpu_custom_call.1} parent=5 // pred_region
      // Predicated region
      $region49: #{tpu_custom_call.1} parent=47 // pred_check
        %p278 = pneg %p35
      $region50: #{tpu_custom_call.1} parent=47 // pred_check_branch
        %280 = sbr.rel (%p278) target = $region52
      $region51: #{tpu_custom_call.1} parent=47 // pred_region
        %s281 = smul.u32 16, %s15
        %p282 = scmp.lt.s32.totalorder %s281, 31
        %s283 = scalar_select %p282, %s281, 31
        %s284 = smul.addr %s283, 8
        %s285 = scalar_lea.vmem %s0, %s284
        %s286 = smul.u32 16, %s15
      $region52: #{tpu_custom_call.1} parent=47 // pred_fallthru
        _
    $region48: #{tpu_custom_call.1} parent=5 // pred_fallthru
      _
    %p287 = scmp.le.s32.totalorder 1, %s15
    %p288 = scmp.lt.s32.totalorder %s15, 3
    %p289 = pnand %p287, %p288
    %p290 = pneg %p289
    // Predicated region
    $region53: #{tpu_custom_call.1} parent=5 // pred_check
      _
    $region54: #{tpu_custom_call.1} parent=5 // pred_check_branch
      %292 = sbr.rel (%p289) target = $region56
    $region55: #{tpu_custom_call.1} parent=5 // pred_region
      %s293 = ssub.s32 %s15, 1
      %s294 = smul.u32 16, %s20
      %p295 = scmp.lt.s32.totalorder %s294, 31
      %s296 = scalar_select %p295, %s294, 31
      %s297 = smul.addr %s296, 8
      %s298 = scalar_lea.vmem %s0, %s297
      %p299 = pneg %p41
      %p300 = pneg %p38
      %p301 = pneg %p62
      %p302 = pneg %p59
      %p303 = pneg %p83
      %p304 = pneg %p80
      %p305 = pneg %p104
      %p306 = pneg %p101
      %p307 = pneg %p125
      %p308 = pneg %p122
      %p309 = pneg %p146
      %p310 = pneg %p143
      %p311 = pneg %p167
      %p312 = pneg %p164
      %p313 = pneg %p188
      %p314 = pneg %p185
      %p315 = pneg %p209
      %p316 = pneg %p206
      %p317 = pneg %p235
      %p318 = pneg %p232
      %s319 = smul.u32 16, %s20
      %p320 = scmp.lt.s32.totalorder %s319, 31
      %s321 = scalar_select %p320, %s319, 31
      %s322 = smul.addr %s321, 8
      %s323 = scalar_lea.vmem %s9, %s322
      %s324 = smul.u32 16, %s20
      %p325 = scmp.lt.s32.totalorder %s324, 31
      %s326 = scalar_select %p325, %s324, 31
      %s327 = smul.addr %s326, 8
      %s328 = scalar_lea.vmem %s0, %s327
      %s329 = smul.u32 16, %s20
      %s330 = smul.u32 16, %s20
      %p331 = scmp.lt.s32.totalorder %s330, 31
      %s332 = scalar_select %p331, %s330, 31
      %s333 = smul.addr %s332, 8
      %s334 = scalar_lea.vmem %s9, %s333
      %s335 = smul.u32 16, %s20
      %v336 = vld [vmem:[%s328] sm:$0xff]
      %v337 = vld [vmem:[%s328 + $0x8] sm:$0xff]
      %v338 = vld [vmem:[%s328 + $0x10] sm:$0xff]
      %v339 = vld [vmem:[%s328 + $0x18] sm:$0xff]
      %v340 = vld [vmem:[%s328 + $0x20] sm:$0xff]
      %v341 = vld [vmem:[%s328 + $0x28] sm:$0xff]
      %v342 = vld [vmem:[%s328 + $0x30] sm:$0xff]
      %v343 = vld [vmem:[%s328 + $0x38] sm:$0xff]
      %v344 = vld [vmem:[%s328 + $0x40] sm:$0xff]
      %v345 = vld [vmem:[%s328 + $0x48] sm:$0xff]
      %v346 = vld [vmem:[%s328 + $0x50] sm:$0xff]
      %v347 = vld [vmem:[%s328 + $0x58] sm:$0xff]
      %v348 = vld [vmem:[%s328 + $0x60] sm:$0xff]
      %v349 = vld [vmem:[%s328 + $0x68] sm:$0xff]
      %v350 = vld [vmem:[%s328 + $0x70] sm:$0xff]
      %v351 = vld [vmem:[%s328 + $0x78] sm:$0xff]
      %v352 = vld [vmem:[%s1] sm:$0x3]
      %354 = vset.pattern.permute.xlu0 0
      %355 = vperm.xlu0 %354, %v336
      %v356 = vpop.permute.xlu0 %355
      %359 = vset.pattern.permute.xlu0 0
      %360 = vperm.xlu0 %359, %v337
      %v361 = vpop.permute.xlu0 %360
      %364 = vset.pattern.permute.xlu0 0
      %365 = vperm.xlu0 %364, %v338
      %v366 = vpop.permute.xlu0 %365
      %369 = vset.pattern.permute.xlu0 0
      %370 = vperm.xlu0 %369, %v339
      %v371 = vpop.permute.xlu0 %370
      %374 = vset.pattern.permute.xlu0 0
      %375 = vperm.xlu0 %374, %v340
      %v376 = vpop.permute.xlu0 %375
      %379 = vset.pattern.permute.xlu0 0
      %380 = vperm.xlu0 %379, %v341
      %v381 = vpop.permute.xlu0 %380
      %384 = vset.pattern.permute.xlu0 0
      %385 = vperm.xlu0 %384, %v342
      %v386 = vpop.permute.xlu0 %385
      %389 = vset.pattern.permute.xlu0 0
      %390 = vperm.xlu0 %389, %v343
      %v391 = vpop.permute.xlu0 %390
      %394 = vset.pattern.permute.xlu0 0
      %395 = vperm.xlu0 %394, %v344
      %v396 = vpop.permute.xlu0 %395
      %399 = vset.pattern.permute.xlu0 0
      %400 = vperm.xlu0 %399, %v345
      %v401 = vpop.permute.xlu0 %400
      %404 = vset.pattern.permute.xlu0 0
      %405 = vperm.xlu0 %404, %v346
      %v406 = vpop.permute.xlu0 %405
      %409 = vset.pattern.permute.xlu0 0
      %410 = vperm.xlu0 %409, %v347
      %v411 = vpop.permute.xlu0 %410
      %414 = vset.pattern.permute.xlu0 0
      %415 = vperm.xlu0 %414, %v348
      %v416 = vpop.permute.xlu0 %415
      %419 = vset.pattern.permute.xlu0 0
      %420 = vperm.xlu0 %419, %v349
      %v421 = vpop.permute.xlu0 %420
      %424 = vset.pattern.permute.xlu0 0
      %425 = vperm.xlu0 %424, %v350
      %v426 = vpop.permute.xlu0 %425
      %429 = vset.pattern.permute.xlu0 0
      %430 = vperm.xlu0 %429, %v351
      %v431 = vpop.permute.xlu0 %430
      %v433 = vlaneseq
      %v434 = vshrl.u32 %v433, 7
      %v435 = vsub.s32 0, %v434
      %v436 = vrot.slane %v352, %v435
      %v437 = vmul.f32 %v356, %v436
      %v438 = vmul.f32 %v361, %v436
      %v439 = vmul.f32 %v366, %v436
      %v440 = vmul.f32 %v371, %v436
      %v441 = vmul.f32 %v376, %v436
      %v442 = vmul.f32 %v381, %v436
      %v443 = vmul.f32 %v386, %v436
      %v444 = vmul.f32 %v391, %v436
      %v445 = vmul.f32 %v396, %v436
      %v446 = vmul.f32 %v401, %v436
      %v447 = vmul.f32 %v406, %v436
      %v448 = vmul.f32 %v411, %v436
      %v449 = vmul.f32 %v416, %v436
      %v450 = vmul.f32 %v421, %v436
      %v451 = vmul.f32 %v426, %v436
      %v452 = vmul.f32 %v431, %v436
      %453 = vset.pattern.permute.xlu0 1
      %454 = vperm.xlu0 %453, %v336
      %v455 = vpop.permute.xlu0 %454
      %457 = vset.pattern.permute.xlu0 1
      %458 = vperm.xlu0 %457, %v337
      %v459 = vpop.permute.xlu0 %458
      %461 = vset.pattern.permute.xlu0 1
      %462 = vperm.xlu0 %461, %v338
      %v463 = vpop.permute.xlu0 %462
      %465 = vset.pattern.permute.xlu0 1
      %466 = vperm.xlu0 %465, %v339
      %v467 = vpop.permute.xlu0 %466
      %469 = vset.pattern.permute.xlu0 1
      %470 = vperm.xlu0 %469, %v340
      %v471 = vpop.permute.xlu0 %470
      %473 = vset.pattern.permute.xlu0 1
      %474 = vperm.xlu0 %473, %v341
      %v475 = vpop.permute.xlu0 %474
      %477 = vset.pattern.permute.xlu0 1
      %478 = vperm.xlu0 %477, %v342
      %v479 = vpop.permute.xlu0 %478
      %481 = vset.pattern.permute.xlu0 1
      %482 = vperm.xlu0 %481, %v343
      %v483 = vpop.permute.xlu0 %482
      %485 = vset.pattern.permute.xlu0 1
      %486 = vperm.xlu0 %485, %v344
      %v487 = vpop.permute.xlu0 %486
      %489 = vset.pattern.permute.xlu0 1
      %490 = vperm.xlu0 %489, %v345
      %v491 = vpop.permute.xlu0 %490
      %493 = vset.pattern.permute.xlu0 1
      %494 = vperm.xlu0 %493, %v346
      %v495 = vpop.permute.xlu0 %494
      %497 = vset.pattern.permute.xlu0 1
      %498 = vperm.xlu0 %497, %v347
      %v499 = vpop.permute.xlu0 %498
      %501 = vset.pattern.permute.xlu0 1
      %502 = vperm.xlu0 %501, %v348
      %v503 = vpop.permute.xlu0 %502
      %505 = vset.pattern.permute.xlu0 1
      %506 = vperm.xlu0 %505, %v349
      %v507 = vpop.permute.xlu0 %506
      %509 = vset.pattern.permute.xlu0 1
      %510 = vperm.xlu0 %509, %v350
      %v511 = vpop.permute.xlu0 %510
      %513 = vset.pattern.permute.xlu0 1
      %514 = vperm.xlu0 %513, %v351
      %v515 = vpop.permute.xlu0 %514
      %v517 = vlaneseq
      %v518 = vshrl.u32 %v517, 7
      %v519 = vsub.s32 1, %v518
      %v520 = vrot.slane %v352, %v519
      %v521 = vmul.f32 %v455, %v520
      %v522 = vmul.f32 %v459, %v520
      %v523 = vmul.f32 %v463, %v520
      %v524 = vmul.f32 %v467, %v520
      %v525 = vmul.f32 %v471, %v520
      %v526 = vmul.f32 %v475, %v520
      %v527 = vmul.f32 %v479, %v520
      %v528 = vmul.f32 %v483, %v520
      %v529 = vmul.f32 %v487, %v520
      %v530 = vmul.f32 %v491, %v520
      %v531 = vmul.f32 %v495, %v520
      %v532 = vmul.f32 %v499, %v520
      %v533 = vmul.f32 %v503, %v520
      %v534 = vmul.f32 %v507, %v520
      %v535 = vmul.f32 %v511, %v520
      %v536 = vmul.f32 %v515, %v520
      %v537 = vadd.f32 %v437, %v521
      %v538 = vadd.f32 %v438, %v522
      %v539 = vadd.f32 %v439, %v523
      %v540 = vadd.f32 %v440, %v524
      %v541 = vadd.f32 %v441, %v525
      %v542 = vadd.f32 %v442, %v526
      %v543 = vadd.f32 %v443, %v527
      %v544 = vadd.f32 %v444, %v528
      %v545 = vadd.f32 %v445, %v529
      %v546 = vadd.f32 %v446, %v530
      %v547 = vadd.f32 %v447, %v531
      %v548 = vadd.f32 %v448, %v532
      %v549 = vadd.f32 %v449, %v533
      %v550 = vadd.f32 %v450, %v534
      %v551 = vadd.f32 %v451, %v535
      %v552 = vadd.f32 %v452, %v536
      %v553 = vand.u32 2147483647, %v537
      %vm554 = vcmp.le.f32.partialorder %v553, 0.7853982
      %vm555 = vcmp.lt.s32.totalorder %v537, 0
      %v556 = vand.u32 %v537, 2139095040
      %v557 = vshrl.u32 %v556, 23
      %v558 = vsub.s32 %v557, 127
      %v559 = vand.u32 2147483647, %v537
      %v560 = vand.u32 %v559, 8388607
      %v561 = vor.u32 %v560, 8388608
      %v562 = vsub.s32 0, %v561
      %v563 = vadd.s32 %v558, 1
      %vm564 = vcmp.gt.s32.totalorder %v563, 0
      %v565 = vsel %vm564, %v563, 0
      %v566 = vshrl.u32 %v565, 5
      %v567 = vand.u32 %v565, 31
      %v568 = vsub.s32 32, %v567
      %v569 = vshrl.u32 683565275, %v568
      %v570 = vshll.u32 683565275, %v567
      %v571 = vshrl.u32 2475754826, %v568
      %v572 = vor.u32 %v570, %v571
      %v573 = vshll.u32 2475754826, %v567
      %v574 = vshrl.u32 2131351028, %v568
      %v575 = vor.u32 %v573, %v574
      %v576 = vshll.u32 2131351028, %v567
      %v577 = vshrl.u32 2102212464, %v568
      %v578 = vor.u32 %v576, %v577
      %v579 = vshll.u32 2102212464, %v567
      %v580 = vshrl.u32 920167782, %v568
      %v581 = vor.u32 %v579, %v580
      %v582 = vshll.u32 920167782, %v567
      %v583 = vshrl.u32 1326507024, %v568
      %v584 = vor.u32 %v582, %v583
      %vm585 = vcmp.lt.s32.totalorder %v566, 1
      %vm586 = vcmp.lt.s32.totalorder %v566, 2
      %vm587 = vcmp.lt.s32.totalorder %v566, 3
      %vm588 = vcmp.lt.s32.totalorder %v566, 4
      %v589 = vsel %vm585, %v569, %v572
      %v590 = vsel %vm588, %v578, 2102212464
      %v591 = vsel %vm587, %v575, %v590
      %v592 = vsel %vm586, %v589, %v591
      %v593 = vsel %vm585, %v572, %v575
      %v594 = vsel %vm588, %v581, 920167782
      %v595 = vsel %vm587, %v578, %v594
      %v596 = vsel %vm586, %v593, %v595
      %v597 = vsel %vm585, %v575, %v578
      %v598 = vsel %vm588, %v584, 1326507024
      %v599 = vsel %vm587, %v581, %v598
      %v600 = vsel %vm586, %v597, %v599
      %v601 = vshll.u32 %v561, 8
      %v602 = vmul.u32.u64.compose %v601, %v600
      %v603 = vextract.low.u32 %v602
      %v604 = vextract.high.u32 %v602
      %v605 = vmul.u32.u64.compose %v601, %v596
      %v606 = vextract.low.u32 %v605
      %v607 = vextract.high.u32 %v605
      %v608 = vmul.u32 %v601, %v592
      %v609 = vadd.s32 %v604, %v606
      %vm610 = vc.u32 %v604, %v606
      %v611 = vadd.s32 %v607, 1
      %v612 = vsel %vm610, %v611, %v607
      %v613 = vadd.s32 %v608, %v612
      %v614 = vadd.s32 %v613, 536870912
      %v615 = vshrl.u32 %v614, 30
      %v616 = vshll.u32 %v615, 30
      %v617 = vsub.s32 %v613, %v616
      %vm618 = vcmp.lt.s32.totalorder %v617, 0
      %v619 = vsub.s32 0, %v617
      %v620 = vsel %vm618, %v619, %v617
      %v621 = vclz %v620
      %v622 = vsub.s32 %v621, 2
      %vm623 = vcmp.gt.s32.totalorder 0, %v622
      %v624 = vsel %vm623, 0, %v622
      %v625 = vsub.s32 32, %v624
      %v626 = vshll.u32 %v617, %v624
      %v627 = vshrl.u32 %v609, %v625
      %v628 = vor.u32 %v626, %v627
      %v629 = vsub.s32 4294967266, %v624
      %v630 = vadd.s32 %v629, 127
      %v631 = vshll.u32 %v630, 23
      %v632 = vor.u32 4788187, %v631
      %v633 = vand.u32 2147483647, %v632
      %v635 = vcvt.s32.f32 %v628
      %v636 = vmul.f32 %v635, %v633
      %v637 = vxor.u32 %v636, 2147483648
      %v638 = vsel %vm555, %v637, %v636
      %v639 = vsub.s32 4, %v615
      %v640 = vsel %vm555, %v639, %v615
      %v641 = vsel %vm554, %v537, %v638
      %v642 = vsel %vm554, 0, %v640
      %v643 = vcosq.f32.pop %v641
      %v644 = vsinq.f32.pop %v641
      %vm645 = vweird.f32 %v537
      %v646 = vadd.s32 %v642, 3
      %v647 = vand.u32 %v646, 3
      %vm648 = vcmp.lt.s32.totalorder %v647, 2
      %vm649 = vcmp.eq.s32.totalorder %v647, 0
      %v650 = vxor.u32 %v644, 2147483648
      %v651 = vsel %vm649, %v643, %v650
      %vm652 = vcmp.eq.s32.totalorder %v647, 2
      %v653 = vxor.u32 %v643, 2147483648
      %v654 = vsel %vm652, %v653, %v644
      %v655 = vsel %vm648, %v651, %v654
      %v656 = vsel %vm645, nan, %v655
      %v657 = vand.u32 2147483647, %v538
      %vm658 = vcmp.le.f32.partialorder %v657, 0.7853982
      %vm659 = vcmp.lt.s32.totalorder %v538, 0
      %v660 = vand.u32 %v538, 2139095040
      %v661 = vshrl.u32 %v660, 23
      %v662 = vsub.s32 %v661, 127
      %v663 = vand.u32 2147483647, %v538
      %v664 = vand.u32 %v663, 8388607
      %v665 = vor.u32 %v664, 8388608
      %v666 = vsub.s32 0, %v665
      %v667 = vadd.s32 %v662, 1
      %vm668 = vcmp.gt.s32.totalorder %v667, 0
      %v669 = vsel %vm668, %v667, 0
      %v670 = vshrl.u32 %v669, 5
      %v671 = vand.u32 %v669, 31
      %v672 = vsub.s32 32, %v671
      %v673 = vshrl.u32 683565275, %v672
      %v674 = vshll.u32 683565275, %v671
      %v675 = vshrl.u32 2475754826, %v672
      %v676 = vor.u32 %v674, %v675
      %v677 = vshll.u32 2475754826, %v671
      %v678 = vshrl.u32 2131351028, %v672
      %v679 = vor.u32 %v677, %v678
      %v680 = vshll.u32 2131351028, %v671
      %v681 = vshrl.u32 2102212464, %v672
      %v682 = vor.u32 %v680, %v681
      %v683 = vshll.u32 2102212464, %v671
      %v684 = vshrl.u32 920167782, %v672
      %v685 = vor.u32 %v683, %v684
      %v686 = vshll.u32 920167782, %v671
      %v687 = vshrl.u32 1326507024, %v672
      %v688 = vor.u32 %v686, %v687
      %vm689 = vcmp.lt.s32.totalorder %v670, 1
      %vm690 = vcmp.lt.s32.totalorder %v670, 2
      %vm691 = vcmp.lt.s32.totalorder %v670, 3
      %vm692 = vcmp.lt.s32.totalorder %v670, 4
      %v693 = vsel %vm689, %v673, %v676
      %v694 = vsel %vm692, %v682, 2102212464
      %v695 = vsel %vm691, %v679, %v694
      %v696 = vsel %vm690, %v693, %v695
      %v697 = vsel %vm689, %v676, %v679
      %v698 = vsel %vm692, %v685, 920167782
      %v699 = vsel %vm691, %v682, %v698
      %v700 = vsel %vm690, %v697, %v699
      %v701 = vsel %vm689, %v679, %v682
      %v702 = vsel %vm692, %v688, 1326507024
      %v703 = vsel %vm691, %v685, %v702
      %v704 = vsel %vm690, %v701, %v703
      %v705 = vshll.u32 %v665, 8
      %v706 = vmul.u32.u64.compose %v705, %v704
      %v707 = vextract.low.u32 %v706
      %v708 = vextract.high.u32 %v706
      %v709 = vmul.u32.u64.compose %v705, %v700
      %v710 = vextract.low.u32 %v709
      %v711 = vextract.high.u32 %v709
      %v712 = vmul.u32 %v705, %v696
      %v713 = vadd.s32 %v708, %v710
      %vm714 = vc.u32 %v708, %v710
      %v715 = vadd.s32 %v711, 1
      %v716 = vsel %vm714, %v715, %v711
      %v717 = vadd.s32 %v712, %v716
      %v718 = vadd.s32 %v717, 536870912
      %v719 = vshrl.u32 %v718, 30
      %v720 = vshll.u32 %v719, 30
      %v721 = vsub.s32 %v717, %v720
      %vm722 = vcmp.lt.s32.totalorder %v721, 0
      %v723 = vsub.s32 0, %v721
      %v724 = vsel %vm722, %v723, %v721
      %v725 = vclz %v724
      %v726 = vsub.s32 %v725, 2
      %vm727 = vcmp.gt.s32.totalorder 0, %v726
      %v728 = vsel %vm727, 0, %v726
      %v729 = vsub.s32 32, %v728
      %v730 = vshll.u32 %v721, %v728
      %v731 = vshrl.u32 %v713, %v729
      %v732 = vor.u32 %v730, %v731
      %v733 = vsub.s32 4294967266, %v728
      %v734 = vadd.s32 %v733, 127
      %v735 = vshll.u32 %v734, 23
      %v736 = vor.u32 4788187, %v735
      %v737 = vand.u32 2147483647, %v736
      %v739 = vcvt.s32.f32 %v732
      %v740 = vmul.f32 %v739, %v737
      %v741 = vxor.u32 %v740, 2147483648
      %v742 = vsel %vm659, %v741, %v740
      %v743 = vsub.s32 4, %v719
      %v744 = vsel %vm659, %v743, %v719
      %v745 = vsel %vm658, %v538, %v742
      %v746 = vsel %vm658, 0, %v744
      %v747 = vcosq.f32.pop %v745
      %v748 = vsinq.f32.pop %v745
      %vm749 = vweird.f32 %v538
      %v750 = vadd.s32 %v746, 3
      %v751 = vand.u32 %v750, 3
      %vm752 = vcmp.lt.s32.totalorder %v751, 2
      %vm753 = vcmp.eq.s32.totalorder %v751, 0
      %v754 = vxor.u32 %v748, 2147483648
      %v755 = vsel %vm753, %v747, %v754
      %vm756 = vcmp.eq.s32.totalorder %v751, 2
      %v757 = vxor.u32 %v747, 2147483648
      %v758 = vsel %vm756, %v757, %v748
      %v759 = vsel %vm752, %v755, %v758
      %v760 = vsel %vm749, nan, %v759
      %v761 = vand.u32 2147483647, %v539
      %vm762 = vcmp.le.f32.partialorder %v761, 0.7853982
      %vm763 = vcmp.lt.s32.totalorder %v539, 0
      %v764 = vand.u32 %v539, 2139095040
      %v765 = vshrl.u32 %v764, 23
      %v766 = vsub.s32 %v765, 127
      %v767 = vand.u32 2147483647, %v539
      %v768 = vand.u32 %v767, 8388607
      %v769 = vor.u32 %v768, 8388608
      %v770 = vsub.s32 0, %v769
      %v771 = vadd.s32 %v766, 1
      %vm772 = vcmp.gt.s32.totalorder %v771, 0
      %v773 = vsel %vm772, %v771, 0
      %v774 = vshrl.u32 %v773, 5
      %v775 = vand.u32 %v773, 31
      %v776 = vsub.s32 32, %v775
      %v777 = vshrl.u32 683565275, %v776
      %v778 = vshll.u32 683565275, %v775
      %v779 = vshrl.u32 2475754826, %v776
      %v780 = vor.u32 %v778, %v779
      %v781 = vshll.u32 2475754826, %v775
      %v782 = vshrl.u32 2131351028, %v776
      %v783 = vor.u32 %v781, %v782
      %v784 = vshll.u32 2131351028, %v775
      %v785 = vshrl.u32 2102212464, %v776
      %v786 = vor.u32 %v784, %v785
      %v787 = vshll.u32 2102212464, %v775
      %v788 = vshrl.u32 920167782, %v776
      %v789 = vor.u32 %v787, %v788
      %v790 = vshll.u32 920167782, %v775
      %v791 = vshrl.u32 1326507024, %v776
      %v792 = vor.u32 %v790, %v791
      %vm793 = vcmp.lt.s32.totalorder %v774, 1
      %vm794 = vcmp.lt.s32.totalorder %v774, 2
      %vm795 = vcmp.lt.s32.totalorder %v774, 3
      %vm796 = vcmp.lt.s32.totalorder %v774, 4
      %v797 = vsel %vm793, %v777, %v780
      %v798 = vsel %vm796, %v786, 2102212464
      %v799 = vsel %vm795, %v783, %v798
      %v800 = vsel %vm794, %v797, %v799
      %v801 = vsel %vm793, %v780, %v783
      %v802 = vsel %vm796, %v789, 920167782
      %v803 = vsel %vm795, %v786, %v802
      %v804 = vsel %vm794, %v801, %v803
      %v805 = vsel %vm793, %v783, %v786
      %v806 = vsel %vm796, %v792, 1326507024
      %v807 = vsel %vm795, %v789, %v806
      %v808 = vsel %vm794, %v805, %v807
      %v809 = vshll.u32 %v769, 8
      %v810 = vmul.u32.u64.compose %v809, %v808
      %v811 = vextract.low.u32 %v810
      %v812 = vextract.high.u32 %v810
      %v813 = vmul.u32.u64.compose %v809, %v804
      %v814 = vextract.low.u32 %v813
      %v815 = vextract.high.u32 %v813
      %v816 = vmul.u32 %v809, %v800
      %v817 = vadd.s32 %v812, %v814
      %vm818 = vc.u32 %v812, %v814
      %v819 = vadd.s32 %v815, 1
      %v820 = vsel %vm818, %v819, %v815
      %v821 = vadd.s32 %v816, %v820
      %v822 = vadd.s32 %v821, 536870912
      %v823 = vshrl.u32 %v822, 30
      %v824 = vshll.u32 %v823, 30
      %v825 = vsub.s32 %v821, %v824
      %vm826 = vcmp.lt.s32.totalorder %v825, 0
      %v827 = vsub.s32 0, %v825
      %v828 = vsel %vm826, %v827, %v825
      %v829 = vclz %v828
      %v830 = vsub.s32 %v829, 2
      %vm831 = vcmp.gt.s32.totalorder 0, %v830
      %v832 = vsel %vm831, 0, %v830
      %v833 = vsub.s32 32, %v832
      %v834 = vshll.u32 %v825, %v832
      %v835 = vshrl.u32 %v817, %v833
      %v836 = vor.u32 %v834, %v835
      %v837 = vsub.s32 4294967266, %v832
      %v838 = vadd.s32 %v837, 127
      %v839 = vshll.u32 %v838, 23
      %v840 = vor.u32 4788187, %v839
      %v841 = vand.u32 2147483647, %v840
      %v843 = vcvt.s32.f32 %v836
      %v844 = vmul.f32 %v843, %v841
      %v845 = vxor.u32 %v844, 2147483648
      %v846 = vsel %vm763, %v845, %v844
      %v847 = vsub.s32 4, %v823
      %v848 = vsel %vm763, %v847, %v823
      %v849 = vsel %vm762, %v539, %v846
      %v850 = vsel %vm762, 0, %v848
      %v851 = vcosq.f32.pop %v849
      %v852 = vsinq.f32.pop %v849
      %vm853 = vweird.f32 %v539
      %v854 = vadd.s32 %v850, 3
      %v855 = vand.u32 %v854, 3
      %vm856 = vcmp.lt.s32.totalorder %v855, 2
      %vm857 = vcmp.eq.s32.totalorder %v855, 0
      %v858 = vxor.u32 %v852, 2147483648
      %v859 = vsel %vm857, %v851, %v858
      %vm860 = vcmp.eq.s32.totalorder %v855, 2
      %v861 = vxor.u32 %v851, 2147483648
      %v862 = vsel %vm860, %v861, %v852
      %v863 = vsel %vm856, %v859, %v862
      %v864 = vsel %vm853, nan, %v863
      %v865 = vand.u32 2147483647, %v540
      %vm866 = vcmp.le.f32.partialorder %v865, 0.7853982
      %vm867 = vcmp.lt.s32.totalorder %v540, 0
      %v868 = vand.u32 %v540, 2139095040
      %v869 = vshrl.u32 %v868, 23
      %v870 = vsub.s32 %v869, 127
      %v871 = vand.u32 2147483647, %v540
      %v872 = vand.u32 %v871, 8388607
      %v873 = vor.u32 %v872, 8388608
      %v874 = vsub.s32 0, %v873
      %v875 = vadd.s32 %v870, 1
      %vm876 = vcmp.gt.s32.totalorder %v875, 0
      %v877 = vsel %vm876, %v875, 0
      %v878 = vshrl.u32 %v877, 5
      %v879 = vand.u32 %v877, 31
      %v880 = vsub.s32 32, %v879
      %v881 = vshrl.u32 683565275, %v880
      %v882 = vshll.u32 683565275, %v879
      %v883 = vshrl.u32 2475754826, %v880
      %v884 = vor.u32 %v882, %v883
      %v885 = vshll.u32 2475754826, %v879
      %v886 = vshrl.u32 2131351028, %v880
      %v887 = vor.u32 %v885, %v886
      %v888 = vshll.u32 2131351028, %v879
      %v889 = vshrl.u32 2102212464, %v880
      %v890 = vor.u32 %v888, %v889
      %v891 = vshll.u32 2102212464, %v879
      %v892 = vshrl.u32 920167782, %v880
      %v893 = vor.u32 %v891, %v892
      %v894 = vshll.u32 920167782, %v879
      %v895 = vshrl.u32 1326507024, %v880
      %v896 = vor.u32 %v894, %v895
      %vm897 = vcmp.lt.s32.totalorder %v878, 1
      %vm898 = vcmp.lt.s32.totalorder %v878, 2
      %vm899 = vcmp.lt.s32.totalorder %v878, 3
      %vm900 = vcmp.lt.s32.totalorder %v878, 4
      %v901 = vsel %vm897, %v881, %v884
      %v902 = vsel %vm900, %v890, 2102212464
      %v903 = vsel %vm899, %v887, %v902
      %v904 = vsel %vm898, %v901, %v903
      %v905 = vsel %vm897, %v884, %v887
      %v906 = vsel %vm900, %v893, 920167782
      %v907 = vsel %vm899, %v890, %v906
      %v908 = vsel %vm898, %v905, %v907
      %v909 = vsel %vm897, %v887, %v890
      %v910 = vsel %vm900, %v896, 1326507024
      %v911 = vsel %vm899, %v893, %v910
      %v912 = vsel %vm898, %v909, %v911
      %v913 = vshll.u32 %v873, 8
      %v914 = vmul.u32.u64.compose %v913, %v912
      %v915 = vextract.low.u32 %v914
      %v916 = vextract.high.u32 %v914
      %v917 = vmul.u32.u64.compose %v913, %v908
      %v918 = vextract.low.u32 %v917
      %v919 = vextract.high.u32 %v917
      %v920 = vmul.u32 %v913, %v904
      %v921 = vadd.s32 %v916, %v918
      %vm922 = vc.u32 %v916, %v918
      %v923 = vadd.s32 %v919, 1
      %v924 = vsel %vm922, %v923, %v919
      %v925 = vadd.s32 %v920, %v924
      %v926 = vadd.s32 %v925, 536870912
      %v927 = vshrl.u32 %v926, 30
      %v928 = vshll.u32 %v927, 30
      %v929 = vsub.s32 %v925, %v928
      %vm930 = vcmp.lt.s32.totalorder %v929, 0
      %v931 = vsub.s32 0, %v929
      %v932 = vsel %vm930, %v931, %v929
      %v933 = vclz %v932
      %v934 = vsub.s32 %v933, 2
      %vm935 = vcmp.gt.s32.totalorder 0, %v934
      %v936 = vsel %vm935, 0, %v934
      %v937 = vsub.s32 32, %v936
      %v938 = vshll.u32 %v929, %v936
      %v939 = vshrl.u32 %v921, %v937
      %v940 = vor.u32 %v938, %v939
      %v941 = vsub.s32 4294967266, %v936
      %v942 = vadd.s32 %v941, 127
      %v943 = vshll.u32 %v942, 23
      %v944 = vor.u32 4788187, %v943
      %v945 = vand.u32 2147483647, %v944
      %v947 = vcvt.s32.f32 %v940
      %v948 = vmul.f32 %v947, %v945
      %v949 = vxor.u32 %v948, 2147483648
      %v950 = vsel %vm867, %v949, %v948
      %v951 = vsub.s32 4, %v927
      %v952 = vsel %vm867, %v951, %v927
      %v953 = vsel %vm866, %v540, %v950
      %v954 = vsel %vm866, 0, %v952
      %v955 = vcosq.f32.pop %v953
      %v956 = vsinq.f32.pop %v953
      %vm957 = vweird.f32 %v540
      %v958 = vadd.s32 %v954, 3
      %v959 = vand.u32 %v958, 3
      %vm960 = vcmp.lt.s32.totalorder %v959, 2
      %vm961 = vcmp.eq.s32.totalorder %v959, 0
      %v962 = vxor.u32 %v956, 2147483648
      %v963 = vsel %vm961, %v955, %v962
      %vm964 = vcmp.eq.s32.totalorder %v959, 2
      %v965 = vxor.u32 %v955, 2147483648
      %v966 = vsel %vm964, %v965, %v956
      %v967 = vsel %vm960, %v963, %v966
      %v968 = vsel %vm957, nan, %v967
      %v969 = vand.u32 2147483647, %v541
      %vm970 = vcmp.le.f32.partialorder %v969, 0.7853982
      %vm971 = vcmp.lt.s32.totalorder %v541, 0
      %v972 = vand.u32 %v541, 2139095040
      %v973 = vshrl.u32 %v972, 23
      %v974 = vsub.s32 %v973, 127
      %v975 = vand.u32 2147483647, %v541
      %v976 = vand.u32 %v975, 8388607
      %v977 = vor.u32 %v976, 8388608
      %v978 = vsub.s32 0, %v977
      %v979 = vadd.s32 %v974, 1
      %vm980 = vcmp.gt.s32.totalorder %v979, 0
      %v981 = vsel %vm980, %v979, 0
      %v982 = vshrl.u32 %v981, 5
      %v983 = vand.u32 %v981, 31
      %v984 = vsub.s32 32, %v983
      %v985 = vshrl.u32 683565275, %v984
      %v986 = vshll.u32 683565275, %v983
      %v987 = vshrl.u32 2475754826, %v984
      %v988 = vor.u32 %v986, %v987
      %v989 = vshll.u32 2475754826, %v983
      %v990 = vshrl.u32 2131351028, %v984
      %v991 = vor.u32 %v989, %v990
      %v992 = vshll.u32 2131351028, %v983
      %v993 = vshrl.u32 2102212464, %v984
      %v994 = vor.u32 %v992, %v993
      %v995 = vshll.u32 2102212464, %v983
      %v996 = vshrl.u32 920167782, %v984
      %v997 = vor.u32 %v995, %v996
      %v998 = vshll.u32 920167782, %v983
      %v999 = vshrl.u32 1326507024, %v984
      %v1000 = vor.u32 %v998, %v999
      %vm1001 = vcmp.lt.s32.totalorder %v982, 1
      %vm1002 = vcmp.lt.s32.totalorder %v982, 2
      %vm1003 = vcmp.lt.s32.totalorder %v982, 3
      %vm1004 = vcmp.lt.s32.totalorder %v982, 4
      %v1005 = vsel %vm1001, %v985, %v988
      %v1006 = vsel %vm1004, %v994, 2102212464
      %v1007 = vsel %vm1003, %v991, %v1006
      %v1008 = vsel %vm1002, %v1005, %v1007
      %v1009 = vsel %vm1001, %v988, %v991
      %v1010 = vsel %vm1004, %v997, 920167782
      %v1011 = vsel %vm1003, %v994, %v1010
      %v1012 = vsel %vm1002, %v1009, %v1011
      %v1013 = vsel %vm1001, %v991, %v994
      %v1014 = vsel %vm1004, %v1000, 1326507024
      %v1015 = vsel %vm1003, %v997, %v1014
      %v1016 = vsel %vm1002, %v1013, %v1015
      %v1017 = vshll.u32 %v977, 8
      %v1018 = vmul.u32.u64.compose %v1017, %v1016
      %v1019 = vextract.low.u32 %v1018
      %v1020 = vextract.high.u32 %v1018
      %v1021 = vmul.u32.u64.compose %v1017, %v1012
      %v1022 = vextract.low.u32 %v1021
      %v1023 = vextract.high.u32 %v1021
      %v1024 = vmul.u32 %v1017, %v1008
      %v1025 = vadd.s32 %v1020, %v1022
      %vm1026 = vc.u32 %v1020, %v1022
      %v1027 = vadd.s32 %v1023, 1
      %v1028 = vsel %vm1026, %v1027, %v1023
      %v1029 = vadd.s32 %v1024, %v1028
      %v1030 = vadd.s32 %v1029, 536870912
      %v1031 = vshrl.u32 %v1030, 30
      %v1032 = vshll.u32 %v1031, 30
      %v1033 = vsub.s32 %v1029, %v1032
      %vm1034 = vcmp.lt.s32.totalorder %v1033, 0
      %v1035 = vsub.s32 0, %v1033
      %v1036 = vsel %vm1034, %v1035, %v1033
      %v1037 = vclz %v1036
      %v1038 = vsub.s32 %v1037, 2
      %vm1039 = vcmp.gt.s32.totalorder 0, %v1038
      %v1040 = vsel %vm1039, 0, %v1038
      %v1041 = vsub.s32 32, %v1040
      %v1042 = vshll.u32 %v1033, %v1040
      %v1043 = vshrl.u32 %v1025, %v1041
      %v1044 = vor.u32 %v1042, %v1043
      %v1045 = vsub.s32 4294967266, %v1040
      %v1046 = vadd.s32 %v1045, 127
      %v1047 = vshll.u32 %v1046, 23
      %v1048 = vor.u32 4788187, %v1047
      %v1049 = vand.u32 2147483647, %v1048
      %v1051 = vcvt.s32.f32 %v1044
      %v1052 = vmul.f32 %v1051, %v1049
      %v1053 = vxor.u32 %v1052, 2147483648
      %v1054 = vsel %vm971, %v1053, %v1052
      %v1055 = vsub.s32 4, %v1031
      %v1056 = vsel %vm971, %v1055, %v1031
      %v1057 = vsel %vm970, %v541, %v1054
      %v1058 = vsel %vm970, 0, %v1056
      %v1059 = vcosq.f32.pop %v1057
      %v1060 = vsinq.f32.pop %v1057
      %vm1061 = vweird.f32 %v541
      %v1062 = vadd.s32 %v1058, 3
      %v1063 = vand.u32 %v1062, 3
      %vm1064 = vcmp.lt.s32.totalorder %v1063, 2
      %vm1065 = vcmp.eq.s32.totalorder %v1063, 0
      %v1066 = vxor.u32 %v1060, 2147483648
      %v1067 = vsel %vm1065, %v1059, %v1066
      %vm1068 = vcmp.eq.s32.totalorder %v1063, 2
      %v1069 = vxor.u32 %v1059, 2147483648
      %v1070 = vsel %vm1068, %v1069, %v1060
      %v1071 = vsel %vm1064, %v1067, %v1070
      %v1072 = vsel %vm1061, nan, %v1071
      %v1073 = vand.u32 2147483647, %v542
      %vm1074 = vcmp.le.f32.partialorder %v1073, 0.7853982
      %vm1075 = vcmp.lt.s32.totalorder %v542, 0
      %v1076 = vand.u32 %v542, 2139095040
      %v1077 = vshrl.u32 %v1076, 23
      %v1078 = vsub.s32 %v1077, 127
      %v1079 = vand.u32 2147483647, %v542
      %v1080 = vand.u32 %v1079, 8388607
      %v1081 = vor.u32 %v1080, 8388608
      %v1082 = vsub.s32 0, %v1081
      %v1083 = vadd.s32 %v1078, 1
      %vm1084 = vcmp.gt.s32.totalorder %v1083, 0
      %v1085 = vsel %vm1084, %v1083, 0
      %v1086 = vshrl.u32 %v1085, 5
      %v1087 = vand.u32 %v1085, 31
      %v1088 = vsub.s32 32, %v1087
      %v1089 = vshrl.u32 683565275, %v1088
      %v1090 = vshll.u32 683565275, %v1087
      %v1091 = vshrl.u32 2475754826, %v1088
      %v1092 = vor.u32 %v1090, %v1091
      %v1093 = vshll.u32 2475754826, %v1087
      %v1094 = vshrl.u32 2131351028, %v1088
      %v1095 = vor.u32 %v1093, %v1094
      %v1096 = vshll.u32 2131351028, %v1087
      %v1097 = vshrl.u32 2102212464, %v1088
      %v1098 = vor.u32 %v1096, %v1097
      %v1099 = vshll.u32 2102212464, %v1087
      %v1100 = vshrl.u32 920167782, %v1088
      %v1101 = vor.u32 %v1099, %v1100
      %v1102 = vshll.u32 920167782, %v1087
      %v1103 = vshrl.u32 1326507024, %v1088
      %v1104 = vor.u32 %v1102, %v1103
      %vm1105 = vcmp.lt.s32.totalorder %v1086, 1
      %vm1106 = vcmp.lt.s32.totalorder %v1086, 2
      %vm1107 = vcmp.lt.s32.totalorder %v1086, 3
      %vm1108 = vcmp.lt.s32.totalorder %v1086, 4
      %v1109 = vsel %vm1105, %v1089, %v1092
      %v1110 = vsel %vm1108, %v1098, 2102212464
      %v1111 = vsel %vm1107, %v1095, %v1110
      %v1112 = vsel %vm1106, %v1109, %v1111
      %v1113 = vsel %vm1105, %v1092, %v1095
      %v1114 = vsel %vm1108, %v1101, 920167782
      %v1115 = vsel %vm1107, %v1098, %v1114
      %v1116 = vsel %vm1106, %v1113, %v1115
      %v1117 = vsel %vm1105, %v1095, %v1098
      %v1118 = vsel %vm1108, %v1104, 1326507024
      %v1119 = vsel %vm1107, %v1101, %v1118
      %v1120 = vsel %vm1106, %v1117, %v1119
      %v1121 = vshll.u32 %v1081, 8
      %v1122 = vmul.u32.u64.compose %v1121, %v1120
      %v1123 = vextract.low.u32 %v1122
      %v1124 = vextract.high.u32 %v1122
      %v1125 = vmul.u32.u64.compose %v1121, %v1116
      %v1126 = vextract.low.u32 %v1125
      %v1127 = vextract.high.u32 %v1125
      %v1128 = vmul.u32 %v1121, %v1112
      %v1129 = vadd.s32 %v1124, %v1126
      %vm1130 = vc.u32 %v1124, %v1126
      %v1131 = vadd.s32 %v1127, 1
      %v1132 = vsel %vm1130, %v1131, %v1127
      %v1133 = vadd.s32 %v1128, %v1132
      %v1134 = vadd.s32 %v1133, 536870912
      %v1135 = vshrl.u32 %v1134, 30
      %v1136 = vshll.u32 %v1135, 30
      %v1137 = vsub.s32 %v1133, %v1136
      %vm1138 = vcmp.lt.s32.totalorder %v1137, 0
      %v1139 = vsub.s32 0, %v1137
      %v1140 = vsel %vm1138, %v1139, %v1137
      %v1141 = vclz %v1140
      %v1142 = vsub.s32 %v1141, 2
      %vm1143 = vcmp.gt.s32.totalorder 0, %v1142
      %v1144 = vsel %vm1143, 0, %v1142
      %v1145 = vsub.s32 32, %v1144
      %v1146 = vshll.u32 %v1137, %v1144
      %v1147 = vshrl.u32 %v1129, %v1145
      %v1148 = vor.u32 %v1146, %v1147
      %v1149 = vsub.s32 4294967266, %v1144
      %v1150 = vadd.s32 %v1149, 127
      %v1151 = vshll.u32 %v1150, 23
      %v1152 = vor.u32 4788187, %v1151
      %v1153 = vand.u32 2147483647, %v1152
      %v1155 = vcvt.s32.f32 %v1148
      %v1156 = vmul.f32 %v1155, %v1153
      %v1157 = vxor.u32 %v1156, 2147483648
      %v1158 = vsel %vm1075, %v1157, %v1156
      %v1159 = vsub.s32 4, %v1135
      %v1160 = vsel %vm1075, %v1159, %v1135
      %v1161 = vsel %vm1074, %v542, %v1158
      %v1162 = vsel %vm1074, 0, %v1160
      %v1163 = vcosq.f32.pop %v1161
      %v1164 = vsinq.f32.pop %v1161
      %vm1165 = vweird.f32 %v542
      %v1166 = vadd.s32 %v1162, 3
      %v1167 = vand.u32 %v1166, 3
      %vm1168 = vcmp.lt.s32.totalorder %v1167, 2
      %vm1169 = vcmp.eq.s32.totalorder %v1167, 0
      %v1170 = vxor.u32 %v1164, 2147483648
      %v1171 = vsel %vm1169, %v1163, %v1170
      %vm1172 = vcmp.eq.s32.totalorder %v1167, 2
      %v1173 = vxor.u32 %v1163, 2147483648
      %v1174 = vsel %vm1172, %v1173, %v1164
      %v1175 = vsel %vm1168, %v1171, %v1174
      %v1176 = vsel %vm1165, nan, %v1175
      %v1177 = vand.u32 2147483647, %v543
      %vm1178 = vcmp.le.f32.partialorder %v1177, 0.7853982
      %vm1179 = vcmp.lt.s32.totalorder %v543, 0
      %v1180 = vand.u32 %v543, 2139095040
      %v1181 = vshrl.u32 %v1180, 23
      %v1182 = vsub.s32 %v1181, 127
      %v1183 = vand.u32 2147483647, %v543
      %v1184 = vand.u32 %v1183, 8388607
      %v1185 = vor.u32 %v1184, 8388608
      %v1186 = vsub.s32 0, %v1185
      %v1187 = vadd.s32 %v1182, 1
      %vm1188 = vcmp.gt.s32.totalorder %v1187, 0
      %v1189 = vsel %vm1188, %v1187, 0
      %v1190 = vshrl.u32 %v1189, 5
      %v1191 = vand.u32 %v1189, 31
      %v1192 = vsub.s32 32, %v1191
      %v1193 = vshrl.u32 683565275, %v1192
      %v1194 = vshll.u32 683565275, %v1191
      %v1195 = vshrl.u32 2475754826, %v1192
      %v1196 = vor.u32 %v1194, %v1195
      %v1197 = vshll.u32 2475754826, %v1191
      %v1198 = vshrl.u32 2131351028, %v1192
      %v1199 = vor.u32 %v1197, %v1198
      %v1200 = vshll.u32 2131351028, %v1191
      %v1201 = vshrl.u32 2102212464, %v1192
      %v1202 = vor.u32 %v1200, %v1201
      %v1203 = vshll.u32 2102212464, %v1191
      %v1204 = vshrl.u32 920167782, %v1192
      %v1205 = vor.u32 %v1203, %v1204
      %v1206 = vshll.u32 920167782, %v1191
      %v1207 = vshrl.u32 1326507024, %v1192
      %v1208 = vor.u32 %v1206, %v1207
      %vm1209 = vcmp.lt.s32.totalorder %v1190, 1
      %vm1210 = vcmp.lt.s32.totalorder %v1190, 2
      %vm1211 = vcmp.lt.s32.totalorder %v1190, 3
      %vm1212 = vcmp.lt.s32.totalorder %v1190, 4
      %v1213 = vsel %vm1209, %v1193, %v1196
      %v1214 = vsel %vm1212, %v1202, 2102212464
      %v1215 = vsel %vm1211, %v1199, %v1214
      %v1216 = vsel %vm1210, %v1213, %v1215
      %v1217 = vsel %vm1209, %v1196, %v1199
      %v1218 = vsel %vm1212, %v1205, 920167782
      %v1219 = vsel %vm1211, %v1202, %v1218
      %v1220 = vsel %vm1210, %v1217, %v1219
      %v1221 = vsel %vm1209, %v1199, %v1202
      %v1222 = vsel %vm1212, %v1208, 1326507024
      %v1223 = vsel %vm1211, %v1205, %v1222
      %v1224 = vsel %vm1210, %v1221, %v1223
      %v1225 = vshll.u32 %v1185, 8
      %v1226 = vmul.u32.u64.compose %v1225, %v1224
      %v1227 = vextract.low.u32 %v1226
      %v1228 = vextract.high.u32 %v1226
      %v1229 = vmul.u32.u64.compose %v1225, %v1220
      %v1230 = vextract.low.u32 %v1229
      %v1231 = vextract.high.u32 %v1229
      %v1232 = vmul.u32 %v1225, %v1216
      %v1233 = vadd.s32 %v1228, %v1230
      %vm1234 = vc.u32 %v1228, %v1230
      %v1235 = vadd.s32 %v1231, 1
      %v1236 = vsel %vm1234, %v1235, %v1231
      %v1237 = vadd.s32 %v1232, %v1236
      %v1238 = vadd.s32 %v1237, 536870912
      %v1239 = vshrl.u32 %v1238, 30
      %v1240 = vshll.u32 %v1239, 30
      %v1241 = vsub.s32 %v1237, %v1240
      %vm1242 = vcmp.lt.s32.totalorder %v1241, 0
      %v1243 = vsub.s32 0, %v1241
      %v1244 = vsel %vm1242, %v1243, %v1241
      %v1245 = vclz %v1244
      %v1246 = vsub.s32 %v1245, 2
      %vm1247 = vcmp.gt.s32.totalorder 0, %v1246
      %v1248 = vsel %vm1247, 0, %v1246
      %v1249 = vsub.s32 32, %v1248
      %v1250 = vshll.u32 %v1241, %v1248
      %v1251 = vshrl.u32 %v1233, %v1249
      %v1252 = vor.u32 %v1250, %v1251
      %v1253 = vsub.s32 4294967266, %v1248
      %v1254 = vadd.s32 %v1253, 127
      %v1255 = vshll.u32 %v1254, 23
      %v1256 = vor.u32 4788187, %v1255
      %v1257 = vand.u32 2147483647, %v1256
      %v1259 = vcvt.s32.f32 %v1252
      %v1260 = vmul.f32 %v1259, %v1257
      %v1261 = vxor.u32 %v1260, 2147483648
      %v1262 = vsel %vm1179, %v1261, %v1260
      %v1263 = vsub.s32 4, %v1239
      %v1264 = vsel %vm1179, %v1263, %v1239
      %v1265 = vsel %vm1178, %v543, %v1262
      %v1266 = vsel %vm1178, 0, %v1264
      %v1267 = vcosq.f32.pop %v1265
      %v1268 = vsinq.f32.pop %v1265
      %vm1269 = vweird.f32 %v543
      %v1270 = vadd.s32 %v1266, 3
      %v1271 = vand.u32 %v1270, 3
      %vm1272 = vcmp.lt.s32.totalorder %v1271, 2
      %vm1273 = vcmp.eq.s32.totalorder %v1271, 0
      %v1274 = vxor.u32 %v1268, 2147483648
      %v1275 = vsel %vm1273, %v1267, %v1274
      %vm1276 = vcmp.eq.s32.totalorder %v1271, 2
      %v1277 = vxor.u32 %v1267, 2147483648
      %v1278 = vsel %vm1276, %v1277, %v1268
      %v1279 = vsel %vm1272, %v1275, %v1278
      %v1280 = vsel %vm1269, nan, %v1279
      %v1281 = vand.u32 2147483647, %v544
      %vm1282 = vcmp.le.f32.partialorder %v1281, 0.7853982
      %vm1283 = vcmp.lt.s32.totalorder %v544, 0
      %v1284 = vand.u32 %v544, 2139095040
      %v1285 = vshrl.u32 %v1284, 23
      %v1286 = vsub.s32 %v1285, 127
      %v1287 = vand.u32 2147483647, %v544
      %v1288 = vand.u32 %v1287, 8388607
      %v1289 = vor.u32 %v1288, 8388608
      %v1290 = vsub.s32 0, %v1289
      %v1291 = vadd.s32 %v1286, 1
      %vm1292 = vcmp.gt.s32.totalorder %v1291, 0
      %v1293 = vsel %vm1292, %v1291, 0
      %v1294 = vshrl.u32 %v1293, 5
      %v1295 = vand.u32 %v1293, 31
      %v1296 = vsub.s32 32, %v1295
      %v1297 = vshrl.u32 683565275, %v1296
      %v1298 = vshll.u32 683565275, %v1295
      %v1299 = vshrl.u32 2475754826, %v1296
      %v1300 = vor.u32 %v1298, %v1299
      %v1301 = vshll.u32 2475754826, %v1295
      %v1302 = vshrl.u32 2131351028, %v1296
      %v1303 = vor.u32 %v1301, %v1302
      %v1304 = vshll.u32 2131351028, %v1295
      %v1305 = vshrl.u32 2102212464, %v1296
      %v1306 = vor.u32 %v1304, %v1305
      %v1307 = vshll.u32 2102212464, %v1295
      %v1308 = vshrl.u32 920167782, %v1296
      %v1309 = vor.u32 %v1307, %v1308
      %v1310 = vshll.u32 920167782, %v1295
      %v1311 = vshrl.u32 1326507024, %v1296
      %v1312 = vor.u32 %v1310, %v1311
      %vm1313 = vcmp.lt.s32.totalorder %v1294, 1
      %vm1314 = vcmp.lt.s32.totalorder %v1294, 2
      %vm1315 = vcmp.lt.s32.totalorder %v1294, 3
      %vm1316 = vcmp.lt.s32.totalorder %v1294, 4
      %v1317 = vsel %vm1313, %v1297, %v1300
      %v1318 = vsel %vm1316, %v1306, 2102212464
      %v1319 = vsel %vm1315, %v1303, %v1318
      %v1320 = vsel %vm1314, %v1317, %v1319
      %v1321 = vsel %vm1313, %v1300, %v1303
      %v1322 = vsel %vm1316, %v1309, 920167782
      %v1323 = vsel %vm1315, %v1306, %v1322
      %v1324 = vsel %vm1314, %v1321, %v1323
      %v1325 = vsel %vm1313, %v1303, %v1306
      %v1326 = vsel %vm1316, %v1312, 1326507024
      %v1327 = vsel %vm1315, %v1309, %v1326
      %v1328 = vsel %vm1314, %v1325, %v1327
      %v1329 = vshll.u32 %v1289, 8
      %v1330 = vmul.u32.u64.compose %v1329, %v1328
      %v1331 = vextract.low.u32 %v1330
      %v1332 = vextract.high.u32 %v1330
      %v1333 = vmul.u32.u64.compose %v1329, %v1324
      %v1334 = vextract.low.u32 %v1333
      %v1335 = vextract.high.u32 %v1333
      %v1336 = vmul.u32 %v1329, %v1320
      %v1337 = vadd.s32 %v1332, %v1334
      %vm1338 = vc.u32 %v1332, %v1334
      %v1339 = vadd.s32 %v1335, 1
      %v1340 = vsel %vm1338, %v1339, %v1335
      %v1341 = vadd.s32 %v1336, %v1340
      %v1342 = vadd.s32 %v1341, 536870912
      %v1343 = vshrl.u32 %v1342, 30
      %v1344 = vshll.u32 %v1343, 30
      %v1345 = vsub.s32 %v1341, %v1344
      %vm1346 = vcmp.lt.s32.totalorder %v1345, 0
      %v1347 = vsub.s32 0, %v1345
      %v1348 = vsel %vm1346, %v1347, %v1345
      %v1349 = vclz %v1348
      %v1350 = vsub.s32 %v1349, 2
      %vm1351 = vcmp.gt.s32.totalorder 0, %v1350
      %v1352 = vsel %vm1351, 0, %v1350
      %v1353 = vsub.s32 32, %v1352
      %v1354 = vshll.u32 %v1345, %v1352
      %v1355 = vshrl.u32 %v1337, %v1353
      %v1356 = vor.u32 %v1354, %v1355
      %v1357 = vsub.s32 4294967266, %v1352
      %v1358 = vadd.s32 %v1357, 127
      %v1359 = vshll.u32 %v1358, 23
      %v1360 = vor.u32 4788187, %v1359
      %v1361 = vand.u32 2147483647, %v1360
      %v1363 = vcvt.s32.f32 %v1356
      %v1364 = vmul.f32 %v1363, %v1361
      %v1365 = vxor.u32 %v1364, 2147483648
      %v1366 = vsel %vm1283, %v1365, %v1364
      %v1367 = vsub.s32 4, %v1343
      %v1368 = vsel %vm1283, %v1367, %v1343
      %v1369 = vsel %vm1282, %v544, %v1366
      %v1370 = vsel %vm1282, 0, %v1368
      %v1371 = vcosq.f32.pop %v1369
      %v1372 = vsinq.f32.pop %v1369
      %vm1373 = vweird.f32 %v544
      %v1374 = vadd.s32 %v1370, 3
      %v1375 = vand.u32 %v1374, 3
      %vm1376 = vcmp.lt.s32.totalorder %v1375, 2
      %vm1377 = vcmp.eq.s32.totalorder %v1375, 0
      %v1378 = vxor.u32 %v1372, 2147483648
      %v1379 = vsel %vm1377, %v1371, %v1378
      %vm1380 = vcmp.eq.s32.totalorder %v1375, 2
      %v1381 = vxor.u32 %v1371, 2147483648
      %v1382 = vsel %vm1380, %v1381, %v1372
      %v1383 = vsel %vm1376, %v1379, %v1382
      %v1384 = vsel %vm1373, nan, %v1383
      %v1385 = vand.u32 2147483647, %v545
      %vm1386 = vcmp.le.f32.partialorder %v1385, 0.7853982
      %vm1387 = vcmp.lt.s32.totalorder %v545, 0
      %v1388 = vand.u32 %v545, 2139095040
      %v1389 = vshrl.u32 %v1388, 23
      %v1390 = vsub.s32 %v1389, 127
      %v1391 = vand.u32 2147483647, %v545
      %v1392 = vand.u32 %v1391, 8388607
      %v1393 = vor.u32 %v1392, 8388608
      %v1394 = vsub.s32 0, %v1393
      %v1395 = vadd.s32 %v1390, 1
      %vm1396 = vcmp.gt.s32.totalorder %v1395, 0
      %v1397 = vsel %vm1396, %v1395, 0
      %v1398 = vshrl.u32 %v1397, 5
      %v1399 = vand.u32 %v1397, 31
      %v1400 = vsub.s32 32, %v1399
      %v1401 = vshrl.u32 683565275, %v1400
      %v1402 = vshll.u32 683565275, %v1399
      %v1403 = vshrl.u32 2475754826, %v1400
      %v1404 = vor.u32 %v1402, %v1403
      %v1405 = vshll.u32 2475754826, %v1399
      %v1406 = vshrl.u32 2131351028, %v1400
      %v1407 = vor.u32 %v1405, %v1406
      %v1408 = vshll.u32 2131351028, %v1399
      %v1409 = vshrl.u32 2102212464, %v1400
      %v1410 = vor.u32 %v1408, %v1409
      %v1411 = vshll.u32 2102212464, %v1399
      %v1412 = vshrl.u32 920167782, %v1400
      %v1413 = vor.u32 %v1411, %v1412
      %v1414 = vshll.u32 920167782, %v1399
      %v1415 = vshrl.u32 1326507024, %v1400
      %v1416 = vor.u32 %v1414, %v1415
      %vm1417 = vcmp.lt.s32.totalorder %v1398, 1
      %vm1418 = vcmp.lt.s32.totalorder %v1398, 2
      %vm1419 = vcmp.lt.s32.totalorder %v1398, 3
      %vm1420 = vcmp.lt.s32.totalorder %v1398, 4
      %v1421 = vsel %vm1417, %v1401, %v1404
      %v1422 = vsel %vm1420, %v1410, 2102212464
      %v1423 = vsel %vm1419, %v1407, %v1422
      %v1424 = vsel %vm1418, %v1421, %v1423
      %v1425 = vsel %vm1417, %v1404, %v1407
      %v1426 = vsel %vm1420, %v1413, 920167782
      %v1427 = vsel %vm1419, %v1410, %v1426
      %v1428 = vsel %vm1418, %v1425, %v1427
      %v1429 = vsel %vm1417, %v1407, %v1410
      %v1430 = vsel %vm1420, %v1416, 1326507024
      %v1431 = vsel %vm1419, %v1413, %v1430
      %v1432 = vsel %vm1418, %v1429, %v1431
      %v1433 = vshll.u32 %v1393, 8
      %v1434 = vmul.u32.u64.compose %v1433, %v1432
      %v1435 = vextract.low.u32 %v1434
      %v1436 = vextract.high.u32 %v1434
      %v1437 = vmul.u32.u64.compose %v1433, %v1428
      %v1438 = vextract.low.u32 %v1437
      %v1439 = vextract.high.u32 %v1437
      %v1440 = vmul.u32 %v1433, %v1424
      %v1441 = vadd.s32 %v1436, %v1438
      %vm1442 = vc.u32 %v1436, %v1438
      %v1443 = vadd.s32 %v1439, 1
      %v1444 = vsel %vm1442, %v1443, %v1439
      %v1445 = vadd.s32 %v1440, %v1444
      %v1446 = vadd.s32 %v1445, 536870912
      %v1447 = vshrl.u32 %v1446, 30
      %v1448 = vshll.u32 %v1447, 30
      %v1449 = vsub.s32 %v1445, %v1448
      %vm1450 = vcmp.lt.s32.totalorder %v1449, 0
      %v1451 = vsub.s32 0, %v1449
      %v1452 = vsel %vm1450, %v1451, %v1449
      %v1453 = vclz %v1452
      %v1454 = vsub.s32 %v1453, 2
      %vm1455 = vcmp.gt.s32.totalorder 0, %v1454
      %v1456 = vsel %vm1455, 0, %v1454
      %v1457 = vsub.s32 32, %v1456
      %v1458 = vshll.u32 %v1449, %v1456
      %v1459 = vshrl.u32 %v1441, %v1457
      %v1460 = vor.u32 %v1458, %v1459
      %v1461 = vsub.s32 4294967266, %v1456
      %v1462 = vadd.s32 %v1461, 127
      %v1463 = vshll.u32 %v1462, 23
      %v1464 = vor.u32 4788187, %v1463
      %v1465 = vand.u32 2147483647, %v1464
      %v1467 = vcvt.s32.f32 %v1460
      %v1468 = vmul.f32 %v1467, %v1465
      %v1469 = vxor.u32 %v1468, 2147483648
      %v1470 = vsel %vm1387, %v1469, %v1468
      %v1471 = vsub.s32 4, %v1447
      %v1472 = vsel %vm1387, %v1471, %v1447
      %v1473 = vsel %vm1386, %v545, %v1470
      %v1474 = vsel %vm1386, 0, %v1472
      %v1475 = vcosq.f32.pop %v1473
      %v1476 = vsinq.f32.pop %v1473
      %vm1477 = vweird.f32 %v545
      %v1478 = vadd.s32 %v1474, 3
      %v1479 = vand.u32 %v1478, 3
      %vm1480 = vcmp.lt.s32.totalorder %v1479, 2
      %vm1481 = vcmp.eq.s32.totalorder %v1479, 0
      %v1482 = vxor.u32 %v1476, 2147483648
      %v1483 = vsel %vm1481, %v1475, %v1482
      %vm1484 = vcmp.eq.s32.totalorder %v1479, 2
      %v1485 = vxor.u32 %v1475, 2147483648
      %v1486 = vsel %vm1484, %v1485, %v1476
      %v1487 = vsel %vm1480, %v1483, %v1486
      %v1488 = vsel %vm1477, nan, %v1487
      %v1489 = vand.u32 2147483647, %v546
      %vm1490 = vcmp.le.f32.partialorder %v1489, 0.7853982
      %vm1491 = vcmp.lt.s32.totalorder %v546, 0
      %v1492 = vand.u32 %v546, 2139095040
      %v1493 = vshrl.u32 %v1492, 23
      %v1494 = vsub.s32 %v1493, 127
      %v1495 = vand.u32 2147483647, %v546
      %v1496 = vand.u32 %v1495, 8388607
      %v1497 = vor.u32 %v1496, 8388608
      %v1498 = vsub.s32 0, %v1497
      %v1499 = vadd.s32 %v1494, 1
      %vm1500 = vcmp.gt.s32.totalorder %v1499, 0
      %v1501 = vsel %vm1500, %v1499, 0
      %v1502 = vshrl.u32 %v1501, 5
      %v1503 = vand.u32 %v1501, 31
      %v1504 = vsub.s32 32, %v1503
      %v1505 = vshrl.u32 683565275, %v1504
      %v1506 = vshll.u32 683565275, %v1503
      %v1507 = vshrl.u32 2475754826, %v1504
      %v1508 = vor.u32 %v1506, %v1507
      %v1509 = vshll.u32 2475754826, %v1503
      %v1510 = vshrl.u32 2131351028, %v1504
      %v1511 = vor.u32 %v1509, %v1510
      %v1512 = vshll.u32 2131351028, %v1503
      %v1513 = vshrl.u32 2102212464, %v1504
      %v1514 = vor.u32 %v1512, %v1513
      %v1515 = vshll.u32 2102212464, %v1503
      %v1516 = vshrl.u32 920167782, %v1504
      %v1517 = vor.u32 %v1515, %v1516
      %v1518 = vshll.u32 920167782, %v1503
      %v1519 = vshrl.u32 1326507024, %v1504
      %v1520 = vor.u32 %v1518, %v1519
      %vm1521 = vcmp.lt.s32.totalorder %v1502, 1
      %vm1522 = vcmp.lt.s32.totalorder %v1502, 2
      %vm1523 = vcmp.lt.s32.totalorder %v1502, 3
      %vm1524 = vcmp.lt.s32.totalorder %v1502, 4
      %v1525 = vsel %vm1521, %v1505, %v1508
      %v1526 = vsel %vm1524, %v1514, 2102212464
      %v1527 = vsel %vm1523, %v1511, %v1526
      %v1528 = vsel %vm1522, %v1525, %v1527
      %v1529 = vsel %vm1521, %v1508, %v1511
      %v1530 = vsel %vm1524, %v1517, 920167782
      %v1531 = vsel %vm1523, %v1514, %v1530
      %v1532 = vsel %vm1522, %v1529, %v1531
      %v1533 = vsel %vm1521, %v1511, %v1514
      %v1534 = vsel %vm1524, %v1520, 1326507024
      %v1535 = vsel %vm1523, %v1517, %v1534
      %v1536 = vsel %vm1522, %v1533, %v1535
      %v1537 = vshll.u32 %v1497, 8
      %v1538 = vmul.u32.u64.compose %v1537, %v1536
      %v1539 = vextract.low.u32 %v1538
      %v1540 = vextract.high.u32 %v1538
      %v1541 = vmul.u32.u64.compose %v1537, %v1532
      %v1542 = vextract.low.u32 %v1541
      %v1543 = vextract.high.u32 %v1541
      %v1544 = vmul.u32 %v1537, %v1528
      %v1545 = vadd.s32 %v1540, %v1542
      %vm1546 = vc.u32 %v1540, %v1542
      %v1547 = vadd.s32 %v1543, 1
      %v1548 = vsel %vm1546, %v1547, %v1543
      %v1549 = vadd.s32 %v1544, %v1548
      %v1550 = vadd.s32 %v1549, 536870912
      %v1551 = vshrl.u32 %v1550, 30
      %v1552 = vshll.u32 %v1551, 30
      %v1553 = vsub.s32 %v1549, %v1552
      %vm1554 = vcmp.lt.s32.totalorder %v1553, 0
      %v1555 = vsub.s32 0, %v1553
      %v1556 = vsel %vm1554, %v1555, %v1553
      %v1557 = vclz %v1556
      %v1558 = vsub.s32 %v1557, 2
      %vm1559 = vcmp.gt.s32.totalorder 0, %v1558
      %v1560 = vsel %vm1559, 0, %v1558
      %v1561 = vsub.s32 32, %v1560
      %v1562 = vshll.u32 %v1553, %v1560
      %v1563 = vshrl.u32 %v1545, %v1561
      %v1564 = vor.u32 %v1562, %v1563
      %v1565 = vsub.s32 4294967266, %v1560
      %v1566 = vadd.s32 %v1565, 127
      %v1567 = vshll.u32 %v1566, 23
      %v1568 = vor.u32 4788187, %v1567
      %v1569 = vand.u32 2147483647, %v1568
      %v1571 = vcvt.s32.f32 %v1564
      %v1572 = vmul.f32 %v1571, %v1569
      %v1573 = vxor.u32 %v1572, 2147483648
      %v1574 = vsel %vm1491, %v1573, %v1572
      %v1575 = vsub.s32 4, %v1551
      %v1576 = vsel %vm1491, %v1575, %v1551
      %v1577 = vsel %vm1490, %v546, %v1574
      %v1578 = vsel %vm1490, 0, %v1576
      %v1579 = vcosq.f32.pop %v1577
      %v1580 = vsinq.f32.pop %v1577
      %vm1581 = vweird.f32 %v546
      %v1582 = vadd.s32 %v1578, 3
      %v1583 = vand.u32 %v1582, 3
      %vm1584 = vcmp.lt.s32.totalorder %v1583, 2
      %vm1585 = vcmp.eq.s32.totalorder %v1583, 0
      %v1586 = vxor.u32 %v1580, 2147483648
      %v1587 = vsel %vm1585, %v1579, %v1586
      %vm1588 = vcmp.eq.s32.totalorder %v1583, 2
      %v1589 = vxor.u32 %v1579, 2147483648
      %v1590 = vsel %vm1588, %v1589, %v1580
      %v1591 = vsel %vm1584, %v1587, %v1590
      %v1592 = vsel %vm1581, nan, %v1591
      %v1593 = vand.u32 2147483647, %v547
      %vm1594 = vcmp.le.f32.partialorder %v1593, 0.7853982
      %vm1595 = vcmp.lt.s32.totalorder %v547, 0
      %v1596 = vand.u32 %v547, 2139095040
      %v1597 = vshrl.u32 %v1596, 23
      %v1598 = vsub.s32 %v1597, 127
      %v1599 = vand.u32 2147483647, %v547
      %v1600 = vand.u32 %v1599, 8388607
      %v1601 = vor.u32 %v1600, 8388608
      %v1602 = vsub.s32 0, %v1601
      %v1603 = vadd.s32 %v1598, 1
      %vm1604 = vcmp.gt.s32.totalorder %v1603, 0
      %v1605 = vsel %vm1604, %v1603, 0
      %v1606 = vshrl.u32 %v1605, 5
      %v1607 = vand.u32 %v1605, 31
      %v1608 = vsub.s32 32, %v1607
      %v1609 = vshrl.u32 683565275, %v1608
      %v1610 = vshll.u32 683565275, %v1607
      %v1611 = vshrl.u32 2475754826, %v1608
      %v1612 = vor.u32 %v1610, %v1611
      %v1613 = vshll.u32 2475754826, %v1607
      %v1614 = vshrl.u32 2131351028, %v1608
      %v1615 = vor.u32 %v1613, %v1614
      %v1616 = vshll.u32 2131351028, %v1607
      %v1617 = vshrl.u32 2102212464, %v1608
      %v1618 = vor.u32 %v1616, %v1617
      %v1619 = vshll.u32 2102212464, %v1607
      %v1620 = vshrl.u32 920167782, %v1608
      %v1621 = vor.u32 %v1619, %v1620
      %v1622 = vshll.u32 920167782, %v1607
      %v1623 = vshrl.u32 1326507024, %v1608
      %v1624 = vor.u32 %v1622, %v1623
      %vm1625 = vcmp.lt.s32.totalorder %v1606, 1
      %vm1626 = vcmp.lt.s32.totalorder %v1606, 2
      %vm1627 = vcmp.lt.s32.totalorder %v1606, 3
      %vm1628 = vcmp.lt.s32.totalorder %v1606, 4
      %v1629 = vsel %vm1625, %v1609, %v1612
      %v1630 = vsel %vm1628, %v1618, 2102212464
      %v1631 = vsel %vm1627, %v1615, %v1630
      %v1632 = vsel %vm1626, %v1629, %v1631
      %v1633 = vsel %vm1625, %v1612, %v1615
      %v1634 = vsel %vm1628, %v1621, 920167782
      %v1635 = vsel %vm1627, %v1618, %v1634
      %v1636 = vsel %vm1626, %v1633, %v1635
      %v1637 = vsel %vm1625, %v1615, %v1618
      %v1638 = vsel %vm1628, %v1624, 1326507024
      %v1639 = vsel %vm1627, %v1621, %v1638
      %v1640 = vsel %vm1626, %v1637, %v1639
      %v1641 = vshll.u32 %v1601, 8
      %v1642 = vmul.u32.u64.compose %v1641, %v1640
      %v1643 = vextract.low.u32 %v1642
      %v1644 = vextract.high.u32 %v1642
      %v1645 = vmul.u32.u64.compose %v1641, %v1636
      %v1646 = vextract.low.u32 %v1645
      %v1647 = vextract.high.u32 %v1645
      %v1648 = vmul.u32 %v1641, %v1632
      %v1649 = vadd.s32 %v1644, %v1646
      %vm1650 = vc.u32 %v1644, %v1646
      %v1651 = vadd.s32 %v1647, 1
      %v1652 = vsel %vm1650, %v1651, %v1647
      %v1653 = vadd.s32 %v1648, %v1652
      %v1654 = vadd.s32 %v1653, 536870912
      %v1655 = vshrl.u32 %v1654, 30
      %v1656 = vshll.u32 %v1655, 30
      %v1657 = vsub.s32 %v1653, %v1656
      %vm1658 = vcmp.lt.s32.totalorder %v1657, 0
      %v1659 = vsub.s32 0, %v1657
      %v1660 = vsel %vm1658, %v1659, %v1657
      %v1661 = vclz %v1660
      %v1662 = vsub.s32 %v1661, 2
      %vm1663 = vcmp.gt.s32.totalorder 0, %v1662
      %v1664 = vsel %vm1663, 0, %v1662
      %v1665 = vsub.s32 32, %v1664
      %v1666 = vshll.u32 %v1657, %v1664
      %v1667 = vshrl.u32 %v1649, %v1665
      %v1668 = vor.u32 %v1666, %v1667
      %v1669 = vsub.s32 4294967266, %v1664
      %v1670 = vadd.s32 %v1669, 127
      %v1671 = vshll.u32 %v1670, 23
      %v1672 = vor.u32 4788187, %v1671
      %v1673 = vand.u32 2147483647, %v1672
      %v1675 = vcvt.s32.f32 %v1668
      %v1676 = vmul.f32 %v1675, %v1673
      %v1677 = vxor.u32 %v1676, 2147483648
      %v1678 = vsel %vm1595, %v1677, %v1676
      %v1679 = vsub.s32 4, %v1655
      %v1680 = vsel %vm1595, %v1679, %v1655
      %v1681 = vsel %vm1594, %v547, %v1678
      %v1682 = vsel %vm1594, 0, %v1680
      %v1683 = vcosq.f32.pop %v1681
      %v1684 = vsinq.f32.pop %v1681
      %vm1685 = vweird.f32 %v547
      %v1686 = vadd.s32 %v1682, 3
      %v1687 = vand.u32 %v1686, 3
      %vm1688 = vcmp.lt.s32.totalorder %v1687, 2
      %vm1689 = vcmp.eq.s32.totalorder %v1687, 0
      %v1690 = vxor.u32 %v1684, 2147483648
      %v1691 = vsel %vm1689, %v1683, %v1690
      %vm1692 = vcmp.eq.s32.totalorder %v1687, 2
      %v1693 = vxor.u32 %v1683, 2147483648
      %v1694 = vsel %vm1692, %v1693, %v1684
      %v1695 = vsel %vm1688, %v1691, %v1694
      %v1696 = vsel %vm1685, nan, %v1695
      %v1697 = vand.u32 2147483647, %v548
      %vm1698 = vcmp.le.f32.partialorder %v1697, 0.7853982
      %vm1699 = vcmp.lt.s32.totalorder %v548, 0
      %v1700 = vand.u32 %v548, 2139095040
      %v1701 = vshrl.u32 %v1700, 23
      %v1702 = vsub.s32 %v1701, 127
      %v1703 = vand.u32 2147483647, %v548
      %v1704 = vand.u32 %v1703, 8388607
      %v1705 = vor.u32 %v1704, 8388608
      %v1706 = vsub.s32 0, %v1705
      %v1707 = vadd.s32 %v1702, 1
      %vm1708 = vcmp.gt.s32.totalorder %v1707, 0
      %v1709 = vsel %vm1708, %v1707, 0
      %v1710 = vshrl.u32 %v1709, 5
      %v1711 = vand.u32 %v1709, 31
      %v1712 = vsub.s32 32, %v1711
      %v1713 = vshrl.u32 683565275, %v1712
      %v1714 = vshll.u32 683565275, %v1711
      %v1715 = vshrl.u32 2475754826, %v1712
      %v1716 = vor.u32 %v1714, %v1715
      %v1717 = vshll.u32 2475754826, %v1711
      %v1718 = vshrl.u32 2131351028, %v1712
      %v1719 = vor.u32 %v1717, %v1718
      %v1720 = vshll.u32 2131351028, %v1711
      %v1721 = vshrl.u32 2102212464, %v1712
      %v1722 = vor.u32 %v1720, %v1721
      %v1723 = vshll.u32 2102212464, %v1711
      %v1724 = vshrl.u32 920167782, %v1712
      %v1725 = vor.u32 %v1723, %v1724
      %v1726 = vshll.u32 920167782, %v1711
      %v1727 = vshrl.u32 1326507024, %v1712
      %v1728 = vor.u32 %v1726, %v1727
      %vm1729 = vcmp.lt.s32.totalorder %v1710, 1
      %vm1730 = vcmp.lt.s32.totalorder %v1710, 2
      %vm1731 = vcmp.lt.s32.totalorder %v1710, 3
      %vm1732 = vcmp.lt.s32.totalorder %v1710, 4
      %v1733 = vsel %vm1729, %v1713, %v1716
      %v1734 = vsel %vm1732, %v1722, 2102212464
      %v1735 = vsel %vm1731, %v1719, %v1734
      %v1736 = vsel %vm1730, %v1733, %v1735
      %v1737 = vsel %vm1729, %v1716, %v1719
      %v1738 = vsel %vm1732, %v1725, 920167782
      %v1739 = vsel %vm1731, %v1722, %v1738
      %v1740 = vsel %vm1730, %v1737, %v1739
      %v1741 = vsel %vm1729, %v1719, %v1722
      %v1742 = vsel %vm1732, %v1728, 1326507024
      %v1743 = vsel %vm1731, %v1725, %v1742
      %v1744 = vsel %vm1730, %v1741, %v1743
      %v1745 = vshll.u32 %v1705, 8
      %v1746 = vmul.u32.u64.compose %v1745, %v1744
      %v1747 = vextract.low.u32 %v1746
      %v1748 = vextract.high.u32 %v1746
      %v1749 = vmul.u32.u64.compose %v1745, %v1740
      %v1750 = vextract.low.u32 %v1749
      %v1751 = vextract.high.u32 %v1749
      %v1752 = vmul.u32 %v1745, %v1736
      %v1753 = vadd.s32 %v1748, %v1750
      %vm1754 = vc.u32 %v1748, %v1750
      %v1755 = vadd.s32 %v1751, 1
      %v1756 = vsel %vm1754, %v1755, %v1751
      %v1757 = vadd.s32 %v1752, %v1756
      %v1758 = vadd.s32 %v1757, 536870912
      %v1759 = vshrl.u32 %v1758, 30
      %v1760 = vshll.u32 %v1759, 30
      %v1761 = vsub.s32 %v1757, %v1760
      %vm1762 = vcmp.lt.s32.totalorder %v1761, 0
      %v1763 = vsub.s32 0, %v1761
      %v1764 = vsel %vm1762, %v1763, %v1761
      %v1765 = vclz %v1764
      %v1766 = vsub.s32 %v1765, 2
      %vm1767 = vcmp.gt.s32.totalorder 0, %v1766
      %v1768 = vsel %vm1767, 0, %v1766
      %v1769 = vsub.s32 32, %v1768
      %v1770 = vshll.u32 %v1761, %v1768
      %v1771 = vshrl.u32 %v1753, %v1769
      %v1772 = vor.u32 %v1770, %v1771
      %v1773 = vsub.s32 4294967266, %v1768
      %v1774 = vadd.s32 %v1773, 127
      %v1775 = vshll.u32 %v1774, 23
      %v1776 = vor.u32 4788187, %v1775
      %v1777 = vand.u32 2147483647, %v1776
      %v1779 = vcvt.s32.f32 %v1772
      %v1780 = vmul.f32 %v1779, %v1777
      %v1781 = vxor.u32 %v1780, 2147483648
      %v1782 = vsel %vm1699, %v1781, %v1780
      %v1783 = vsub.s32 4, %v1759
      %v1784 = vsel %vm1699, %v1783, %v1759
      %v1785 = vsel %vm1698, %v548, %v1782
      %v1786 = vsel %vm1698, 0, %v1784
      %v1787 = vcosq.f32.pop %v1785
      %v1788 = vsinq.f32.pop %v1785
      %vm1789 = vweird.f32 %v548
      %v1790 = vadd.s32 %v1786, 3
      %v1791 = vand.u32 %v1790, 3
      %vm1792 = vcmp.lt.s32.totalorder %v1791, 2
      %vm1793 = vcmp.eq.s32.totalorder %v1791, 0
      %v1794 = vxor.u32 %v1788, 2147483648
      %v1795 = vsel %vm1793, %v1787, %v1794
      %vm1796 = vcmp.eq.s32.totalorder %v1791, 2
      %v1797 = vxor.u32 %v1787, 2147483648
      %v1798 = vsel %vm1796, %v1797, %v1788
      %v1799 = vsel %vm1792, %v1795, %v1798
      %v1800 = vsel %vm1789, nan, %v1799
      %v1801 = vand.u32 2147483647, %v549
      %vm1802 = vcmp.le.f32.partialorder %v1801, 0.7853982
      %vm1803 = vcmp.lt.s32.totalorder %v549, 0
      %v1804 = vand.u32 %v549, 2139095040
      %v1805 = vshrl.u32 %v1804, 23
      %v1806 = vsub.s32 %v1805, 127
      %v1807 = vand.u32 2147483647, %v549
      %v1808 = vand.u32 %v1807, 8388607
      %v1809 = vor.u32 %v1808, 8388608
      %v1810 = vsub.s32 0, %v1809
      %v1811 = vadd.s32 %v1806, 1
      %vm1812 = vcmp.gt.s32.totalorder %v1811, 0
      %v1813 = vsel %vm1812, %v1811, 0
      %v1814 = vshrl.u32 %v1813, 5
      %v1815 = vand.u32 %v1813, 31
      %v1816 = vsub.s32 32, %v1815
      %v1817 = vshrl.u32 683565275, %v1816
      %v1818 = vshll.u32 683565275, %v1815
      %v1819 = vshrl.u32 2475754826, %v1816
      %v1820 = vor.u32 %v1818, %v1819
      %v1821 = vshll.u32 2475754826, %v1815
      %v1822 = vshrl.u32 2131351028, %v1816
      %v1823 = vor.u32 %v1821, %v1822
      %v1824 = vshll.u32 2131351028, %v1815
      %v1825 = vshrl.u32 2102212464, %v1816
      %v1826 = vor.u32 %v1824, %v1825
      %v1827 = vshll.u32 2102212464, %v1815
      %v1828 = vshrl.u32 920167782, %v1816
      %v1829 = vor.u32 %v1827, %v1828
      %v1830 = vshll.u32 920167782, %v1815
      %v1831 = vshrl.u32 1326507024, %v1816
      %v1832 = vor.u32 %v1830, %v1831
      %vm1833 = vcmp.lt.s32.totalorder %v1814, 1
      %vm1834 = vcmp.lt.s32.totalorder %v1814, 2
      %vm1835 = vcmp.lt.s32.totalorder %v1814, 3
      %vm1836 = vcmp.lt.s32.totalorder %v1814, 4
      %v1837 = vsel %vm1833, %v1817, %v1820
      %v1838 = vsel %vm1836, %v1826, 2102212464
      %v1839 = vsel %vm1835, %v1823, %v1838
      %v1840 = vsel %vm1834, %v1837, %v1839
      %v1841 = vsel %vm1833, %v1820, %v1823
      %v1842 = vsel %vm1836, %v1829, 920167782
      %v1843 = vsel %vm1835, %v1826, %v1842
      %v1844 = vsel %vm1834, %v1841, %v1843
      %v1845 = vsel %vm1833, %v1823, %v1826
      %v1846 = vsel %vm1836, %v1832, 1326507024
      %v1847 = vsel %vm1835, %v1829, %v1846
      %v1848 = vsel %vm1834, %v1845, %v1847
      %v1849 = vshll.u32 %v1809, 8
      %v1850 = vmul.u32.u64.compose %v1849, %v1848
      %v1851 = vextract.low.u32 %v1850
      %v1852 = vextract.high.u32 %v1850
      %v1853 = vmul.u32.u64.compose %v1849, %v1844
      %v1854 = vextract.low.u32 %v1853
      %v1855 = vextract.high.u32 %v1853
      %v1856 = vmul.u32 %v1849, %v1840
      %v1857 = vadd.s32 %v1852, %v1854
      %vm1858 = vc.u32 %v1852, %v1854
      %v1859 = vadd.s32 %v1855, 1
      %v1860 = vsel %vm1858, %v1859, %v1855
      %v1861 = vadd.s32 %v1856, %v1860
      %v1862 = vadd.s32 %v1861, 536870912
      %v1863 = vshrl.u32 %v1862, 30
      %v1864 = vshll.u32 %v1863, 30
      %v1865 = vsub.s32 %v1861, %v1864
      %vm1866 = vcmp.lt.s32.totalorder %v1865, 0
      %v1867 = vsub.s32 0, %v1865
      %v1868 = vsel %vm1866, %v1867, %v1865
      %v1869 = vclz %v1868
      %v1870 = vsub.s32 %v1869, 2
      %vm1871 = vcmp.gt.s32.totalorder 0, %v1870
      %v1872 = vsel %vm1871, 0, %v1870
      %v1873 = vsub.s32 32, %v1872
      %v1874 = vshll.u32 %v1865, %v1872
      %v1875 = vshrl.u32 %v1857, %v1873
      %v1876 = vor.u32 %v1874, %v1875
      %v1877 = vsub.s32 4294967266, %v1872
      %v1878 = vadd.s32 %v1877, 127
      %v1879 = vshll.u32 %v1878, 23
      %v1880 = vor.u32 4788187, %v1879
      %v1881 = vand.u32 2147483647, %v1880
      %v1883 = vcvt.s32.f32 %v1876
      %v1884 = vmul.f32 %v1883, %v1881
      %v1885 = vxor.u32 %v1884, 2147483648
      %v1886 = vsel %vm1803, %v1885, %v1884
      %v1887 = vsub.s32 4, %v1863
      %v1888 = vsel %vm1803, %v1887, %v1863
      %v1889 = vsel %vm1802, %v549, %v1886
      %v1890 = vsel %vm1802, 0, %v1888
      %v1891 = vcosq.f32.pop %v1889
      %v1892 = vsinq.f32.pop %v1889
      %vm1893 = vweird.f32 %v549
      %v1894 = vadd.s32 %v1890, 3
      %v1895 = vand.u32 %v1894, 3
      %vm1896 = vcmp.lt.s32.totalorder %v1895, 2
      %vm1897 = vcmp.eq.s32.totalorder %v1895, 0
      %v1898 = vxor.u32 %v1892, 2147483648
      %v1899 = vsel %vm1897, %v1891, %v1898
      %vm1900 = vcmp.eq.s32.totalorder %v1895, 2
      %v1901 = vxor.u32 %v1891, 2147483648
      %v1902 = vsel %vm1900, %v1901, %v1892
      %v1903 = vsel %vm1896, %v1899, %v1902
      %v1904 = vsel %vm1893, nan, %v1903
      %v1905 = vand.u32 2147483647, %v550
      %vm1906 = vcmp.le.f32.partialorder %v1905, 0.7853982
      %vm1907 = vcmp.lt.s32.totalorder %v550, 0
      %v1908 = vand.u32 %v550, 2139095040
      %v1909 = vshrl.u32 %v1908, 23
      %v1910 = vsub.s32 %v1909, 127
      %v1911 = vand.u32 2147483647, %v550
      %v1912 = vand.u32 %v1911, 8388607
      %v1913 = vor.u32 %v1912, 8388608
      %v1914 = vsub.s32 0, %v1913
      %v1915 = vadd.s32 %v1910, 1
      %vm1916 = vcmp.gt.s32.totalorder %v1915, 0
      %v1917 = vsel %vm1916, %v1915, 0
      %v1918 = vshrl.u32 %v1917, 5
      %v1919 = vand.u32 %v1917, 31
      %v1920 = vsub.s32 32, %v1919
      %v1921 = vshrl.u32 683565275, %v1920
      %v1922 = vshll.u32 683565275, %v1919
      %v1923 = vshrl.u32 2475754826, %v1920
      %v1924 = vor.u32 %v1922, %v1923
      %v1925 = vshll.u32 2475754826, %v1919
      %v1926 = vshrl.u32 2131351028, %v1920
      %v1927 = vor.u32 %v1925, %v1926
      %v1928 = vshll.u32 2131351028, %v1919
      %v1929 = vshrl.u32 2102212464, %v1920
      %v1930 = vor.u32 %v1928, %v1929
      %v1931 = vshll.u32 2102212464, %v1919
      %v1932 = vshrl.u32 920167782, %v1920
      %v1933 = vor.u32 %v1931, %v1932
      %v1934 = vshll.u32 920167782, %v1919
      %v1935 = vshrl.u32 1326507024, %v1920
      %v1936 = vor.u32 %v1934, %v1935
      %vm1937 = vcmp.lt.s32.totalorder %v1918, 1
      %vm1938 = vcmp.lt.s32.totalorder %v1918, 2
      %vm1939 = vcmp.lt.s32.totalorder %v1918, 3
      %vm1940 = vcmp.lt.s32.totalorder %v1918, 4
      %v1941 = vsel %vm1937, %v1921, %v1924
      %v1942 = vsel %vm1940, %v1930, 2102212464
      %v1943 = vsel %vm1939, %v1927, %v1942
      %v1944 = vsel %vm1938, %v1941, %v1943
      %v1945 = vsel %vm1937, %v1924, %v1927
      %v1946 = vsel %vm1940, %v1933, 920167782
      %v1947 = vsel %vm1939, %v1930, %v1946
      %v1948 = vsel %vm1938, %v1945, %v1947
      %v1949 = vsel %vm1937, %v1927, %v1930
      %v1950 = vsel %vm1940, %v1936, 1326507024
      %v1951 = vsel %vm1939, %v1933, %v1950
      %v1952 = vsel %vm1938, %v1949, %v1951
      %v1953 = vshll.u32 %v1913, 8
      %v1954 = vmul.u32.u64.compose %v1953, %v1952
      %v1955 = vextract.low.u32 %v1954
      %v1956 = vextract.high.u32 %v1954
      %v1957 = vmul.u32.u64.compose %v1953, %v1948
      %v1958 = vextract.low.u32 %v1957
      %v1959 = vextract.high.u32 %v1957
      %v1960 = vmul.u32 %v1953, %v1944
      %v1961 = vadd.s32 %v1956, %v1958
      %vm1962 = vc.u32 %v1956, %v1958
      %v1963 = vadd.s32 %v1959, 1
      %v1964 = vsel %vm1962, %v1963, %v1959
      %v1965 = vadd.s32 %v1960, %v1964
      %v1966 = vadd.s32 %v1965, 536870912
      %v1967 = vshrl.u32 %v1966, 30
      %v1968 = vshll.u32 %v1967, 30
      %v1969 = vsub.s32 %v1965, %v1968
      %vm1970 = vcmp.lt.s32.totalorder %v1969, 0
      %v1971 = vsub.s32 0, %v1969
      %v1972 = vsel %vm1970, %v1971, %v1969
      %v1973 = vclz %v1972
      %v1974 = vsub.s32 %v1973, 2
      %vm1975 = vcmp.gt.s32.totalorder 0, %v1974
      %v1976 = vsel %vm1975, 0, %v1974
      %v1977 = vsub.s32 32, %v1976
      %v1978 = vshll.u32 %v1969, %v1976
      %v1979 = vshrl.u32 %v1961, %v1977
      %v1980 = vor.u32 %v1978, %v1979
      %v1981 = vsub.s32 4294967266, %v1976
      %v1982 = vadd.s32 %v1981, 127
      %v1983 = vshll.u32 %v1982, 23
      %v1984 = vor.u32 4788187, %v1983
      %v1985 = vand.u32 2147483647, %v1984
      %v1987 = vcvt.s32.f32 %v1980
      %v1988 = vmul.f32 %v1987, %v1985
      %v1989 = vxor.u32 %v1988, 2147483648
      %v1990 = vsel %vm1907, %v1989, %v1988
      %v1991 = vsub.s32 4, %v1967
      %v1992 = vsel %vm1907, %v1991, %v1967
      %v1993 = vsel %vm1906, %v550, %v1990
      %v1994 = vsel %vm1906, 0, %v1992
      %v1995 = vcosq.f32.pop %v1993
      %v1996 = vsinq.f32.pop %v1993
      %vm1997 = vweird.f32 %v550
      %v1998 = vadd.s32 %v1994, 3
      %v1999 = vand.u32 %v1998, 3
      %vm2000 = vcmp.lt.s32.totalorder %v1999, 2
      %vm2001 = vcmp.eq.s32.totalorder %v1999, 0
      %v2002 = vxor.u32 %v1996, 2147483648
      %v2003 = vsel %vm2001, %v1995, %v2002
      %vm2004 = vcmp.eq.s32.totalorder %v1999, 2
      %v2005 = vxor.u32 %v1995, 2147483648
      %v2006 = vsel %vm2004, %v2005, %v1996
      %v2007 = vsel %vm2000, %v2003, %v2006
      %v2008 = vsel %vm1997, nan, %v2007
      %v2009 = vand.u32 2147483647, %v551
      %vm2010 = vcmp.le.f32.partialorder %v2009, 0.7853982
      %vm2011 = vcmp.lt.s32.totalorder %v551, 0
      %v2012 = vand.u32 %v551, 2139095040
      %v2013 = vshrl.u32 %v2012, 23
      %v2014 = vsub.s32 %v2013, 127
      %v2015 = vand.u32 2147483647, %v551
      %v2016 = vand.u32 %v2015, 8388607
      %v2017 = vor.u32 %v2016, 8388608
      %v2018 = vsub.s32 0, %v2017
      %v2019 = vadd.s32 %v2014, 1
      %vm2020 = vcmp.gt.s32.totalorder %v2019, 0
      %v2021 = vsel %vm2020, %v2019, 0
      %v2022 = vshrl.u32 %v2021, 5
      %v2023 = vand.u32 %v2021, 31
      %v2024 = vsub.s32 32, %v2023
      %v2025 = vshrl.u32 683565275, %v2024
      %v2026 = vshll.u32 683565275, %v2023
      %v2027 = vshrl.u32 2475754826, %v2024
      %v2028 = vor.u32 %v2026, %v2027
      %v2029 = vshll.u32 2475754826, %v2023
      %v2030 = vshrl.u32 2131351028, %v2024
      %v2031 = vor.u32 %v2029, %v2030
      %v2032 = vshll.u32 2131351028, %v2023
      %v2033 = vshrl.u32 2102212464, %v2024
      %v2034 = vor.u32 %v2032, %v2033
      %v2035 = vshll.u32 2102212464, %v2023
      %v2036 = vshrl.u32 920167782, %v2024
      %v2037 = vor.u32 %v2035, %v2036
      %v2038 = vshll.u32 920167782, %v2023
      %v2039 = vshrl.u32 1326507024, %v2024
      %v2040 = vor.u32 %v2038, %v2039
      %vm2041 = vcmp.lt.s32.totalorder %v2022, 1
      %vm2042 = vcmp.lt.s32.totalorder %v2022, 2
      %vm2043 = vcmp.lt.s32.totalorder %v2022, 3
      %vm2044 = vcmp.lt.s32.totalorder %v2022, 4
      %v2045 = vsel %vm2041, %v2025, %v2028
      %v2046 = vsel %vm2044, %v2034, 2102212464
      %v2047 = vsel %vm2043, %v2031, %v2046
      %v2048 = vsel %vm2042, %v2045, %v2047
      %v2049 = vsel %vm2041, %v2028, %v2031
      %v2050 = vsel %vm2044, %v2037, 920167782
      %v2051 = vsel %vm2043, %v2034, %v2050
      %v2052 = vsel %vm2042, %v2049, %v2051
      %v2053 = vsel %vm2041, %v2031, %v2034
      %v2054 = vsel %vm2044, %v2040, 1326507024
      %v2055 = vsel %vm2043, %v2037, %v2054
      %v2056 = vsel %vm2042, %v2053, %v2055
      %v2057 = vshll.u32 %v2017, 8
      %v2058 = vmul.u32.u64.compose %v2057, %v2056
      %v2059 = vextract.low.u32 %v2058
      %v2060 = vextract.high.u32 %v2058
      %v2061 = vmul.u32.u64.compose %v2057, %v2052
      %v2062 = vextract.low.u32 %v2061
      %v2063 = vextract.high.u32 %v2061
      %v2064 = vmul.u32 %v2057, %v2048
      %v2065 = vadd.s32 %v2060, %v2062
      %vm2066 = vc.u32 %v2060, %v2062
      %v2067 = vadd.s32 %v2063, 1
      %v2068 = vsel %vm2066, %v2067, %v2063
      %v2069 = vadd.s32 %v2064, %v2068
      %v2070 = vadd.s32 %v2069, 536870912
      %v2071 = vshrl.u32 %v2070, 30
      %v2072 = vshll.u32 %v2071, 30
      %v2073 = vsub.s32 %v2069, %v2072
      %vm2074 = vcmp.lt.s32.totalorder %v2073, 0
      %v2075 = vsub.s32 0, %v2073
      %v2076 = vsel %vm2074, %v2075, %v2073
      %v2077 = vclz %v2076
      %v2078 = vsub.s32 %v2077, 2
      %vm2079 = vcmp.gt.s32.totalorder 0, %v2078
      %v2080 = vsel %vm2079, 0, %v2078
      %v2081 = vsub.s32 32, %v2080
      %v2082 = vshll.u32 %v2073, %v2080
      %v2083 = vshrl.u32 %v2065, %v2081
      %v2084 = vor.u32 %v2082, %v2083
      %v2085 = vsub.s32 4294967266, %v2080
      %v2086 = vadd.s32 %v2085, 127
      %v2087 = vshll.u32 %v2086, 23
      %v2088 = vor.u32 4788187, %v2087
      %v2089 = vand.u32 2147483647, %v2088
      %v2091 = vcvt.s32.f32 %v2084
      %v2092 = vmul.f32 %v2091, %v2089
      %v2093 = vxor.u32 %v2092, 2147483648
      %v2094 = vsel %vm2011, %v2093, %v2092
      %v2095 = vsub.s32 4, %v2071
      %v2096 = vsel %vm2011, %v2095, %v2071
      %v2097 = vsel %vm2010, %v551, %v2094
      %v2098 = vsel %vm2010, 0, %v2096
      %v2099 = vcosq.f32.pop %v2097
      %v2100 = vsinq.f32.pop %v2097
      %vm2101 = vweird.f32 %v551
      %v2102 = vadd.s32 %v2098, 3
      %v2103 = vand.u32 %v2102, 3
      %vm2104 = vcmp.lt.s32.totalorder %v2103, 2
      %vm2105 = vcmp.eq.s32.totalorder %v2103, 0
      %v2106 = vxor.u32 %v2100, 2147483648
      %v2107 = vsel %vm2105, %v2099, %v2106
      %vm2108 = vcmp.eq.s32.totalorder %v2103, 2
      %v2109 = vxor.u32 %v2099, 2147483648
      %v2110 = vsel %vm2108, %v2109, %v2100
      %v2111 = vsel %vm2104, %v2107, %v2110
      %v2112 = vsel %vm2101, nan, %v2111
      %v2113 = vand.u32 2147483647, %v552
      %vm2114 = vcmp.le.f32.partialorder %v2113, 0.7853982
      %vm2115 = vcmp.lt.s32.totalorder %v552, 0
      %v2116 = vand.u32 %v552, 2139095040
      %v2117 = vshrl.u32 %v2116, 23
      %v2118 = vsub.s32 %v2117, 127
      %v2119 = vand.u32 2147483647, %v552
      %v2120 = vand.u32 %v2119, 8388607
      %v2121 = vor.u32 %v2120, 8388608
      %v2122 = vsub.s32 0, %v2121
      %v2123 = vadd.s32 %v2118, 1
      %vm2124 = vcmp.gt.s32.totalorder %v2123, 0
      %v2125 = vsel %vm2124, %v2123, 0
      %v2126 = vshrl.u32 %v2125, 5
      %v2127 = vand.u32 %v2125, 31
      %v2128 = vsub.s32 32, %v2127
      %v2129 = vshrl.u32 683565275, %v2128
      %v2130 = vshll.u32 683565275, %v2127
      %v2131 = vshrl.u32 2475754826, %v2128
      %v2132 = vor.u32 %v2130, %v2131
      %v2133 = vshll.u32 2475754826, %v2127
      %v2134 = vshrl.u32 2131351028, %v2128
      %v2135 = vor.u32 %v2133, %v2134
      %v2136 = vshll.u32 2131351028, %v2127
      %v2137 = vshrl.u32 2102212464, %v2128
      %v2138 = vor.u32 %v2136, %v2137
      %v2139 = vshll.u32 2102212464, %v2127
      %v2140 = vshrl.u32 920167782, %v2128
      %v2141 = vor.u32 %v2139, %v2140
      %v2142 = vshll.u32 920167782, %v2127
      %v2143 = vshrl.u32 1326507024, %v2128
      %v2144 = vor.u32 %v2142, %v2143
      %vm2145 = vcmp.lt.s32.totalorder %v2126, 1
      %vm2146 = vcmp.lt.s32.totalorder %v2126, 2
      %vm2147 = vcmp.lt.s32.totalorder %v2126, 3
      %vm2148 = vcmp.lt.s32.totalorder %v2126, 4
      %v2149 = vsel %vm2145, %v2129, %v2132
      %v2150 = vsel %vm2148, %v2138, 2102212464
      %v2151 = vsel %vm2147, %v2135, %v2150
      %v2152 = vsel %vm2146, %v2149, %v2151
      %v2153 = vsel %vm2145, %v2132, %v2135
      %v2154 = vsel %vm2148, %v2141, 920167782
      %v2155 = vsel %vm2147, %v2138, %v2154
      %v2156 = vsel %vm2146, %v2153, %v2155
      %v2157 = vsel %vm2145, %v2135, %v2138
      %v2158 = vsel %vm2148, %v2144, 1326507024
      %v2159 = vsel %vm2147, %v2141, %v2158
      %v2160 = vsel %vm2146, %v2157, %v2159
      %v2161 = vshll.u32 %v2121, 8
      %v2162 = vmul.u32.u64.compose %v2161, %v2160
      %v2163 = vextract.low.u32 %v2162
      %v2164 = vextract.high.u32 %v2162
      %v2165 = vmul.u32.u64.compose %v2161, %v2156
      %v2166 = vextract.low.u32 %v2165
      %v2167 = vextract.high.u32 %v2165
      %v2168 = vmul.u32 %v2161, %v2152
      %v2169 = vadd.s32 %v2164, %v2166
      %vm2170 = vc.u32 %v2164, %v2166
      %v2171 = vadd.s32 %v2167, 1
      %v2172 = vsel %vm2170, %v2171, %v2167
      %v2173 = vadd.s32 %v2168, %v2172
      %v2174 = vadd.s32 %v2173, 536870912
      %v2175 = vshrl.u32 %v2174, 30
      %v2176 = vshll.u32 %v2175, 30
      %v2177 = vsub.s32 %v2173, %v2176
      %vm2178 = vcmp.lt.s32.totalorder %v2177, 0
      %v2179 = vsub.s32 0, %v2177
      %v2180 = vsel %vm2178, %v2179, %v2177
      %v2181 = vclz %v2180
      %v2182 = vsub.s32 %v2181, 2
      %vm2183 = vcmp.gt.s32.totalorder 0, %v2182
      %v2184 = vsel %vm2183, 0, %v2182
      %v2185 = vsub.s32 32, %v2184
      %v2186 = vshll.u32 %v2177, %v2184
      %v2187 = vshrl.u32 %v2169, %v2185
      %v2188 = vor.u32 %v2186, %v2187
      %v2189 = vsub.s32 4294967266, %v2184
      %v2190 = vadd.s32 %v2189, 127
      %v2191 = vshll.u32 %v2190, 23
      %v2192 = vor.u32 4788187, %v2191
      %v2193 = vand.u32 2147483647, %v2192
      %v2195 = vcvt.s32.f32 %v2188
      %v2196 = vmul.f32 %v2195, %v2193
      %v2197 = vxor.u32 %v2196, 2147483648
      %v2198 = vsel %vm2115, %v2197, %v2196
      %v2199 = vsub.s32 4, %v2175
      %v2200 = vsel %vm2115, %v2199, %v2175
      %v2201 = vsel %vm2114, %v552, %v2198
      %v2202 = vsel %vm2114, 0, %v2200
      %v2203 = vcosq.f32.pop %v2201
      %v2204 = vsinq.f32.pop %v2201
      %vm2205 = vweird.f32 %v552
      %v2206 = vadd.s32 %v2202, 3
      %v2207 = vand.u32 %v2206, 3
      %vm2208 = vcmp.lt.s32.totalorder %v2207, 2
      %vm2209 = vcmp.eq.s32.totalorder %v2207, 0
      %v2210 = vxor.u32 %v2204, 2147483648
      %v2211 = vsel %vm2209, %v2203, %v2210
      %vm2212 = vcmp.eq.s32.totalorder %v2207, 2
      %v2213 = vxor.u32 %v2203, 2147483648
      %v2214 = vsel %vm2212, %v2213, %v2204
      %v2215 = vsel %vm2208, %v2211, %v2214
      %v2216 = vsel %vm2205, nan, %v2215
      %v2217 = vtanh.pop %v656
      %v2218 = vtanh.pop %v760
      %v2219 = vtanh.pop %v864
      %v2220 = vtanh.pop %v968
      %v2221 = vtanh.pop %v1072
      %v2222 = vtanh.pop %v1176
      %v2223 = vtanh.pop %v1280
      %v2224 = vtanh.pop %v1384
      %v2225 = vtanh.pop %v1488
      %v2226 = vtanh.pop %v1592
      %v2227 = vtanh.pop %v1696
      %v2228 = vtanh.pop %v1800
      %v2229 = vtanh.pop %v1904
      %v2230 = vtanh.pop %v2008
      %v2231 = vtanh.pop %v2112
      %v2232 = vtanh.pop %v2216
      %v2233 = vand.u32 2147483647, %v537
      %vm2234 = vcmp.le.f32.partialorder %v2233, 0.7853982
      %vm2235 = vcmp.lt.s32.totalorder %v537, 0
      %v2236 = vand.u32 %v537, 2139095040
      %v2237 = vshrl.u32 %v2236, 23
      %v2238 = vsub.s32 %v2237, 127
      %v2239 = vand.u32 2147483647, %v537
      %v2240 = vand.u32 %v2239, 8388607
      %v2241 = vor.u32 %v2240, 8388608
      %v2242 = vsub.s32 0, %v2241
      %v2243 = vadd.s32 %v2238, 1
      %vm2244 = vcmp.gt.s32.totalorder %v2243, 0
      %v2245 = vsel %vm2244, %v2243, 0
      %v2246 = vshrl.u32 %v2245, 5
      %v2247 = vand.u32 %v2245, 31
      %v2248 = vsub.s32 32, %v2247
      %v2249 = vshrl.u32 683565275, %v2248
      %v2250 = vshll.u32 683565275, %v2247
      %v2251 = vshrl.u32 2475754826, %v2248
      %v2252 = vor.u32 %v2250, %v2251
      %v2253 = vshll.u32 2475754826, %v2247
      %v2254 = vshrl.u32 2131351028, %v2248
      %v2255 = vor.u32 %v2253, %v2254
      %v2256 = vshll.u32 2131351028, %v2247
      %v2257 = vshrl.u32 2102212464, %v2248
      %v2258 = vor.u32 %v2256, %v2257
      %v2259 = vshll.u32 2102212464, %v2247
      %v2260 = vshrl.u32 920167782, %v2248
      %v2261 = vor.u32 %v2259, %v2260
      %v2262 = vshll.u32 920167782, %v2247
      %v2263 = vshrl.u32 1326507024, %v2248
      %v2264 = vor.u32 %v2262, %v2263
      %vm2265 = vcmp.lt.s32.totalorder %v2246, 1
      %vm2266 = vcmp.lt.s32.totalorder %v2246, 2
      %vm2267 = vcmp.lt.s32.totalorder %v2246, 3
      %vm2268 = vcmp.lt.s32.totalorder %v2246, 4
      %v2269 = vsel %vm2265, %v2249, %v2252
      %v2270 = vsel %vm2268, %v2258, 2102212464
      %v2271 = vsel %vm2267, %v2255, %v2270
      %v2272 = vsel %vm2266, %v2269, %v2271
      %v2273 = vsel %vm2265, %v2252, %v2255
      %v2274 = vsel %vm2268, %v2261, 920167782
      %v2275 = vsel %vm2267, %v2258, %v2274
      %v2276 = vsel %vm2266, %v2273, %v2275
      %v2277 = vsel %vm2265, %v2255, %v2258
      %v2278 = vsel %vm2268, %v2264, 1326507024
      %v2279 = vsel %vm2267, %v2261, %v2278
      %v2280 = vsel %vm2266, %v2277, %v2279
      %v2281 = vshll.u32 %v2241, 8
      %v2282 = vmul.u32.u64.compose %v2281, %v2280
      %v2283 = vextract.low.u32 %v2282
      %v2284 = vextract.high.u32 %v2282
      %v2285 = vmul.u32.u64.compose %v2281, %v2276
      %v2286 = vextract.low.u32 %v2285
      %v2287 = vextract.high.u32 %v2285
      %v2288 = vmul.u32 %v2281, %v2272
      %v2289 = vadd.s32 %v2284, %v2286
      %vm2290 = vc.u32 %v2284, %v2286
      %v2291 = vadd.s32 %v2287, 1
      %v2292 = vsel %vm2290, %v2291, %v2287
      %v2293 = vadd.s32 %v2288, %v2292
      %v2294 = vadd.s32 %v2293, 536870912
      %v2295 = vshrl.u32 %v2294, 30
      %v2296 = vshll.u32 %v2295, 30
      %v2297 = vsub.s32 %v2293, %v2296
      %vm2298 = vcmp.lt.s32.totalorder %v2297, 0
      %v2299 = vsub.s32 0, %v2297
      %v2300 = vsel %vm2298, %v2299, %v2297
      %v2301 = vclz %v2300
      %v2302 = vsub.s32 %v2301, 2
      %vm2303 = vcmp.gt.s32.totalorder 0, %v2302
      %v2304 = vsel %vm2303, 0, %v2302
      %v2305 = vsub.s32 32, %v2304
      %v2306 = vshll.u32 %v2297, %v2304
      %v2307 = vshrl.u32 %v2289, %v2305
      %v2308 = vor.u32 %v2306, %v2307
      %v2309 = vsub.s32 4294967266, %v2304
      %v2310 = vadd.s32 %v2309, 127
      %v2311 = vshll.u32 %v2310, 23
      %v2312 = vor.u32 4788187, %v2311
      %v2313 = vand.u32 2147483647, %v2312
      %v2315 = vcvt.s32.f32 %v2308
      %v2316 = vmul.f32 %v2315, %v2313
      %v2317 = vxor.u32 %v2316, 2147483648
      %v2318 = vsel %vm2235, %v2317, %v2316
      %v2319 = vsub.s32 4, %v2295
      %v2320 = vsel %vm2235, %v2319, %v2295
      %v2321 = vsel %vm2234, %v537, %v2318
      %v2322 = vsel %vm2234, 0, %v2320
      %v2323 = vcosq.f32.pop %v2321
      %v2324 = vsinq.f32.pop %v2321
      %vm2325 = vweird.f32 %v537
      %v2326 = vand.u32 %v2322, 3
      %vm2327 = vcmp.lt.s32.totalorder %v2326, 2
      %vm2328 = vcmp.eq.s32.totalorder %v2326, 0
      %v2329 = vxor.u32 %v2324, 2147483648
      %v2330 = vsel %vm2328, %v2323, %v2329
      %vm2331 = vcmp.eq.s32.totalorder %v2326, 2
      %v2332 = vxor.u32 %v2323, 2147483648
      %v2333 = vsel %vm2331, %v2332, %v2324
      %v2334 = vsel %vm2327, %v2330, %v2333
      %v2335 = vsel %vm2325, nan, %v2334
      %v2336 = vand.u32 2147483647, %v538
      %vm2337 = vcmp.le.f32.partialorder %v2336, 0.7853982
      %vm2338 = vcmp.lt.s32.totalorder %v538, 0
      %v2339 = vand.u32 %v538, 2139095040
      %v2340 = vshrl.u32 %v2339, 23
      %v2341 = vsub.s32 %v2340, 127
      %v2342 = vand.u32 2147483647, %v538
      %v2343 = vand.u32 %v2342, 8388607
      %v2344 = vor.u32 %v2343, 8388608
      %v2345 = vsub.s32 0, %v2344
      %v2346 = vadd.s32 %v2341, 1
      %vm2347 = vcmp.gt.s32.totalorder %v2346, 0
      %v2348 = vsel %vm2347, %v2346, 0
      %v2349 = vshrl.u32 %v2348, 5
      %v2350 = vand.u32 %v2348, 31
      %v2351 = vsub.s32 32, %v2350
      %v2352 = vshrl.u32 683565275, %v2351
      %v2353 = vshll.u32 683565275, %v2350
      %v2354 = vshrl.u32 2475754826, %v2351
      %v2355 = vor.u32 %v2353, %v2354
      %v2356 = vshll.u32 2475754826, %v2350
      %v2357 = vshrl.u32 2131351028, %v2351
      %v2358 = vor.u32 %v2356, %v2357
      %v2359 = vshll.u32 2131351028, %v2350
      %v2360 = vshrl.u32 2102212464, %v2351
      %v2361 = vor.u32 %v2359, %v2360
      %v2362 = vshll.u32 2102212464, %v2350
      %v2363 = vshrl.u32 920167782, %v2351
      %v2364 = vor.u32 %v2362, %v2363
      %v2365 = vshll.u32 920167782, %v2350
      %v2366 = vshrl.u32 1326507024, %v2351
      %v2367 = vor.u32 %v2365, %v2366
      %vm2368 = vcmp.lt.s32.totalorder %v2349, 1
      %vm2369 = vcmp.lt.s32.totalorder %v2349, 2
      %vm2370 = vcmp.lt.s32.totalorder %v2349, 3
      %vm2371 = vcmp.lt.s32.totalorder %v2349, 4
      %v2372 = vsel %vm2368, %v2352, %v2355
      %v2373 = vsel %vm2371, %v2361, 2102212464
      %v2374 = vsel %vm2370, %v2358, %v2373
      %v2375 = vsel %vm2369, %v2372, %v2374
      %v2376 = vsel %vm2368, %v2355, %v2358
      %v2377 = vsel %vm2371, %v2364, 920167782
      %v2378 = vsel %vm2370, %v2361, %v2377
      %v2379 = vsel %vm2369, %v2376, %v2378
      %v2380 = vsel %vm2368, %v2358, %v2361
      %v2381 = vsel %vm2371, %v2367, 1326507024
      %v2382 = vsel %vm2370, %v2364, %v2381
      %v2383 = vsel %vm2369, %v2380, %v2382
      %v2384 = vshll.u32 %v2344, 8
      %v2385 = vmul.u32.u64.compose %v2384, %v2383
      %v2386 = vextract.low.u32 %v2385
      %v2387 = vextract.high.u32 %v2385
      %v2388 = vmul.u32.u64.compose %v2384, %v2379
      %v2389 = vextract.low.u32 %v2388
      %v2390 = vextract.high.u32 %v2388
      %v2391 = vmul.u32 %v2384, %v2375
      %v2392 = vadd.s32 %v2387, %v2389
      %vm2393 = vc.u32 %v2387, %v2389
      %v2394 = vadd.s32 %v2390, 1
      %v2395 = vsel %vm2393, %v2394, %v2390
      %v2396 = vadd.s32 %v2391, %v2395
      %v2397 = vadd.s32 %v2396, 536870912
      %v2398 = vshrl.u32 %v2397, 30
      %v2399 = vshll.u32 %v2398, 30
      %v2400 = vsub.s32 %v2396, %v2399
      %vm2401 = vcmp.lt.s32.totalorder %v2400, 0
      %v2402 = vsub.s32 0, %v2400
      %v2403 = vsel %vm2401, %v2402, %v2400
      %v2404 = vclz %v2403
      %v2405 = vsub.s32 %v2404, 2
      %vm2406 = vcmp.gt.s32.totalorder 0, %v2405
      %v2407 = vsel %vm2406, 0, %v2405
      %v2408 = vsub.s32 32, %v2407
      %v2409 = vshll.u32 %v2400, %v2407
      %v2410 = vshrl.u32 %v2392, %v2408
      %v2411 = vor.u32 %v2409, %v2410
      %v2412 = vsub.s32 4294967266, %v2407
      %v2413 = vadd.s32 %v2412, 127
      %v2414 = vshll.u32 %v2413, 23
      %v2415 = vor.u32 4788187, %v2414
      %v2416 = vand.u32 2147483647, %v2415
      %v2418 = vcvt.s32.f32 %v2411
      %v2419 = vmul.f32 %v2418, %v2416
      %v2420 = vxor.u32 %v2419, 2147483648
      %v2421 = vsel %vm2338, %v2420, %v2419
      %v2422 = vsub.s32 4, %v2398
      %v2423 = vsel %vm2338, %v2422, %v2398
      %v2424 = vsel %vm2337, %v538, %v2421
      %v2425 = vsel %vm2337, 0, %v2423
      %v2426 = vcosq.f32.pop %v2424
      %v2427 = vsinq.f32.pop %v2424
      %vm2428 = vweird.f32 %v538
      %v2429 = vand.u32 %v2425, 3
      %vm2430 = vcmp.lt.s32.totalorder %v2429, 2
      %vm2431 = vcmp.eq.s32.totalorder %v2429, 0
      %v2432 = vxor.u32 %v2427, 2147483648
      %v2433 = vsel %vm2431, %v2426, %v2432
      %vm2434 = vcmp.eq.s32.totalorder %v2429, 2
      %v2435 = vxor.u32 %v2426, 2147483648
      %v2436 = vsel %vm2434, %v2435, %v2427
      %v2437 = vsel %vm2430, %v2433, %v2436
      %v2438 = vsel %vm2428, nan, %v2437
      %v2439 = vand.u32 2147483647, %v539
      %vm2440 = vcmp.le.f32.partialorder %v2439, 0.7853982
      %vm2441 = vcmp.lt.s32.totalorder %v539, 0
      %v2442 = vand.u32 %v539, 2139095040
      %v2443 = vshrl.u32 %v2442, 23
      %v2444 = vsub.s32 %v2443, 127
      %v2445 = vand.u32 2147483647, %v539
      %v2446 = vand.u32 %v2445, 8388607
      %v2447 = vor.u32 %v2446, 8388608
      %v2448 = vsub.s32 0, %v2447
      %v2449 = vadd.s32 %v2444, 1
      %vm2450 = vcmp.gt.s32.totalorder %v2449, 0
      %v2451 = vsel %vm2450, %v2449, 0
      %v2452 = vshrl.u32 %v2451, 5
      %v2453 = vand.u32 %v2451, 31
      %v2454 = vsub.s32 32, %v2453
      %v2455 = vshrl.u32 683565275, %v2454
      %v2456 = vshll.u32 683565275, %v2453
      %v2457 = vshrl.u32 2475754826, %v2454
      %v2458 = vor.u32 %v2456, %v2457
      %v2459 = vshll.u32 2475754826, %v2453
      %v2460 = vshrl.u32 2131351028, %v2454
      %v2461 = vor.u32 %v2459, %v2460
      %v2462 = vshll.u32 2131351028, %v2453
      %v2463 = vshrl.u32 2102212464, %v2454
      %v2464 = vor.u32 %v2462, %v2463
      %v2465 = vshll.u32 2102212464, %v2453
      %v2466 = vshrl.u32 920167782, %v2454
      %v2467 = vor.u32 %v2465, %v2466
      %v2468 = vshll.u32 920167782, %v2453
      %v2469 = vshrl.u32 1326507024, %v2454
      %v2470 = vor.u32 %v2468, %v2469
      %vm2471 = vcmp.lt.s32.totalorder %v2452, 1
      %vm2472 = vcmp.lt.s32.totalorder %v2452, 2
      %vm2473 = vcmp.lt.s32.totalorder %v2452, 3
      %vm2474 = vcmp.lt.s32.totalorder %v2452, 4
      %v2475 = vsel %vm2471, %v2455, %v2458
      %v2476 = vsel %vm2474, %v2464, 2102212464
      %v2477 = vsel %vm2473, %v2461, %v2476
      %v2478 = vsel %vm2472, %v2475, %v2477
      %v2479 = vsel %vm2471, %v2458, %v2461
      %v2480 = vsel %vm2474, %v2467, 920167782
      %v2481 = vsel %vm2473, %v2464, %v2480
      %v2482 = vsel %vm2472, %v2479, %v2481
      %v2483 = vsel %vm2471, %v2461, %v2464
      %v2484 = vsel %vm2474, %v2470, 1326507024
      %v2485 = vsel %vm2473, %v2467, %v2484
      %v2486 = vsel %vm2472, %v2483, %v2485
      %v2487 = vshll.u32 %v2447, 8
      %v2488 = vmul.u32.u64.compose %v2487, %v2486
      %v2489 = vextract.low.u32 %v2488
      %v2490 = vextract.high.u32 %v2488
      %v2491 = vmul.u32.u64.compose %v2487, %v2482
      %v2492 = vextract.low.u32 %v2491
      %v2493 = vextract.high.u32 %v2491
      %v2494 = vmul.u32 %v2487, %v2478
      %v2495 = vadd.s32 %v2490, %v2492
      %vm2496 = vc.u32 %v2490, %v2492
      %v2497 = vadd.s32 %v2493, 1
      %v2498 = vsel %vm2496, %v2497, %v2493
      %v2499 = vadd.s32 %v2494, %v2498
      %v2500 = vadd.s32 %v2499, 536870912
      %v2501 = vshrl.u32 %v2500, 30
      %v2502 = vshll.u32 %v2501, 30
      %v2503 = vsub.s32 %v2499, %v2502
      %vm2504 = vcmp.lt.s32.totalorder %v2503, 0
      %v2505 = vsub.s32 0, %v2503
      %v2506 = vsel %vm2504, %v2505, %v2503
      %v2507 = vclz %v2506
      %v2508 = vsub.s32 %v2507, 2
      %vm2509 = vcmp.gt.s32.totalorder 0, %v2508
      %v2510 = vsel %vm2509, 0, %v2508
      %v2511 = vsub.s32 32, %v2510
      %v2512 = vshll.u32 %v2503, %v2510
      %v2513 = vshrl.u32 %v2495, %v2511
      %v2514 = vor.u32 %v2512, %v2513
      %v2515 = vsub.s32 4294967266, %v2510
      %v2516 = vadd.s32 %v2515, 127
      %v2517 = vshll.u32 %v2516, 23
      %v2518 = vor.u32 4788187, %v2517
      %v2519 = vand.u32 2147483647, %v2518
      %v2521 = vcvt.s32.f32 %v2514
      %v2522 = vmul.f32 %v2521, %v2519
      %v2523 = vxor.u32 %v2522, 2147483648
      %v2524 = vsel %vm2441, %v2523, %v2522
      %v2525 = vsub.s32 4, %v2501
      %v2526 = vsel %vm2441, %v2525, %v2501
      %v2527 = vsel %vm2440, %v539, %v2524
      %v2528 = vsel %vm2440, 0, %v2526
      %v2529 = vcosq.f32.pop %v2527
      %v2530 = vsinq.f32.pop %v2527
      %vm2531 = vweird.f32 %v539
      %v2532 = vand.u32 %v2528, 3
      %vm2533 = vcmp.lt.s32.totalorder %v2532, 2
      %vm2534 = vcmp.eq.s32.totalorder %v2532, 0
      %v2535 = vxor.u32 %v2530, 2147483648
      %v2536 = vsel %vm2534, %v2529, %v2535
      %vm2537 = vcmp.eq.s32.totalorder %v2532, 2
      %v2538 = vxor.u32 %v2529, 2147483648
      %v2539 = vsel %vm2537, %v2538, %v2530
      %v2540 = vsel %vm2533, %v2536, %v2539
      %v2541 = vsel %vm2531, nan, %v2540
      %v2542 = vand.u32 2147483647, %v540
      %vm2543 = vcmp.le.f32.partialorder %v2542, 0.7853982
      %vm2544 = vcmp.lt.s32.totalorder %v540, 0
      %v2545 = vand.u32 %v540, 2139095040
      %v2546 = vshrl.u32 %v2545, 23
      %v2547 = vsub.s32 %v2546, 127
      %v2548 = vand.u32 2147483647, %v540
      %v2549 = vand.u32 %v2548, 8388607
      %v2550 = vor.u32 %v2549, 8388608
      %v2551 = vsub.s32 0, %v2550
      %v2552 = vadd.s32 %v2547, 1
      %vm2553 = vcmp.gt.s32.totalorder %v2552, 0
      %v2554 = vsel %vm2553, %v2552, 0
      %v2555 = vshrl.u32 %v2554, 5
      %v2556 = vand.u32 %v2554, 31
      %v2557 = vsub.s32 32, %v2556
      %v2558 = vshrl.u32 683565275, %v2557
      %v2559 = vshll.u32 683565275, %v2556
      %v2560 = vshrl.u32 2475754826, %v2557
      %v2561 = vor.u32 %v2559, %v2560
      %v2562 = vshll.u32 2475754826, %v2556
      %v2563 = vshrl.u32 2131351028, %v2557
      %v2564 = vor.u32 %v2562, %v2563
      %v2565 = vshll.u32 2131351028, %v2556
      %v2566 = vshrl.u32 2102212464, %v2557
      %v2567 = vor.u32 %v2565, %v2566
      %v2568 = vshll.u32 2102212464, %v2556
      %v2569 = vshrl.u32 920167782, %v2557
      %v2570 = vor.u32 %v2568, %v2569
      %v2571 = vshll.u32 920167782, %v2556
      %v2572 = vshrl.u32 1326507024, %v2557
      %v2573 = vor.u32 %v2571, %v2572
      %vm2574 = vcmp.lt.s32.totalorder %v2555, 1
      %vm2575 = vcmp.lt.s32.totalorder %v2555, 2
      %vm2576 = vcmp.lt.s32.totalorder %v2555, 3
      %vm2577 = vcmp.lt.s32.totalorder %v2555, 4
      %v2578 = vsel %vm2574, %v2558, %v2561
      %v2579 = vsel %vm2577, %v2567, 2102212464
      %v2580 = vsel %vm2576, %v2564, %v2579
      %v2581 = vsel %vm2575, %v2578, %v2580
      %v2582 = vsel %vm2574, %v2561, %v2564
      %v2583 = vsel %vm2577, %v2570, 920167782
      %v2584 = vsel %vm2576, %v2567, %v2583
      %v2585 = vsel %vm2575, %v2582, %v2584
      %v2586 = vsel %vm2574, %v2564, %v2567
      %v2587 = vsel %vm2577, %v2573, 1326507024
      %v2588 = vsel %vm2576, %v2570, %v2587
      %v2589 = vsel %vm2575, %v2586, %v2588
      %v2590 = vshll.u32 %v2550, 8
      %v2591 = vmul.u32.u64.compose %v2590, %v2589
      %v2592 = vextract.low.u32 %v2591
      %v2593 = vextract.high.u32 %v2591
      %v2594 = vmul.u32.u64.compose %v2590, %v2585
      %v2595 = vextract.low.u32 %v2594
      %v2596 = vextract.high.u32 %v2594
      %v2597 = vmul.u32 %v2590, %v2581
      %v2598 = vadd.s32 %v2593, %v2595
      %vm2599 = vc.u32 %v2593, %v2595
      %v2600 = vadd.s32 %v2596, 1
      %v2601 = vsel %vm2599, %v2600, %v2596
      %v2602 = vadd.s32 %v2597, %v2601
      %v2603 = vadd.s32 %v2602, 536870912
      %v2604 = vshrl.u32 %v2603, 30
      %v2605 = vshll.u32 %v2604, 30
      %v2606 = vsub.s32 %v2602, %v2605
      %vm2607 = vcmp.lt.s32.totalorder %v2606, 0
      %v2608 = vsub.s32 0, %v2606
      %v2609 = vsel %vm2607, %v2608, %v2606
      %v2610 = vclz %v2609
      %v2611 = vsub.s32 %v2610, 2
      %vm2612 = vcmp.gt.s32.totalorder 0, %v2611
      %v2613 = vsel %vm2612, 0, %v2611
      %v2614 = vsub.s32 32, %v2613
      %v2615 = vshll.u32 %v2606, %v2613
      %v2616 = vshrl.u32 %v2598, %v2614
      %v2617 = vor.u32 %v2615, %v2616
      %v2618 = vsub.s32 4294967266, %v2613
      %v2619 = vadd.s32 %v2618, 127
      %v2620 = vshll.u32 %v2619, 23
      %v2621 = vor.u32 4788187, %v2620
      %v2622 = vand.u32 2147483647, %v2621
      %v2624 = vcvt.s32.f32 %v2617
      %v2625 = vmul.f32 %v2624, %v2622
      %v2626 = vxor.u32 %v2625, 2147483648
      %v2627 = vsel %vm2544, %v2626, %v2625
      %v2628 = vsub.s32 4, %v2604
      %v2629 = vsel %vm2544, %v2628, %v2604
      %v2630 = vsel %vm2543, %v540, %v2627
      %v2631 = vsel %vm2543, 0, %v2629
      %v2632 = vcosq.f32.pop %v2630
      %v2633 = vsinq.f32.pop %v2630
      %vm2634 = vweird.f32 %v540
      %v2635 = vand.u32 %v2631, 3
      %vm2636 = vcmp.lt.s32.totalorder %v2635, 2
      %vm2637 = vcmp.eq.s32.totalorder %v2635, 0
      %v2638 = vxor.u32 %v2633, 2147483648
      %v2639 = vsel %vm2637, %v2632, %v2638
      %vm2640 = vcmp.eq.s32.totalorder %v2635, 2
      %v2641 = vxor.u32 %v2632, 2147483648
      %v2642 = vsel %vm2640, %v2641, %v2633
      %v2643 = vsel %vm2636, %v2639, %v2642
      %v2644 = vsel %vm2634, nan, %v2643
      %v2645 = vand.u32 2147483647, %v541
      %vm2646 = vcmp.le.f32.partialorder %v2645, 0.7853982
      %vm2647 = vcmp.lt.s32.totalorder %v541, 0
      %v2648 = vand.u32 %v541, 2139095040
      %v2649 = vshrl.u32 %v2648, 23
      %v2650 = vsub.s32 %v2649, 127
      %v2651 = vand.u32 2147483647, %v541
      %v2652 = vand.u32 %v2651, 8388607
      %v2653 = vor.u32 %v2652, 8388608
      %v2654 = vsub.s32 0, %v2653
      %v2655 = vadd.s32 %v2650, 1
      %vm2656 = vcmp.gt.s32.totalorder %v2655, 0
      %v2657 = vsel %vm2656, %v2655, 0
      %v2658 = vshrl.u32 %v2657, 5
      %v2659 = vand.u32 %v2657, 31
      %v2660 = vsub.s32 32, %v2659
      %v2661 = vshrl.u32 683565275, %v2660
      %v2662 = vshll.u32 683565275, %v2659
      %v2663 = vshrl.u32 2475754826, %v2660
      %v2664 = vor.u32 %v2662, %v2663
      %v2665 = vshll.u32 2475754826, %v2659
      %v2666 = vshrl.u32 2131351028, %v2660
      %v2667 = vor.u32 %v2665, %v2666
      %v2668 = vshll.u32 2131351028, %v2659
      %v2669 = vshrl.u32 2102212464, %v2660
      %v2670 = vor.u32 %v2668, %v2669
      %v2671 = vshll.u32 2102212464, %v2659
      %v2672 = vshrl.u32 920167782, %v2660
      %v2673 = vor.u32 %v2671, %v2672
      %v2674 = vshll.u32 920167782, %v2659
      %v2675 = vshrl.u32 1326507024, %v2660
      %v2676 = vor.u32 %v2674, %v2675
      %vm2677 = vcmp.lt.s32.totalorder %v2658, 1
      %vm2678 = vcmp.lt.s32.totalorder %v2658, 2
      %vm2679 = vcmp.lt.s32.totalorder %v2658, 3
      %vm2680 = vcmp.lt.s32.totalorder %v2658, 4
      %v2681 = vsel %vm2677, %v2661, %v2664
      %v2682 = vsel %vm2680, %v2670, 2102212464
      %v2683 = vsel %vm2679, %v2667, %v2682
      %v2684 = vsel %vm2678, %v2681, %v2683
      %v2685 = vsel %vm2677, %v2664, %v2667
      %v2686 = vsel %vm2680, %v2673, 920167782
      %v2687 = vsel %vm2679, %v2670, %v2686
      %v2688 = vsel %vm2678, %v2685, %v2687
      %v2689 = vsel %vm2677, %v2667, %v2670
      %v2690 = vsel %vm2680, %v2676, 1326507024
      %v2691 = vsel %vm2679, %v2673, %v2690
      %v2692 = vsel %vm2678, %v2689, %v2691
      %v2693 = vshll.u32 %v2653, 8
      %v2694 = vmul.u32.u64.compose %v2693, %v2692
      %v2695 = vextract.low.u32 %v2694
      %v2696 = vextract.high.u32 %v2694
      %v2697 = vmul.u32.u64.compose %v2693, %v2688
      %v2698 = vextract.low.u32 %v2697
      %v2699 = vextract.high.u32 %v2697
      %v2700 = vmul.u32 %v2693, %v2684
      %v2701 = vadd.s32 %v2696, %v2698
      %vm2702 = vc.u32 %v2696, %v2698
      %v2703 = vadd.s32 %v2699, 1
      %v2704 = vsel %vm2702, %v2703, %v2699
      %v2705 = vadd.s32 %v2700, %v2704
      %v2706 = vadd.s32 %v2705, 536870912
      %v2707 = vshrl.u32 %v2706, 30
      %v2708 = vshll.u32 %v2707, 30
      %v2709 = vsub.s32 %v2705, %v2708
      %vm2710 = vcmp.lt.s32.totalorder %v2709, 0
      %v2711 = vsub.s32 0, %v2709
      %v2712 = vsel %vm2710, %v2711, %v2709
      %v2713 = vclz %v2712
      %v2714 = vsub.s32 %v2713, 2
      %vm2715 = vcmp.gt.s32.totalorder 0, %v2714
      %v2716 = vsel %vm2715, 0, %v2714
      %v2717 = vsub.s32 32, %v2716
      %v2718 = vshll.u32 %v2709, %v2716
      %v2719 = vshrl.u32 %v2701, %v2717
      %v2720 = vor.u32 %v2718, %v2719
      %v2721 = vsub.s32 4294967266, %v2716
      %v2722 = vadd.s32 %v2721, 127
      %v2723 = vshll.u32 %v2722, 23
      %v2724 = vor.u32 4788187, %v2723
      %v2725 = vand.u32 2147483647, %v2724
      %v2727 = vcvt.s32.f32 %v2720
      %v2728 = vmul.f32 %v2727, %v2725
      %v2729 = vxor.u32 %v2728, 2147483648
      %v2730 = vsel %vm2647, %v2729, %v2728
      %v2731 = vsub.s32 4, %v2707
      %v2732 = vsel %vm2647, %v2731, %v2707
      %v2733 = vsel %vm2646, %v541, %v2730
      %v2734 = vsel %vm2646, 0, %v2732
      %v2735 = vcosq.f32.pop %v2733
      %v2736 = vsinq.f32.pop %v2733
      %vm2737 = vweird.f32 %v541
      %v2738 = vand.u32 %v2734, 3
      %vm2739 = vcmp.lt.s32.totalorder %v2738, 2
      %vm2740 = vcmp.eq.s32.totalorder %v2738, 0
      %v2741 = vxor.u32 %v2736, 2147483648
      %v2742 = vsel %vm2740, %v2735, %v2741
      %vm2743 = vcmp.eq.s32.totalorder %v2738, 2
      %v2744 = vxor.u32 %v2735, 2147483648
      %v2745 = vsel %vm2743, %v2744, %v2736
      %v2746 = vsel %vm2739, %v2742, %v2745
      %v2747 = vsel %vm2737, nan, %v2746
      %v2748 = vand.u32 2147483647, %v542
      %vm2749 = vcmp.le.f32.partialorder %v2748, 0.7853982
      %vm2750 = vcmp.lt.s32.totalorder %v542, 0
      %v2751 = vand.u32 %v542, 2139095040
      %v2752 = vshrl.u32 %v2751, 23
      %v2753 = vsub.s32 %v2752, 127
      %v2754 = vand.u32 2147483647, %v542
      %v2755 = vand.u32 %v2754, 8388607
      %v2756 = vor.u32 %v2755, 8388608
      %v2757 = vsub.s32 0, %v2756
      %v2758 = vadd.s32 %v2753, 1
      %vm2759 = vcmp.gt.s32.totalorder %v2758, 0
      %v2760 = vsel %vm2759, %v2758, 0
      %v2761 = vshrl.u32 %v2760, 5
      %v2762 = vand.u32 %v2760, 31
      %v2763 = vsub.s32 32, %v2762
      %v2764 = vshrl.u32 683565275, %v2763
      %v2765 = vshll.u32 683565275, %v2762
      %v2766 = vshrl.u32 2475754826, %v2763
      %v2767 = vor.u32 %v2765, %v2766
      %v2768 = vshll.u32 2475754826, %v2762
      %v2769 = vshrl.u32 2131351028, %v2763
      %v2770 = vor.u32 %v2768, %v2769
      %v2771 = vshll.u32 2131351028, %v2762
      %v2772 = vshrl.u32 2102212464, %v2763
      %v2773 = vor.u32 %v2771, %v2772
      %v2774 = vshll.u32 2102212464, %v2762
      %v2775 = vshrl.u32 920167782, %v2763
      %v2776 = vor.u32 %v2774, %v2775
      %v2777 = vshll.u32 920167782, %v2762
      %v2778 = vshrl.u32 1326507024, %v2763
      %v2779 = vor.u32 %v2777, %v2778
      %vm2780 = vcmp.lt.s32.totalorder %v2761, 1
      %vm2781 = vcmp.lt.s32.totalorder %v2761, 2
      %vm2782 = vcmp.lt.s32.totalorder %v2761, 3
      %vm2783 = vcmp.lt.s32.totalorder %v2761, 4
      %v2784 = vsel %vm2780, %v2764, %v2767
      %v2785 = vsel %vm2783, %v2773, 2102212464
      %v2786 = vsel %vm2782, %v2770, %v2785
      %v2787 = vsel %vm2781, %v2784, %v2786
      %v2788 = vsel %vm2780, %v2767, %v2770
      %v2789 = vsel %vm2783, %v2776, 920167782
      %v2790 = vsel %vm2782, %v2773, %v2789
      %v2791 = vsel %vm2781, %v2788, %v2790
      %v2792 = vsel %vm2780, %v2770, %v2773
      %v2793 = vsel %vm2783, %v2779, 1326507024
      %v2794 = vsel %vm2782, %v2776, %v2793
      %v2795 = vsel %vm2781, %v2792, %v2794
      %v2796 = vshll.u32 %v2756, 8
      %v2797 = vmul.u32.u64.compose %v2796, %v2795
      %v2798 = vextract.low.u32 %v2797
      %v2799 = vextract.high.u32 %v2797
      %v2800 = vmul.u32.u64.compose %v2796, %v2791
      %v2801 = vextract.low.u32 %v2800
      %v2802 = vextract.high.u32 %v2800
      %v2803 = vmul.u32 %v2796, %v2787
      %v2804 = vadd.s32 %v2799, %v2801
      %vm2805 = vc.u32 %v2799, %v2801
      %v2806 = vadd.s32 %v2802, 1
      %v2807 = vsel %vm2805, %v2806, %v2802
      %v2808 = vadd.s32 %v2803, %v2807
      %v2809 = vadd.s32 %v2808, 536870912
      %v2810 = vshrl.u32 %v2809, 30
      %v2811 = vshll.u32 %v2810, 30
      %v2812 = vsub.s32 %v2808, %v2811
      %vm2813 = vcmp.lt.s32.totalorder %v2812, 0
      %v2814 = vsub.s32 0, %v2812
      %v2815 = vsel %vm2813, %v2814, %v2812
      %v2816 = vclz %v2815
      %v2817 = vsub.s32 %v2816, 2
      %vm2818 = vcmp.gt.s32.totalorder 0, %v2817
      %v2819 = vsel %vm2818, 0, %v2817
      %v2820 = vsub.s32 32, %v2819
      %v2821 = vshll.u32 %v2812, %v2819
      %v2822 = vshrl.u32 %v2804, %v2820
      %v2823 = vor.u32 %v2821, %v2822
      %v2824 = vsub.s32 4294967266, %v2819
      %v2825 = vadd.s32 %v2824, 127
      %v2826 = vshll.u32 %v2825, 23
      %v2827 = vor.u32 4788187, %v2826
      %v2828 = vand.u32 2147483647, %v2827
      %v2830 = vcvt.s32.f32 %v2823
      %v2831 = vmul.f32 %v2830, %v2828
      %v2832 = vxor.u32 %v2831, 2147483648
      %v2833 = vsel %vm2750, %v2832, %v2831
      %v2834 = vsub.s32 4, %v2810
      %v2835 = vsel %vm2750, %v2834, %v2810
      %v2836 = vsel %vm2749, %v542, %v2833
      %v2837 = vsel %vm2749, 0, %v2835
      %v2838 = vcosq.f32.pop %v2836
      %v2839 = vsinq.f32.pop %v2836
      %vm2840 = vweird.f32 %v542
      %v2841 = vand.u32 %v2837, 3
      %vm2842 = vcmp.lt.s32.totalorder %v2841, 2
      %vm2843 = vcmp.eq.s32.totalorder %v2841, 0
      %v2844 = vxor.u32 %v2839, 2147483648
      %v2845 = vsel %vm2843, %v2838, %v2844
      %vm2846 = vcmp.eq.s32.totalorder %v2841, 2
      %v2847 = vxor.u32 %v2838, 2147483648
      %v2848 = vsel %vm2846, %v2847, %v2839
      %v2849 = vsel %vm2842, %v2845, %v2848
      %v2850 = vsel %vm2840, nan, %v2849
      %v2851 = vand.u32 2147483647, %v543
      %vm2852 = vcmp.le.f32.partialorder %v2851, 0.7853982
      %vm2853 = vcmp.lt.s32.totalorder %v543, 0
      %v2854 = vand.u32 %v543, 2139095040
      %v2855 = vshrl.u32 %v2854, 23
      %v2856 = vsub.s32 %v2855, 127
      %v2857 = vand.u32 2147483647, %v543
      %v2858 = vand.u32 %v2857, 8388607
      %v2859 = vor.u32 %v2858, 8388608
      %v2860 = vsub.s32 0, %v2859
      %v2861 = vadd.s32 %v2856, 1
      %vm2862 = vcmp.gt.s32.totalorder %v2861, 0
      %v2863 = vsel %vm2862, %v2861, 0
      %v2864 = vshrl.u32 %v2863, 5
      %v2865 = vand.u32 %v2863, 31
      %v2866 = vsub.s32 32, %v2865
      %v2867 = vshrl.u32 683565275, %v2866
      %v2868 = vshll.u32 683565275, %v2865
      %v2869 = vshrl.u32 2475754826, %v2866
      %v2870 = vor.u32 %v2868, %v2869
      %v2871 = vshll.u32 2475754826, %v2865
      %v2872 = vshrl.u32 2131351028, %v2866
      %v2873 = vor.u32 %v2871, %v2872
      %v2874 = vshll.u32 2131351028, %v2865
      %v2875 = vshrl.u32 2102212464, %v2866
      %v2876 = vor.u32 %v2874, %v2875
      %v2877 = vshll.u32 2102212464, %v2865
      %v2878 = vshrl.u32 920167782, %v2866
      %v2879 = vor.u32 %v2877, %v2878
      %v2880 = vshll.u32 920167782, %v2865
      %v2881 = vshrl.u32 1326507024, %v2866
      %v2882 = vor.u32 %v2880, %v2881
      %vm2883 = vcmp.lt.s32.totalorder %v2864, 1
      %vm2884 = vcmp.lt.s32.totalorder %v2864, 2
      %vm2885 = vcmp.lt.s32.totalorder %v2864, 3
      %vm2886 = vcmp.lt.s32.totalorder %v2864, 4
      %v2887 = vsel %vm2883, %v2867, %v2870
      %v2888 = vsel %vm2886, %v2876, 2102212464
      %v2889 = vsel %vm2885, %v2873, %v2888
      %v2890 = vsel %vm2884, %v2887, %v2889
      %v2891 = vsel %vm2883, %v2870, %v2873
      %v2892 = vsel %vm2886, %v2879, 920167782
      %v2893 = vsel %vm2885, %v2876, %v2892
      %v2894 = vsel %vm2884, %v2891, %v2893
      %v2895 = vsel %vm2883, %v2873, %v2876
      %v2896 = vsel %vm2886, %v2882, 1326507024
      %v2897 = vsel %vm2885, %v2879, %v2896
      %v2898 = vsel %vm2884, %v2895, %v2897
      %v2899 = vshll.u32 %v2859, 8
      %v2900 = vmul.u32.u64.compose %v2899, %v2898
      %v2901 = vextract.low.u32 %v2900
      %v2902 = vextract.high.u32 %v2900
      %v2903 = vmul.u32.u64.compose %v2899, %v2894
      %v2904 = vextract.low.u32 %v2903
      %v2905 = vextract.high.u32 %v2903
      %v2906 = vmul.u32 %v2899, %v2890
      %v2907 = vadd.s32 %v2902, %v2904
      %vm2908 = vc.u32 %v2902, %v2904
      %v2909 = vadd.s32 %v2905, 1
      %v2910 = vsel %vm2908, %v2909, %v2905
      %v2911 = vadd.s32 %v2906, %v2910
      %v2912 = vadd.s32 %v2911, 536870912
      %v2913 = vshrl.u32 %v2912, 30
      %v2914 = vshll.u32 %v2913, 30
      %v2915 = vsub.s32 %v2911, %v2914
      %vm2916 = vcmp.lt.s32.totalorder %v2915, 0
      %v2917 = vsub.s32 0, %v2915
      %v2918 = vsel %vm2916, %v2917, %v2915
      %v2919 = vclz %v2918
      %v2920 = vsub.s32 %v2919, 2
      %vm2921 = vcmp.gt.s32.totalorder 0, %v2920
      %v2922 = vsel %vm2921, 0, %v2920
      %v2923 = vsub.s32 32, %v2922
      %v2924 = vshll.u32 %v2915, %v2922
      %v2925 = vshrl.u32 %v2907, %v2923
      %v2926 = vor.u32 %v2924, %v2925
      %v2927 = vsub.s32 4294967266, %v2922
      %v2928 = vadd.s32 %v2927, 127
      %v2929 = vshll.u32 %v2928, 23
      %v2930 = vor.u32 4788187, %v2929
      %v2931 = vand.u32 2147483647, %v2930
      %v2933 = vcvt.s32.f32 %v2926
      %v2934 = vmul.f32 %v2933, %v2931
      %v2935 = vxor.u32 %v2934, 2147483648
      %v2936 = vsel %vm2853, %v2935, %v2934
      %v2937 = vsub.s32 4, %v2913
      %v2938 = vsel %vm2853, %v2937, %v2913
      %v2939 = vsel %vm2852, %v543, %v2936
      %v2940 = vsel %vm2852, 0, %v2938
      %v2941 = vcosq.f32.pop %v2939
      %v2942 = vsinq.f32.pop %v2939
      %vm2943 = vweird.f32 %v543
      %v2944 = vand.u32 %v2940, 3
      %vm2945 = vcmp.lt.s32.totalorder %v2944, 2
      %vm2946 = vcmp.eq.s32.totalorder %v2944, 0
      %v2947 = vxor.u32 %v2942, 2147483648
      %v2948 = vsel %vm2946, %v2941, %v2947
      %vm2949 = vcmp.eq.s32.totalorder %v2944, 2
      %v2950 = vxor.u32 %v2941, 2147483648
      %v2951 = vsel %vm2949, %v2950, %v2942
      %v2952 = vsel %vm2945, %v2948, %v2951
      %v2953 = vsel %vm2943, nan, %v2952
      %v2954 = vand.u32 2147483647, %v544
      %vm2955 = vcmp.le.f32.partialorder %v2954, 0.7853982
      %vm2956 = vcmp.lt.s32.totalorder %v544, 0
      %v2957 = vand.u32 %v544, 2139095040
      %v2958 = vshrl.u32 %v2957, 23
      %v2959 = vsub.s32 %v2958, 127
      %v2960 = vand.u32 2147483647, %v544
      %v2961 = vand.u32 %v2960, 8388607
      %v2962 = vor.u32 %v2961, 8388608
      %v2963 = vsub.s32 0, %v2962
      %v2964 = vadd.s32 %v2959, 1
      %vm2965 = vcmp.gt.s32.totalorder %v2964, 0
      %v2966 = vsel %vm2965, %v2964, 0
      %v2967 = vshrl.u32 %v2966, 5
      %v2968 = vand.u32 %v2966, 31
      %v2969 = vsub.s32 32, %v2968
      %v2970 = vshrl.u32 683565275, %v2969
      %v2971 = vshll.u32 683565275, %v2968
      %v2972 = vshrl.u32 2475754826, %v2969
      %v2973 = vor.u32 %v2971, %v2972
      %v2974 = vshll.u32 2475754826, %v2968
      %v2975 = vshrl.u32 2131351028, %v2969
      %v2976 = vor.u32 %v2974, %v2975
      %v2977 = vshll.u32 2131351028, %v2968
      %v2978 = vshrl.u32 2102212464, %v2969
      %v2979 = vor.u32 %v2977, %v2978
      %v2980 = vshll.u32 2102212464, %v2968
      %v2981 = vshrl.u32 920167782, %v2969
      %v2982 = vor.u32 %v2980, %v2981
      %v2983 = vshll.u32 920167782, %v2968
      %v2984 = vshrl.u32 1326507024, %v2969
      %v2985 = vor.u32 %v2983, %v2984
      %vm2986 = vcmp.lt.s32.totalorder %v2967, 1
      %vm2987 = vcmp.lt.s32.totalorder %v2967, 2
      %vm2988 = vcmp.lt.s32.totalorder %v2967, 3
      %vm2989 = vcmp.lt.s32.totalorder %v2967, 4
      %v2990 = vsel %vm2986, %v2970, %v2973
      %v2991 = vsel %vm2989, %v2979, 2102212464
      %v2992 = vsel %vm2988, %v2976, %v2991
      %v2993 = vsel %vm2987, %v2990, %v2992
      %v2994 = vsel %vm2986, %v2973, %v2976
      %v2995 = vsel %vm2989, %v2982, 920167782
      %v2996 = vsel %vm2988, %v2979, %v2995
      %v2997 = vsel %vm2987, %v2994, %v2996
      %v2998 = vsel %vm2986, %v2976, %v2979
      %v2999 = vsel %vm2989, %v2985, 1326507024
      %v3000 = vsel %vm2988, %v2982, %v2999
      %v3001 = vsel %vm2987, %v2998, %v3000
      %v3002 = vshll.u32 %v2962, 8
      %v3003 = vmul.u32.u64.compose %v3002, %v3001
      %v3004 = vextract.low.u32 %v3003
      %v3005 = vextract.high.u32 %v3003
      %v3006 = vmul.u32.u64.compose %v3002, %v2997
      %v3007 = vextract.low.u32 %v3006
      %v3008 = vextract.high.u32 %v3006
      %v3009 = vmul.u32 %v3002, %v2993
      %v3010 = vadd.s32 %v3005, %v3007
      %vm3011 = vc.u32 %v3005, %v3007
      %v3012 = vadd.s32 %v3008, 1
      %v3013 = vsel %vm3011, %v3012, %v3008
      %v3014 = vadd.s32 %v3009, %v3013
      %v3015 = vadd.s32 %v3014, 536870912
      %v3016 = vshrl.u32 %v3015, 30
      %v3017 = vshll.u32 %v3016, 30
      %v3018 = vsub.s32 %v3014, %v3017
      %vm3019 = vcmp.lt.s32.totalorder %v3018, 0
      %v3020 = vsub.s32 0, %v3018
      %v3021 = vsel %vm3019, %v3020, %v3018
      %v3022 = vclz %v3021
      %v3023 = vsub.s32 %v3022, 2
      %vm3024 = vcmp.gt.s32.totalorder 0, %v3023
      %v3025 = vsel %vm3024, 0, %v3023
      %v3026 = vsub.s32 32, %v3025
      %v3027 = vshll.u32 %v3018, %v3025
      %v3028 = vshrl.u32 %v3010, %v3026
      %v3029 = vor.u32 %v3027, %v3028
      %v3030 = vsub.s32 4294967266, %v3025
      %v3031 = vadd.s32 %v3030, 127
      %v3032 = vshll.u32 %v3031, 23
      %v3033 = vor.u32 4788187, %v3032
      %v3034 = vand.u32 2147483647, %v3033
      %v3036 = vcvt.s32.f32 %v3029
      %v3037 = vmul.f32 %v3036, %v3034
      %v3038 = vxor.u32 %v3037, 2147483648
      %v3039 = vsel %vm2956, %v3038, %v3037
      %v3040 = vsub.s32 4, %v3016
      %v3041 = vsel %vm2956, %v3040, %v3016
      %v3042 = vsel %vm2955, %v544, %v3039
      %v3043 = vsel %vm2955, 0, %v3041
      %v3044 = vcosq.f32.pop %v3042
      %v3045 = vsinq.f32.pop %v3042
      %vm3046 = vweird.f32 %v544
      %v3047 = vand.u32 %v3043, 3
      %vm3048 = vcmp.lt.s32.totalorder %v3047, 2
      %vm3049 = vcmp.eq.s32.totalorder %v3047, 0
      %v3050 = vxor.u32 %v3045, 2147483648
      %v3051 = vsel %vm3049, %v3044, %v3050
      %vm3052 = vcmp.eq.s32.totalorder %v3047, 2
      %v3053 = vxor.u32 %v3044, 2147483648
      %v3054 = vsel %vm3052, %v3053, %v3045
      %v3055 = vsel %vm3048, %v3051, %v3054
      %v3056 = vsel %vm3046, nan, %v3055
      %v3057 = vand.u32 2147483647, %v545
      %vm3058 = vcmp.le.f32.partialorder %v3057, 0.7853982
      %vm3059 = vcmp.lt.s32.totalorder %v545, 0
      %v3060 = vand.u32 %v545, 2139095040
      %v3061 = vshrl.u32 %v3060, 23
      %v3062 = vsub.s32 %v3061, 127
      %v3063 = vand.u32 2147483647, %v545
      %v3064 = vand.u32 %v3063, 8388607
      %v3065 = vor.u32 %v3064, 8388608
      %v3066 = vsub.s32 0, %v3065
      %v3067 = vadd.s32 %v3062, 1
      %vm3068 = vcmp.gt.s32.totalorder %v3067, 0
      %v3069 = vsel %vm3068, %v3067, 0
      %v3070 = vshrl.u32 %v3069, 5
      %v3071 = vand.u32 %v3069, 31
      %v3072 = vsub.s32 32, %v3071
      %v3073 = vshrl.u32 683565275, %v3072
      %v3074 = vshll.u32 683565275, %v3071
      %v3075 = vshrl.u32 2475754826, %v3072
      %v3076 = vor.u32 %v3074, %v3075
      %v3077 = vshll.u32 2475754826, %v3071
      %v3078 = vshrl.u32 2131351028, %v3072
      %v3079 = vor.u32 %v3077, %v3078
      %v3080 = vshll.u32 2131351028, %v3071
      %v3081 = vshrl.u32 2102212464, %v3072
      %v3082 = vor.u32 %v3080, %v3081
      %v3083 = vshll.u32 2102212464, %v3071
      %v3084 = vshrl.u32 920167782, %v3072
      %v3085 = vor.u32 %v3083, %v3084
      %v3086 = vshll.u32 920167782, %v3071
      %v3087 = vshrl.u32 1326507024, %v3072
      %v3088 = vor.u32 %v3086, %v3087
      %vm3089 = vcmp.lt.s32.totalorder %v3070, 1
      %vm3090 = vcmp.lt.s32.totalorder %v3070, 2
      %vm3091 = vcmp.lt.s32.totalorder %v3070, 3
      %vm3092 = vcmp.lt.s32.totalorder %v3070, 4
      %v3093 = vsel %vm3089, %v3073, %v3076
      %v3094 = vsel %vm3092, %v3082, 2102212464
      %v3095 = vsel %vm3091, %v3079, %v3094
      %v3096 = vsel %vm3090, %v3093, %v3095
      %v3097 = vsel %vm3089, %v3076, %v3079
      %v3098 = vsel %vm3092, %v3085, 920167782
      %v3099 = vsel %vm3091, %v3082, %v3098
      %v3100 = vsel %vm3090, %v3097, %v3099
      %v3101 = vsel %vm3089, %v3079, %v3082
      %v3102 = vsel %vm3092, %v3088, 1326507024
      %v3103 = vsel %vm3091, %v3085, %v3102
      %v3104 = vsel %vm3090, %v3101, %v3103
      %v3105 = vshll.u32 %v3065, 8
      %v3106 = vmul.u32.u64.compose %v3105, %v3104
      %v3107 = vextract.low.u32 %v3106
      %v3108 = vextract.high.u32 %v3106
      %v3109 = vmul.u32.u64.compose %v3105, %v3100
      %v3110 = vextract.low.u32 %v3109
      %v3111 = vextract.high.u32 %v3109
      %v3112 = vmul.u32 %v3105, %v3096
      %v3113 = vadd.s32 %v3108, %v3110
      %vm3114 = vc.u32 %v3108, %v3110
      %v3115 = vadd.s32 %v3111, 1
      %v3116 = vsel %vm3114, %v3115, %v3111
      %v3117 = vadd.s32 %v3112, %v3116
      %v3118 = vadd.s32 %v3117, 536870912
      %v3119 = vshrl.u32 %v3118, 30
      %v3120 = vshll.u32 %v3119, 30
      %v3121 = vsub.s32 %v3117, %v3120
      %vm3122 = vcmp.lt.s32.totalorder %v3121, 0
      %v3123 = vsub.s32 0, %v3121
      %v3124 = vsel %vm3122, %v3123, %v3121
      %v3125 = vclz %v3124
      %v3126 = vsub.s32 %v3125, 2
      %vm3127 = vcmp.gt.s32.totalorder 0, %v3126
      %v3128 = vsel %vm3127, 0, %v3126
      %v3129 = vsub.s32 32, %v3128
      %v3130 = vshll.u32 %v3121, %v3128
      %v3131 = vshrl.u32 %v3113, %v3129
      %v3132 = vor.u32 %v3130, %v3131
      %v3133 = vsub.s32 4294967266, %v3128
      %v3134 = vadd.s32 %v3133, 127
      %v3135 = vshll.u32 %v3134, 23
      %v3136 = vor.u32 4788187, %v3135
      %v3137 = vand.u32 2147483647, %v3136
      %v3139 = vcvt.s32.f32 %v3132
      %v3140 = vmul.f32 %v3139, %v3137
      %v3141 = vxor.u32 %v3140, 2147483648
      %v3142 = vsel %vm3059, %v3141, %v3140
      %v3143 = vsub.s32 4, %v3119
      %v3144 = vsel %vm3059, %v3143, %v3119
      %v3145 = vsel %vm3058, %v545, %v3142
      %v3146 = vsel %vm3058, 0, %v3144
      %v3147 = vcosq.f32.pop %v3145
      %v3148 = vsinq.f32.pop %v3145
      %vm3149 = vweird.f32 %v545
      %v3150 = vand.u32 %v3146, 3
      %vm3151 = vcmp.lt.s32.totalorder %v3150, 2
      %vm3152 = vcmp.eq.s32.totalorder %v3150, 0
      %v3153 = vxor.u32 %v3148, 2147483648
      %v3154 = vsel %vm3152, %v3147, %v3153
      %vm3155 = vcmp.eq.s32.totalorder %v3150, 2
      %v3156 = vxor.u32 %v3147, 2147483648
      %v3157 = vsel %vm3155, %v3156, %v3148
      %v3158 = vsel %vm3151, %v3154, %v3157
      %v3159 = vsel %vm3149, nan, %v3158
      %v3160 = vand.u32 2147483647, %v546
      %vm3161 = vcmp.le.f32.partialorder %v3160, 0.7853982
      %vm3162 = vcmp.lt.s32.totalorder %v546, 0
      %v3163 = vand.u32 %v546, 2139095040
      %v3164 = vshrl.u32 %v3163, 23
      %v3165 = vsub.s32 %v3164, 127
      %v3166 = vand.u32 2147483647, %v546
      %v3167 = vand.u32 %v3166, 8388607
      %v3168 = vor.u32 %v3167, 8388608
      %v3169 = vsub.s32 0, %v3168
      %v3170 = vadd.s32 %v3165, 1
      %vm3171 = vcmp.gt.s32.totalorder %v3170, 0
      %v3172 = vsel %vm3171, %v3170, 0
      %v3173 = vshrl.u32 %v3172, 5
      %v3174 = vand.u32 %v3172, 31
      %v3175 = vsub.s32 32, %v3174
      %v3176 = vshrl.u32 683565275, %v3175
      %v3177 = vshll.u32 683565275, %v3174
      %v3178 = vshrl.u32 2475754826, %v3175
      %v3179 = vor.u32 %v3177, %v3178
      %v3180 = vshll.u32 2475754826, %v3174
      %v3181 = vshrl.u32 2131351028, %v3175
      %v3182 = vor.u32 %v3180, %v3181
      %v3183 = vshll.u32 2131351028, %v3174
      %v3184 = vshrl.u32 2102212464, %v3175
      %v3185 = vor.u32 %v3183, %v3184
      %v3186 = vshll.u32 2102212464, %v3174
      %v3187 = vshrl.u32 920167782, %v3175
      %v3188 = vor.u32 %v3186, %v3187
      %v3189 = vshll.u32 920167782, %v3174
      %v3190 = vshrl.u32 1326507024, %v3175
      %v3191 = vor.u32 %v3189, %v3190
      %vm3192 = vcmp.lt.s32.totalorder %v3173, 1
      %vm3193 = vcmp.lt.s32.totalorder %v3173, 2
      %vm3194 = vcmp.lt.s32.totalorder %v3173, 3
      %vm3195 = vcmp.lt.s32.totalorder %v3173, 4
      %v3196 = vsel %vm3192, %v3176, %v3179
      %v3197 = vsel %vm3195, %v3185, 2102212464
      %v3198 = vsel %vm3194, %v3182, %v3197
      %v3199 = vsel %vm3193, %v3196, %v3198
      %v3200 = vsel %vm3192, %v3179, %v3182
      %v3201 = vsel %vm3195, %v3188, 920167782
      %v3202 = vsel %vm3194, %v3185, %v3201
      %v3203 = vsel %vm3193, %v3200, %v3202
      %v3204 = vsel %vm3192, %v3182, %v3185
      %v3205 = vsel %vm3195, %v3191, 1326507024
      %v3206 = vsel %vm3194, %v3188, %v3205
      %v3207 = vsel %vm3193, %v3204, %v3206
      %v3208 = vshll.u32 %v3168, 8
      %v3209 = vmul.u32.u64.compose %v3208, %v3207
      %v3210 = vextract.low.u32 %v3209
      %v3211 = vextract.high.u32 %v3209
      %v3212 = vmul.u32.u64.compose %v3208, %v3203
      %v3213 = vextract.low.u32 %v3212
      %v3214 = vextract.high.u32 %v3212
      %v3215 = vmul.u32 %v3208, %v3199
      %v3216 = vadd.s32 %v3211, %v3213
      %vm3217 = vc.u32 %v3211, %v3213
      %v3218 = vadd.s32 %v3214, 1
      %v3219 = vsel %vm3217, %v3218, %v3214
      %v3220 = vadd.s32 %v3215, %v3219
      %v3221 = vadd.s32 %v3220, 536870912
      %v3222 = vshrl.u32 %v3221, 30
      %v3223 = vshll.u32 %v3222, 30
      %v3224 = vsub.s32 %v3220, %v3223
      %vm3225 = vcmp.lt.s32.totalorder %v3224, 0
      %v3226 = vsub.s32 0, %v3224
      %v3227 = vsel %vm3225, %v3226, %v3224
      %v3228 = vclz %v3227
      %v3229 = vsub.s32 %v3228, 2
      %vm3230 = vcmp.gt.s32.totalorder 0, %v3229
      %v3231 = vsel %vm3230, 0, %v3229
      %v3232 = vsub.s32 32, %v3231
      %v3233 = vshll.u32 %v3224, %v3231
      %v3234 = vshrl.u32 %v3216, %v3232
      %v3235 = vor.u32 %v3233, %v3234
      %v3236 = vsub.s32 4294967266, %v3231
      %v3237 = vadd.s32 %v3236, 127
      %v3238 = vshll.u32 %v3237, 23
      %v3239 = vor.u32 4788187, %v3238
      %v3240 = vand.u32 2147483647, %v3239
      %v3242 = vcvt.s32.f32 %v3235
      %v3243 = vmul.f32 %v3242, %v3240
      %v3244 = vxor.u32 %v3243, 2147483648
      %v3245 = vsel %vm3162, %v3244, %v3243
      %v3246 = vsub.s32 4, %v3222
      %v3247 = vsel %vm3162, %v3246, %v3222
      %v3248 = vsel %vm3161, %v546, %v3245
      %v3249 = vsel %vm3161, 0, %v3247
      %v3250 = vcosq.f32.pop %v3248
      %v3251 = vsinq.f32.pop %v3248
      %vm3252 = vweird.f32 %v546
      %v3253 = vand.u32 %v3249, 3
      %vm3254 = vcmp.lt.s32.totalorder %v3253, 2
      %vm3255 = vcmp.eq.s32.totalorder %v3253, 0
      %v3256 = vxor.u32 %v3251, 2147483648
      %v3257 = vsel %vm3255, %v3250, %v3256
      %vm3258 = vcmp.eq.s32.totalorder %v3253, 2
      %v3259 = vxor.u32 %v3250, 2147483648
      %v3260 = vsel %vm3258, %v3259, %v3251
      %v3261 = vsel %vm3254, %v3257, %v3260
      %v3262 = vsel %vm3252, nan, %v3261
      %v3263 = vand.u32 2147483647, %v547
      %vm3264 = vcmp.le.f32.partialorder %v3263, 0.7853982
      %vm3265 = vcmp.lt.s32.totalorder %v547, 0
      %v3266 = vand.u32 %v547, 2139095040
      %v3267 = vshrl.u32 %v3266, 23
      %v3268 = vsub.s32 %v3267, 127
      %v3269 = vand.u32 2147483647, %v547
      %v3270 = vand.u32 %v3269, 8388607
      %v3271 = vor.u32 %v3270, 8388608
      %v3272 = vsub.s32 0, %v3271
      %v3273 = vadd.s32 %v3268, 1
      %vm3274 = vcmp.gt.s32.totalorder %v3273, 0
      %v3275 = vsel %vm3274, %v3273, 0
      %v3276 = vshrl.u32 %v3275, 5
      %v3277 = vand.u32 %v3275, 31
      %v3278 = vsub.s32 32, %v3277
      %v3279 = vshrl.u32 683565275, %v3278
      %v3280 = vshll.u32 683565275, %v3277
      %v3281 = vshrl.u32 2475754826, %v3278
      %v3282 = vor.u32 %v3280, %v3281
      %v3283 = vshll.u32 2475754826, %v3277
      %v3284 = vshrl.u32 2131351028, %v3278
      %v3285 = vor.u32 %v3283, %v3284
      %v3286 = vshll.u32 2131351028, %v3277
      %v3287 = vshrl.u32 2102212464, %v3278
      %v3288 = vor.u32 %v3286, %v3287
      %v3289 = vshll.u32 2102212464, %v3277
      %v3290 = vshrl.u32 920167782, %v3278
      %v3291 = vor.u32 %v3289, %v3290
      %v3292 = vshll.u32 920167782, %v3277
      %v3293 = vshrl.u32 1326507024, %v3278
      %v3294 = vor.u32 %v3292, %v3293
      %vm3295 = vcmp.lt.s32.totalorder %v3276, 1
      %vm3296 = vcmp.lt.s32.totalorder %v3276, 2
      %vm3297 = vcmp.lt.s32.totalorder %v3276, 3
      %vm3298 = vcmp.lt.s32.totalorder %v3276, 4
      %v3299 = vsel %vm3295, %v3279, %v3282
      %v3300 = vsel %vm3298, %v3288, 2102212464
      %v3301 = vsel %vm3297, %v3285, %v3300
      %v3302 = vsel %vm3296, %v3299, %v3301
      %v3303 = vsel %vm3295, %v3282, %v3285
      %v3304 = vsel %vm3298, %v3291, 920167782
      %v3305 = vsel %vm3297, %v3288, %v3304
      %v3306 = vsel %vm3296, %v3303, %v3305
      %v3307 = vsel %vm3295, %v3285, %v3288
      %v3308 = vsel %vm3298, %v3294, 1326507024
      %v3309 = vsel %vm3297, %v3291, %v3308
      %v3310 = vsel %vm3296, %v3307, %v3309
      %v3311 = vshll.u32 %v3271, 8
      %v3312 = vmul.u32.u64.compose %v3311, %v3310
      %v3313 = vextract.low.u32 %v3312
      %v3314 = vextract.high.u32 %v3312
      %v3315 = vmul.u32.u64.compose %v3311, %v3306
      %v3316 = vextract.low.u32 %v3315
      %v3317 = vextract.high.u32 %v3315
      %v3318 = vmul.u32 %v3311, %v3302
      %v3319 = vadd.s32 %v3314, %v3316
      %vm3320 = vc.u32 %v3314, %v3316
      %v3321 = vadd.s32 %v3317, 1
      %v3322 = vsel %vm3320, %v3321, %v3317
      %v3323 = vadd.s32 %v3318, %v3322
      %v3324 = vadd.s32 %v3323, 536870912
      %v3325 = vshrl.u32 %v3324, 30
      %v3326 = vshll.u32 %v3325, 30
      %v3327 = vsub.s32 %v3323, %v3326
      %vm3328 = vcmp.lt.s32.totalorder %v3327, 0
      %v3329 = vsub.s32 0, %v3327
      %v3330 = vsel %vm3328, %v3329, %v3327
      %v3331 = vclz %v3330
      %v3332 = vsub.s32 %v3331, 2
      %vm3333 = vcmp.gt.s32.totalorder 0, %v3332
      %v3334 = vsel %vm3333, 0, %v3332
      %v3335 = vsub.s32 32, %v3334
      %v3336 = vshll.u32 %v3327, %v3334
      %v3337 = vshrl.u32 %v3319, %v3335
      %v3338 = vor.u32 %v3336, %v3337
      %v3339 = vsub.s32 4294967266, %v3334
      %v3340 = vadd.s32 %v3339, 127
      %v3341 = vshll.u32 %v3340, 23
      %v3342 = vor.u32 4788187, %v3341
      %v3343 = vand.u32 2147483647, %v3342
      %v3345 = vcvt.s32.f32 %v3338
      %v3346 = vmul.f32 %v3345, %v3343
      %v3347 = vxor.u32 %v3346, 2147483648
      %v3348 = vsel %vm3265, %v3347, %v3346
      %v3349 = vsub.s32 4, %v3325
      %v3350 = vsel %vm3265, %v3349, %v3325
      %v3351 = vsel %vm3264, %v547, %v3348
      %v3352 = vsel %vm3264, 0, %v3350
      %v3353 = vcosq.f32.pop %v3351
      %v3354 = vsinq.f32.pop %v3351
      %vm3355 = vweird.f32 %v547
      %v3356 = vand.u32 %v3352, 3
      %vm3357 = vcmp.lt.s32.totalorder %v3356, 2
      %vm3358 = vcmp.eq.s32.totalorder %v3356, 0
      %v3359 = vxor.u32 %v3354, 2147483648
      %v3360 = vsel %vm3358, %v3353, %v3359
      %vm3361 = vcmp.eq.s32.totalorder %v3356, 2
      %v3362 = vxor.u32 %v3353, 2147483648
      %v3363 = vsel %vm3361, %v3362, %v3354
      %v3364 = vsel %vm3357, %v3360, %v3363
      %v3365 = vsel %vm3355, nan, %v3364
      %v3366 = vand.u32 2147483647, %v548
      %vm3367 = vcmp.le.f32.partialorder %v3366, 0.7853982
      %vm3368 = vcmp.lt.s32.totalorder %v548, 0
      %v3369 = vand.u32 %v548, 2139095040
      %v3370 = vshrl.u32 %v3369, 23
      %v3371 = vsub.s32 %v3370, 127
      %v3372 = vand.u32 2147483647, %v548
      %v3373 = vand.u32 %v3372, 8388607
      %v3374 = vor.u32 %v3373, 8388608
      %v3375 = vsub.s32 0, %v3374
      %v3376 = vadd.s32 %v3371, 1
      %vm3377 = vcmp.gt.s32.totalorder %v3376, 0
      %v3378 = vsel %vm3377, %v3376, 0
      %v3379 = vshrl.u32 %v3378, 5
      %v3380 = vand.u32 %v3378, 31
      %v3381 = vsub.s32 32, %v3380
      %v3382 = vshrl.u32 683565275, %v3381
      %v3383 = vshll.u32 683565275, %v3380
      %v3384 = vshrl.u32 2475754826, %v3381
      %v3385 = vor.u32 %v3383, %v3384
      %v3386 = vshll.u32 2475754826, %v3380
      %v3387 = vshrl.u32 2131351028, %v3381
      %v3388 = vor.u32 %v3386, %v3387
      %v3389 = vshll.u32 2131351028, %v3380
      %v3390 = vshrl.u32 2102212464, %v3381
      %v3391 = vor.u32 %v3389, %v3390
      %v3392 = vshll.u32 2102212464, %v3380
      %v3393 = vshrl.u32 920167782, %v3381
      %v3394 = vor.u32 %v3392, %v3393
      %v3395 = vshll.u32 920167782, %v3380
      %v3396 = vshrl.u32 1326507024, %v3381
      %v3397 = vor.u32 %v3395, %v3396
      %vm3398 = vcmp.lt.s32.totalorder %v3379, 1
      %vm3399 = vcmp.lt.s32.totalorder %v3379, 2
      %vm3400 = vcmp.lt.s32.totalorder %v3379, 3
      %vm3401 = vcmp.lt.s32.totalorder %v3379, 4
      %v3402 = vsel %vm3398, %v3382, %v3385
      %v3403 = vsel %vm3401, %v3391, 2102212464
      %v3404 = vsel %vm3400, %v3388, %v3403
      %v3405 = vsel %vm3399, %v3402, %v3404
      %v3406 = vsel %vm3398, %v3385, %v3388
      %v3407 = vsel %vm3401, %v3394, 920167782
      %v3408 = vsel %vm3400, %v3391, %v3407
      %v3409 = vsel %vm3399, %v3406, %v3408
      %v3410 = vsel %vm3398, %v3388, %v3391
      %v3411 = vsel %vm3401, %v3397, 1326507024
      %v3412 = vsel %vm3400, %v3394, %v3411
      %v3413 = vsel %vm3399, %v3410, %v3412
      %v3414 = vshll.u32 %v3374, 8
      %v3415 = vmul.u32.u64.compose %v3414, %v3413
      %v3416 = vextract.low.u32 %v3415
      %v3417 = vextract.high.u32 %v3415
      %v3418 = vmul.u32.u64.compose %v3414, %v3409
      %v3419 = vextract.low.u32 %v3418
      %v3420 = vextract.high.u32 %v3418
      %v3421 = vmul.u32 %v3414, %v3405
      %v3422 = vadd.s32 %v3417, %v3419
      %vm3423 = vc.u32 %v3417, %v3419
      %v3424 = vadd.s32 %v3420, 1
      %v3425 = vsel %vm3423, %v3424, %v3420
      %v3426 = vadd.s32 %v3421, %v3425
      %v3427 = vadd.s32 %v3426, 536870912
      %v3428 = vshrl.u32 %v3427, 30
      %v3429 = vshll.u32 %v3428, 30
      %v3430 = vsub.s32 %v3426, %v3429
      %vm3431 = vcmp.lt.s32.totalorder %v3430, 0
      %v3432 = vsub.s32 0, %v3430
      %v3433 = vsel %vm3431, %v3432, %v3430
      %v3434 = vclz %v3433
      %v3435 = vsub.s32 %v3434, 2
      %vm3436 = vcmp.gt.s32.totalorder 0, %v3435
      %v3437 = vsel %vm3436, 0, %v3435
      %v3438 = vsub.s32 32, %v3437
      %v3439 = vshll.u32 %v3430, %v3437
      %v3440 = vshrl.u32 %v3422, %v3438
      %v3441 = vor.u32 %v3439, %v3440
      %v3442 = vsub.s32 4294967266, %v3437
      %v3443 = vadd.s32 %v3442, 127
      %v3444 = vshll.u32 %v3443, 23
      %v3445 = vor.u32 4788187, %v3444
      %v3446 = vand.u32 2147483647, %v3445
      %v3448 = vcvt.s32.f32 %v3441
      %v3449 = vmul.f32 %v3448, %v3446
      %v3450 = vxor.u32 %v3449, 2147483648
      %v3451 = vsel %vm3368, %v3450, %v3449
      %v3452 = vsub.s32 4, %v3428
      %v3453 = vsel %vm3368, %v3452, %v3428
      %v3454 = vsel %vm3367, %v548, %v3451
      %v3455 = vsel %vm3367, 0, %v3453
      %v3456 = vcosq.f32.pop %v3454
      %v3457 = vsinq.f32.pop %v3454
      %vm3458 = vweird.f32 %v548
      %v3459 = vand.u32 %v3455, 3
      %vm3460 = vcmp.lt.s32.totalorder %v3459, 2
      %vm3461 = vcmp.eq.s32.totalorder %v3459, 0
      %v3462 = vxor.u32 %v3457, 2147483648
      %v3463 = vsel %vm3461, %v3456, %v3462
      %vm3464 = vcmp.eq.s32.totalorder %v3459, 2
      %v3465 = vxor.u32 %v3456, 2147483648
      %v3466 = vsel %vm3464, %v3465, %v3457
      %v3467 = vsel %vm3460, %v3463, %v3466
      %v3468 = vsel %vm3458, nan, %v3467
      %v3469 = vand.u32 2147483647, %v549
      %vm3470 = vcmp.le.f32.partialorder %v3469, 0.7853982
      %vm3471 = vcmp.lt.s32.totalorder %v549, 0
      %v3472 = vand.u32 %v549, 2139095040
      %v3473 = vshrl.u32 %v3472, 23
      %v3474 = vsub.s32 %v3473, 127
      %v3475 = vand.u32 2147483647, %v549
      %v3476 = vand.u32 %v3475, 8388607
      %v3477 = vor.u32 %v3476, 8388608
      %v3478 = vsub.s32 0, %v3477
      %v3479 = vadd.s32 %v3474, 1
      %vm3480 = vcmp.gt.s32.totalorder %v3479, 0
      %v3481 = vsel %vm3480, %v3479, 0
      %v3482 = vshrl.u32 %v3481, 5
      %v3483 = vand.u32 %v3481, 31
      %v3484 = vsub.s32 32, %v3483
      %v3485 = vshrl.u32 683565275, %v3484
      %v3486 = vshll.u32 683565275, %v3483
      %v3487 = vshrl.u32 2475754826, %v3484
      %v3488 = vor.u32 %v3486, %v3487
      %v3489 = vshll.u32 2475754826, %v3483
      %v3490 = vshrl.u32 2131351028, %v3484
      %v3491 = vor.u32 %v3489, %v3490
      %v3492 = vshll.u32 2131351028, %v3483
      %v3493 = vshrl.u32 2102212464, %v3484
      %v3494 = vor.u32 %v3492, %v3493
      %v3495 = vshll.u32 2102212464, %v3483
      %v3496 = vshrl.u32 920167782, %v3484
      %v3497 = vor.u32 %v3495, %v3496
      %v3498 = vshll.u32 920167782, %v3483
      %v3499 = vshrl.u32 1326507024, %v3484
      %v3500 = vor.u32 %v3498, %v3499
      %vm3501 = vcmp.lt.s32.totalorder %v3482, 1
      %vm3502 = vcmp.lt.s32.totalorder %v3482, 2
      %vm3503 = vcmp.lt.s32.totalorder %v3482, 3
      %vm3504 = vcmp.lt.s32.totalorder %v3482, 4
      %v3505 = vsel %vm3501, %v3485, %v3488
      %v3506 = vsel %vm3504, %v3494, 2102212464
      %v3507 = vsel %vm3503, %v3491, %v3506
      %v3508 = vsel %vm3502, %v3505, %v3507
      %v3509 = vsel %vm3501, %v3488, %v3491
      %v3510 = vsel %vm3504, %v3497, 920167782
      %v3511 = vsel %vm3503, %v3494, %v3510
      %v3512 = vsel %vm3502, %v3509, %v3511
      %v3513 = vsel %vm3501, %v3491, %v3494
      %v3514 = vsel %vm3504, %v3500, 1326507024
      %v3515 = vsel %vm3503, %v3497, %v3514
      %v3516 = vsel %vm3502, %v3513, %v3515
      %v3517 = vshll.u32 %v3477, 8
      %v3518 = vmul.u32.u64.compose %v3517, %v3516
      %v3519 = vextract.low.u32 %v3518
      %v3520 = vextract.high.u32 %v3518
      %v3521 = vmul.u32.u64.compose %v3517, %v3512
      %v3522 = vextract.low.u32 %v3521
      %v3523 = vextract.high.u32 %v3521
      %v3524 = vmul.u32 %v3517, %v3508
      %v3525 = vadd.s32 %v3520, %v3522
      %vm3526 = vc.u32 %v3520, %v3522
      %v3527 = vadd.s32 %v3523, 1
      %v3528 = vsel %vm3526, %v3527, %v3523
      %v3529 = vadd.s32 %v3524, %v3528
      %v3530 = vadd.s32 %v3529, 536870912
      %v3531 = vshrl.u32 %v3530, 30
      %v3532 = vshll.u32 %v3531, 30
      %v3533 = vsub.s32 %v3529, %v3532
      %vm3534 = vcmp.lt.s32.totalorder %v3533, 0
      %v3535 = vsub.s32 0, %v3533
      %v3536 = vsel %vm3534, %v3535, %v3533
      %v3537 = vclz %v3536
      %v3538 = vsub.s32 %v3537, 2
      %vm3539 = vcmp.gt.s32.totalorder 0, %v3538
      %v3540 = vsel %vm3539, 0, %v3538
      %v3541 = vsub.s32 32, %v3540
      %v3542 = vshll.u32 %v3533, %v3540
      %v3543 = vshrl.u32 %v3525, %v3541
      %v3544 = vor.u32 %v3542, %v3543
      %v3545 = vsub.s32 4294967266, %v3540
      %v3546 = vadd.s32 %v3545, 127
      %v3547 = vshll.u32 %v3546, 23
      %v3548 = vor.u32 4788187, %v3547
      %v3549 = vand.u32 2147483647, %v3548
      %v3551 = vcvt.s32.f32 %v3544
      %v3552 = vmul.f32 %v3551, %v3549
      %v3553 = vxor.u32 %v3552, 2147483648
      %v3554 = vsel %vm3471, %v3553, %v3552
      %v3555 = vsub.s32 4, %v3531
      %v3556 = vsel %vm3471, %v3555, %v3531
      %v3557 = vsel %vm3470, %v549, %v3554
      %v3558 = vsel %vm3470, 0, %v3556
      %v3559 = vcosq.f32.pop %v3557
      %v3560 = vsinq.f32.pop %v3557
      %vm3561 = vweird.f32 %v549
      %v3562 = vand.u32 %v3558, 3
      %vm3563 = vcmp.lt.s32.totalorder %v3562, 2
      %vm3564 = vcmp.eq.s32.totalorder %v3562, 0
      %v3565 = vxor.u32 %v3560, 2147483648
      %v3566 = vsel %vm3564, %v3559, %v3565
      %vm3567 = vcmp.eq.s32.totalorder %v3562, 2
      %v3568 = vxor.u32 %v3559, 2147483648
      %v3569 = vsel %vm3567, %v3568, %v3560
      %v3570 = vsel %vm3563, %v3566, %v3569
      %v3571 = vsel %vm3561, nan, %v3570
      %v3572 = vand.u32 2147483647, %v550
      %vm3573 = vcmp.le.f32.partialorder %v3572, 0.7853982
      %vm3574 = vcmp.lt.s32.totalorder %v550, 0
      %v3575 = vand.u32 %v550, 2139095040
      %v3576 = vshrl.u32 %v3575, 23
      %v3577 = vsub.s32 %v3576, 127
      %v3578 = vand.u32 2147483647, %v550
      %v3579 = vand.u32 %v3578, 8388607
      %v3580 = vor.u32 %v3579, 8388608
      %v3581 = vsub.s32 0, %v3580
      %v3582 = vadd.s32 %v3577, 1
      %vm3583 = vcmp.gt.s32.totalorder %v3582, 0
      %v3584 = vsel %vm3583, %v3582, 0
      %v3585 = vshrl.u32 %v3584, 5
      %v3586 = vand.u32 %v3584, 31
      %v3587 = vsub.s32 32, %v3586
      %v3588 = vshrl.u32 683565275, %v3587
      %v3589 = vshll.u32 683565275, %v3586
      %v3590 = vshrl.u32 2475754826, %v3587
      %v3591 = vor.u32 %v3589, %v3590
      %v3592 = vshll.u32 2475754826, %v3586
      %v3593 = vshrl.u32 2131351028, %v3587
      %v3594 = vor.u32 %v3592, %v3593
      %v3595 = vshll.u32 2131351028, %v3586
      %v3596 = vshrl.u32 2102212464, %v3587
      %v3597 = vor.u32 %v3595, %v3596
      %v3598 = vshll.u32 2102212464, %v3586
      %v3599 = vshrl.u32 920167782, %v3587
      %v3600 = vor.u32 %v3598, %v3599
      %v3601 = vshll.u32 920167782, %v3586
      %v3602 = vshrl.u32 1326507024, %v3587
      %v3603 = vor.u32 %v3601, %v3602
      %vm3604 = vcmp.lt.s32.totalorder %v3585, 1
      %vm3605 = vcmp.lt.s32.totalorder %v3585, 2
      %vm3606 = vcmp.lt.s32.totalorder %v3585, 3
      %vm3607 = vcmp.lt.s32.totalorder %v3585, 4
      %v3608 = vsel %vm3604, %v3588, %v3591
      %v3609 = vsel %vm3607, %v3597, 2102212464
      %v3610 = vsel %vm3606, %v3594, %v3609
      %v3611 = vsel %vm3605, %v3608, %v3610
      %v3612 = vsel %vm3604, %v3591, %v3594
      %v3613 = vsel %vm3607, %v3600, 920167782
      %v3614 = vsel %vm3606, %v3597, %v3613
      %v3615 = vsel %vm3605, %v3612, %v3614
      %v3616 = vsel %vm3604, %v3594, %v3597
      %v3617 = vsel %vm3607, %v3603, 1326507024
      %v3618 = vsel %vm3606, %v3600, %v3617
      %v3619 = vsel %vm3605, %v3616, %v3618
      %v3620 = vshll.u32 %v3580, 8
      %v3621 = vmul.u32.u64.compose %v3620, %v3619
      %v3622 = vextract.low.u32 %v3621
      %v3623 = vextract.high.u32 %v3621
      %v3624 = vmul.u32.u64.compose %v3620, %v3615
      %v3625 = vextract.low.u32 %v3624
      %v3626 = vextract.high.u32 %v3624
      %v3627 = vmul.u32 %v3620, %v3611
      %v3628 = vadd.s32 %v3623, %v3625
      %vm3629 = vc.u32 %v3623, %v3625
      %v3630 = vadd.s32 %v3626, 1
      %v3631 = vsel %vm3629, %v3630, %v3626
      %v3632 = vadd.s32 %v3627, %v3631
      %v3633 = vadd.s32 %v3632, 536870912
      %v3634 = vshrl.u32 %v3633, 30
      %v3635 = vshll.u32 %v3634, 30
      %v3636 = vsub.s32 %v3632, %v3635
      %vm3637 = vcmp.lt.s32.totalorder %v3636, 0
      %v3638 = vsub.s32 0, %v3636
      %v3639 = vsel %vm3637, %v3638, %v3636
      %v3640 = vclz %v3639
      %v3641 = vsub.s32 %v3640, 2
      %vm3642 = vcmp.gt.s32.totalorder 0, %v3641
      %v3643 = vsel %vm3642, 0, %v3641
      %v3644 = vsub.s32 32, %v3643
      %v3645 = vshll.u32 %v3636, %v3643
      %v3646 = vshrl.u32 %v3628, %v3644
      %v3647 = vor.u32 %v3645, %v3646
      %v3648 = vsub.s32 4294967266, %v3643
      %v3649 = vadd.s32 %v3648, 127
      %v3650 = vshll.u32 %v3649, 23
      %v3651 = vor.u32 4788187, %v3650
      %v3652 = vand.u32 2147483647, %v3651
      %v3654 = vcvt.s32.f32 %v3647
      %v3655 = vmul.f32 %v3654, %v3652
      %v3656 = vxor.u32 %v3655, 2147483648
      %v3657 = vsel %vm3574, %v3656, %v3655
      %v3658 = vsub.s32 4, %v3634
      %v3659 = vsel %vm3574, %v3658, %v3634
      %v3660 = vsel %vm3573, %v550, %v3657
      %v3661 = vsel %vm3573, 0, %v3659
      %v3662 = vcosq.f32.pop %v3660
      %v3663 = vsinq.f32.pop %v3660
      %vm3664 = vweird.f32 %v550
      %v3665 = vand.u32 %v3661, 3
      %vm3666 = vcmp.lt.s32.totalorder %v3665, 2
      %vm3667 = vcmp.eq.s32.totalorder %v3665, 0
      %v3668 = vxor.u32 %v3663, 2147483648
      %v3669 = vsel %vm3667, %v3662, %v3668
      %vm3670 = vcmp.eq.s32.totalorder %v3665, 2
      %v3671 = vxor.u32 %v3662, 2147483648
      %v3672 = vsel %vm3670, %v3671, %v3663
      %v3673 = vsel %vm3666, %v3669, %v3672
      %v3674 = vsel %vm3664, nan, %v3673
      %v3675 = vand.u32 2147483647, %v551
      %vm3676 = vcmp.le.f32.partialorder %v3675, 0.7853982
      %vm3677 = vcmp.lt.s32.totalorder %v551, 0
      %v3678 = vand.u32 %v551, 2139095040
      %v3679 = vshrl.u32 %v3678, 23
      %v3680 = vsub.s32 %v3679, 127
      %v3681 = vand.u32 2147483647, %v551
      %v3682 = vand.u32 %v3681, 8388607
      %v3683 = vor.u32 %v3682, 8388608
      %v3684 = vsub.s32 0, %v3683
      %v3685 = vadd.s32 %v3680, 1
      %vm3686 = vcmp.gt.s32.totalorder %v3685, 0
      %v3687 = vsel %vm3686, %v3685, 0
      %v3688 = vshrl.u32 %v3687, 5
      %v3689 = vand.u32 %v3687, 31
      %v3690 = vsub.s32 32, %v3689
      %v3691 = vshrl.u32 683565275, %v3690
      %v3692 = vshll.u32 683565275, %v3689
      %v3693 = vshrl.u32 2475754826, %v3690
      %v3694 = vor.u32 %v3692, %v3693
      %v3695 = vshll.u32 2475754826, %v3689
      %v3696 = vshrl.u32 2131351028, %v3690
      %v3697 = vor.u32 %v3695, %v3696
      %v3698 = vshll.u32 2131351028, %v3689
      %v3699 = vshrl.u32 2102212464, %v3690
      %v3700 = vor.u32 %v3698, %v3699
      %v3701 = vshll.u32 2102212464, %v3689
      %v3702 = vshrl.u32 920167782, %v3690
      %v3703 = vor.u32 %v3701, %v3702
      %v3704 = vshll.u32 920167782, %v3689
      %v3705 = vshrl.u32 1326507024, %v3690
      %v3706 = vor.u32 %v3704, %v3705
      %vm3707 = vcmp.lt.s32.totalorder %v3688, 1
      %vm3708 = vcmp.lt.s32.totalorder %v3688, 2
      %vm3709 = vcmp.lt.s32.totalorder %v3688, 3
      %vm3710 = vcmp.lt.s32.totalorder %v3688, 4
      %v3711 = vsel %vm3707, %v3691, %v3694
      %v3712 = vsel %vm3710, %v3700, 2102212464
      %v3713 = vsel %vm3709, %v3697, %v3712
      %v3714 = vsel %vm3708, %v3711, %v3713
      %v3715 = vsel %vm3707, %v3694, %v3697
      %v3716 = vsel %vm3710, %v3703, 920167782
      %v3717 = vsel %vm3709, %v3700, %v3716
      %v3718 = vsel %vm3708, %v3715, %v3717
      %v3719 = vsel %vm3707, %v3697, %v3700
      %v3720 = vsel %vm3710, %v3706, 1326507024
      %v3721 = vsel %vm3709, %v3703, %v3720
      %v3722 = vsel %vm3708, %v3719, %v3721
      %v3723 = vshll.u32 %v3683, 8
      %v3724 = vmul.u32.u64.compose %v3723, %v3722
      %v3725 = vextract.low.u32 %v3724
      %v3726 = vextract.high.u32 %v3724
      %v3727 = vmul.u32.u64.compose %v3723, %v3718
      %v3728 = vextract.low.u32 %v3727
      %v3729 = vextract.high.u32 %v3727
      %v3730 = vmul.u32 %v3723, %v3714
      %v3731 = vadd.s32 %v3726, %v3728
      %vm3732 = vc.u32 %v3726, %v3728
      %v3733 = vadd.s32 %v3729, 1
      %v3734 = vsel %vm3732, %v3733, %v3729
      %v3735 = vadd.s32 %v3730, %v3734
      %v3736 = vadd.s32 %v3735, 536870912
      %v3737 = vshrl.u32 %v3736, 30
      %v3738 = vshll.u32 %v3737, 30
      %v3739 = vsub.s32 %v3735, %v3738
      %vm3740 = vcmp.lt.s32.totalorder %v3739, 0
      %v3741 = vsub.s32 0, %v3739
      %v3742 = vsel %vm3740, %v3741, %v3739
      %v3743 = vclz %v3742
      %v3744 = vsub.s32 %v3743, 2
      %vm3745 = vcmp.gt.s32.totalorder 0, %v3744
      %v3746 = vsel %vm3745, 0, %v3744
      %v3747 = vsub.s32 32, %v3746
      %v3748 = vshll.u32 %v3739, %v3746
      %v3749 = vshrl.u32 %v3731, %v3747
      %v3750 = vor.u32 %v3748, %v3749
      %v3751 = vsub.s32 4294967266, %v3746
      %v3752 = vadd.s32 %v3751, 127
      %v3753 = vshll.u32 %v3752, 23
      %v3754 = vor.u32 4788187, %v3753
      %v3755 = vand.u32 2147483647, %v3754
      %v3757 = vcvt.s32.f32 %v3750
      %v3758 = vmul.f32 %v3757, %v3755
      %v3759 = vxor.u32 %v3758, 2147483648
      %v3760 = vsel %vm3677, %v3759, %v3758
      %v3761 = vsub.s32 4, %v3737
      %v3762 = vsel %vm3677, %v3761, %v3737
      %v3763 = vsel %vm3676, %v551, %v3760
      %v3764 = vsel %vm3676, 0, %v3762
      %v3765 = vcosq.f32.pop %v3763
      %v3766 = vsinq.f32.pop %v3763
      %vm3767 = vweird.f32 %v551
      %v3768 = vand.u32 %v3764, 3
      %vm3769 = vcmp.lt.s32.totalorder %v3768, 2
      %vm3770 = vcmp.eq.s32.totalorder %v3768, 0
      %v3771 = vxor.u32 %v3766, 2147483648
      %v3772 = vsel %vm3770, %v3765, %v3771
      %vm3773 = vcmp.eq.s32.totalorder %v3768, 2
      %v3774 = vxor.u32 %v3765, 2147483648
      %v3775 = vsel %vm3773, %v3774, %v3766
      %v3776 = vsel %vm3769, %v3772, %v3775
      %v3777 = vsel %vm3767, nan, %v3776
      %v3778 = vand.u32 2147483647, %v552
      %vm3779 = vcmp.le.f32.partialorder %v3778, 0.7853982
      %vm3780 = vcmp.lt.s32.totalorder %v552, 0
      %v3781 = vand.u32 %v552, 2139095040
      %v3782 = vshrl.u32 %v3781, 23
      %v3783 = vsub.s32 %v3782, 127
      %v3784 = vand.u32 2147483647, %v552
      %v3785 = vand.u32 %v3784, 8388607
      %v3786 = vor.u32 %v3785, 8388608
      %v3787 = vsub.s32 0, %v3786
      %v3788 = vadd.s32 %v3783, 1
      %vm3789 = vcmp.gt.s32.totalorder %v3788, 0
      %v3790 = vsel %vm3789, %v3788, 0
      %v3791 = vshrl.u32 %v3790, 5
      %v3792 = vand.u32 %v3790, 31
      %v3793 = vsub.s32 32, %v3792
      %v3794 = vshrl.u32 683565275, %v3793
      %v3795 = vshll.u32 683565275, %v3792
      %v3796 = vshrl.u32 2475754826, %v3793
      %v3797 = vor.u32 %v3795, %v3796
      %v3798 = vshll.u32 2475754826, %v3792
      %v3799 = vshrl.u32 2131351028, %v3793
      %v3800 = vor.u32 %v3798, %v3799
      %v3801 = vshll.u32 2131351028, %v3792
      %v3802 = vshrl.u32 2102212464, %v3793
      %v3803 = vor.u32 %v3801, %v3802
      %v3804 = vshll.u32 2102212464, %v3792
      %v3805 = vshrl.u32 920167782, %v3793
      %v3806 = vor.u32 %v3804, %v3805
      %v3807 = vshll.u32 920167782, %v3792
      %v3808 = vshrl.u32 1326507024, %v3793
      %v3809 = vor.u32 %v3807, %v3808
      %vm3810 = vcmp.lt.s32.totalorder %v3791, 1
      %vm3811 = vcmp.lt.s32.totalorder %v3791, 2
      %vm3812 = vcmp.lt.s32.totalorder %v3791, 3
      %vm3813 = vcmp.lt.s32.totalorder %v3791, 4
      %v3814 = vsel %vm3810, %v3794, %v3797
      %v3815 = vsel %vm3813, %v3803, 2102212464
      %v3816 = vsel %vm3812, %v3800, %v3815
      %v3817 = vsel %vm3811, %v3814, %v3816
      %v3818 = vsel %vm3810, %v3797, %v3800
      %v3819 = vsel %vm3813, %v3806, 920167782
      %v3820 = vsel %vm3812, %v3803, %v3819
      %v3821 = vsel %vm3811, %v3818, %v3820
      %v3822 = vsel %vm3810, %v3800, %v3803
      %v3823 = vsel %vm3813, %v3809, 1326507024
      %v3824 = vsel %vm3812, %v3806, %v3823
      %v3825 = vsel %vm3811, %v3822, %v3824
      %v3826 = vshll.u32 %v3786, 8
      %v3827 = vmul.u32.u64.compose %v3826, %v3825
      %v3828 = vextract.low.u32 %v3827
      %v3829 = vextract.high.u32 %v3827
      %v3830 = vmul.u32.u64.compose %v3826, %v3821
      %v3831 = vextract.low.u32 %v3830
      %v3832 = vextract.high.u32 %v3830
      %v3833 = vmul.u32 %v3826, %v3817
      %v3834 = vadd.s32 %v3829, %v3831
      %vm3835 = vc.u32 %v3829, %v3831
      %v3836 = vadd.s32 %v3832, 1
      %v3837 = vsel %vm3835, %v3836, %v3832
      %v3838 = vadd.s32 %v3833, %v3837
      %v3839 = vadd.s32 %v3838, 536870912
      %v3840 = vshrl.u32 %v3839, 30
      %v3841 = vshll.u32 %v3840, 30
      %v3842 = vsub.s32 %v3838, %v3841
      %vm3843 = vcmp.lt.s32.totalorder %v3842, 0
      %v3844 = vsub.s32 0, %v3842
      %v3845 = vsel %vm3843, %v3844, %v3842
      %v3846 = vclz %v3845
      %v3847 = vsub.s32 %v3846, 2
      %vm3848 = vcmp.gt.s32.totalorder 0, %v3847
      %v3849 = vsel %vm3848, 0, %v3847
      %v3850 = vsub.s32 32, %v3849
      %v3851 = vshll.u32 %v3842, %v3849
      %v3852 = vshrl.u32 %v3834, %v3850
      %v3853 = vor.u32 %v3851, %v3852
      %v3854 = vsub.s32 4294967266, %v3849
      %v3855 = vadd.s32 %v3854, 127
      %v3856 = vshll.u32 %v3855, 23
      %v3857 = vor.u32 4788187, %v3856
      %v3858 = vand.u32 2147483647, %v3857
      %v3860 = vcvt.s32.f32 %v3853
      %v3861 = vmul.f32 %v3860, %v3858
      %v3862 = vxor.u32 %v3861, 2147483648
      %v3863 = vsel %vm3780, %v3862, %v3861
      %v3864 = vsub.s32 4, %v3840
      %v3865 = vsel %vm3780, %v3864, %v3840
      %v3866 = vsel %vm3779, %v552, %v3863
      %v3867 = vsel %vm3779, 0, %v3865
      %v3868 = vcosq.f32.pop %v3866
      %v3869 = vsinq.f32.pop %v3866
      %vm3870 = vweird.f32 %v552
      %v3871 = vand.u32 %v3867, 3
      %vm3872 = vcmp.lt.s32.totalorder %v3871, 2
      %vm3873 = vcmp.eq.s32.totalorder %v3871, 0
      %v3874 = vxor.u32 %v3869, 2147483648
      %v3875 = vsel %vm3873, %v3868, %v3874
      %vm3876 = vcmp.eq.s32.totalorder %v3871, 2
      %v3877 = vxor.u32 %v3868, 2147483648
      %v3878 = vsel %vm3876, %v3877, %v3869
      %v3879 = vsel %vm3872, %v3875, %v3878
      %v3880 = vsel %vm3870, nan, %v3879
      %v3881 = vtanh.pop %v2335
      %v3882 = vtanh.pop %v2438
      %v3883 = vtanh.pop %v2541
      %v3884 = vtanh.pop %v2644
      %v3885 = vtanh.pop %v2747
      %v3886 = vtanh.pop %v2850
      %v3887 = vtanh.pop %v2953
      %v3888 = vtanh.pop %v3056
      %v3889 = vtanh.pop %v3159
      %v3890 = vtanh.pop %v3262
      %v3891 = vtanh.pop %v3365
      %v3892 = vtanh.pop %v3468
      %v3893 = vtanh.pop %v3571
      %v3894 = vtanh.pop %v3674
      %v3895 = vtanh.pop %v3777
      %v3896 = vtanh.pop %v3880
      %v3897 = vld [vmem:[%s2] sm:$0xff]
      %v3898 = vld [vmem:[%s2 + $0x8] sm:$0xff]
      %v3899 = vld [vmem:[%s2 + $0x10] sm:$0xff]
      %v3900 = vld [vmem:[%s2 + $0x18] sm:$0xff]
      %v3901 = vld [vmem:[%s3] sm:$0xff]
      %v3902 = vld [vmem:[%s3 + $0x8] sm:$0xff]
      %v3903 = vld [vmem:[%s3 + $0x10] sm:$0xff]
      %v3904 = vld [vmem:[%s3 + $0x18] sm:$0xff]
      %vm3905 = vcmask 261120
      %v3907 = vsel %vm3905, %v3881, 0
      %v3910 = vsel %vm3905, %v3882, 0
      %v3913 = vsel %vm3905, %v3883, 0
      %v3916 = vsel %vm3905, %v3884, 0
      %v3919 = vsel %vm3905, %v3885, 0
      %v3922 = vsel %vm3905, %v3886, 0
      %v3925 = vsel %vm3905, %v3887, 0
      %v3928 = vsel %vm3905, %v3888, 0
      %v3931 = vsel %vm3905, %v3889, 0
      %v3934 = vsel %vm3905, %v3890, 0
      %v3937 = vsel %vm3905, %v3891, 0
      %v3940 = vsel %vm3905, %v3892, 0
      %v3943 = vsel %vm3905, %v3893, 0
      %v3946 = vsel %vm3905, %v3894, 0
      %v3949 = vsel %vm3905, %v3895, 0
      %v3952 = vsel %vm3905, %v3896, 0
      %3954 = vmatprep.subr.mxu0 0.0
      %3955 = vmatpush1.msra.mxu0 0.0
      %3956 = vmatprep.subr.mxu0 0.0
      %3957 = vmatpush1.msra.mxu0 0.0
      %3958 = vmatprep.subr.mxu0 0.0
      %3959 = vmatpush1.msra.mxu0 0.0
      %3960 = vmatprep.subr.mxu0 0.0
      %3961 = vmatpush1.msra.mxu0 0.0
      %3962 = vmatprep.subr.mxu0 0.0
      %3963 = vmatpush1.msra.mxu0 0.0
      %3964 = vmatprep.subr.mxu0 0.0
      %3965 = vmatpush1.msra.mxu0 0.0
      %3966 = vmatprep.subr.mxu0 0.0
      %3967 = vmatpush1.msra.mxu0 0.0
      %3968 = vmatprep.subr.mxu0 0.0
      %3969 = vmatpush1.msra.mxu0 0.0
      %3970 = vmatprep.subr.mxu0 0.0
      %3971 = vmatpush1.msra.mxu0 0.0
      %3972 = vmatprep.subr.mxu0 0.0
      %3973 = vmatpush1.msra.mxu0 0.0
      %3974 = vmatprep.subr.mxu0 0.0
      %3975 = vmatpush1.msra.mxu0 0.0
      %3976 = vmatprep.subr.mxu0 0.0
      %3977 = vmatpush1.msra.mxu0 0.0
      %3978 = vmatprep.subr.mxu0 0.0
      %3979 = vmatpush1.msra.mxu0 %v3904
      %3980 = vmatprep.subr.mxu0 0.0
      %3981 = vmatpush1.msra.mxu0 %v3903
      %3982 = vmatprep.subr.mxu0 0.0
      %3983 = vmatpush1.msra.mxu0 %v3902
      %3984 = vmatprep.subr.mxu0 0.0
      %3985 = vmatpush1.msra.mxu0 %v3901
      %3986 = vmatprep.subr.mxu0 0.0
      %3987 = vmatpush2.msra.mxu0 0.0
      %3988 = vmatprep.subr.mxu0 0.0
      %3989 = vmatpush2.msra.mxu0 0.0
      %3990 = vmatprep.subr.mxu0 0.0
      %3991 = vmatpush2.msra.mxu0 0.0
      %3992 = vmatprep.subr.mxu0 0.0
      %3993 = vmatpush2.msra.mxu0 0.0
      %3994 = vmatprep.subr.mxu0 0.0
      %3995 = vmatpush2.msra.mxu0 0.0
      %3996 = vmatprep.subr.mxu0 0.0
      %3997 = vmatpush2.msra.mxu0 0.0
      %3998 = vmatprep.subr.mxu0 0.0
      %3999 = vmatpush2.msra.mxu0 0.0
      %4000 = vmatprep.subr.mxu0 0.0
      %4001 = vmatpush2.msra.mxu0 0.0
      %4002 = vmatprep.subr.mxu0 0.0
      %4003 = vmatpush2.msra.mxu0 0.0
      %4004 = vmatprep.subr.mxu0 0.0
      %4005 = vmatpush2.msra.mxu0 0.0
      %4006 = vmatprep.subr.mxu0 0.0
      %4007 = vmatpush2.msra.mxu0 0.0
      %4008 = vmatprep.subr.mxu0 0.0
      %4009 = vmatpush2.msra.mxu0 0.0
      %4010 = vmatprep.subr.mxu0 0.0
      %4011 = vmatpush2.msra.mxu0 0.0
      %4012 = vmatprep.subr.mxu0 0.0
      %4013 = vmatpush2.msra.mxu0 0.0
      %4014 = vmatprep.subr.mxu0 0.0
      %4015 = vmatpush2.msra.mxu0 0.0
      %4016 = vmatprep.subr.mxu0 0.0
      %4017 = vmatpush2.msra.mxu0 0.0
      %4018 = vmatprep.mubr.f32.mxu0 0.0
      %4019 = vmatmul.mubr.f32.gmra.mxu0 %v3907
      %v4020 = vpop.f32.mrf.mxu0
      %v4021 = vadd.f32 0.0, %v4020
      %v4022 = vpop.f32.mrf.mxu0
      %4023 = vmatprep.mubr.f32.mxu0 0.0
      %4024 = vmatmul.mubr.f32.gmra.mxu0 %v3910
      %v4025 = vpop.f32.mrf.mxu0
      %v4026 = vadd.f32 0.0, %v4025
      %v4027 = vpop.f32.mrf.mxu0
      %4028 = vmatprep.mubr.f32.mxu0 0.0
      %4029 = vmatmul.mubr.f32.gmra.mxu0 %v3913
      %v4030 = vpop.f32.mrf.mxu0
      %v4031 = vadd.f32 0.0, %v4030
      %v4032 = vpop.f32.mrf.mxu0
      %4033 = vmatprep.mubr.f32.mxu0 0.0
      %4034 = vmatmul.mubr.f32.gmra.mxu0 %v3916
      %v4035 = vpop.f32.mrf.mxu0
      %v4036 = vadd.f32 0.0, %v4035
      %v4037 = vpop.f32.mrf.mxu0
      %4038 = vmatprep.mubr.f32.mxu0 0.0
      %4039 = vmatmul.mubr.f32.gmra.mxu0 %v3919
      %v4040 = vpop.f32.mrf.mxu0
      %v4041 = vadd.f32 0.0, %v4040
      %v4042 = vpop.f32.mrf.mxu0
      %4043 = vmatprep.mubr.f32.mxu0 0.0
      %4044 = vmatmul.mubr.f32.gmra.mxu0 %v3922
      %v4045 = vpop.f32.mrf.mxu0
      %v4046 = vadd.f32 0.0, %v4045
      %v4047 = vpop.f32.mrf.mxu0
      %4048 = vmatprep.mubr.f32.mxu0 0.0
      %4049 = vmatmul.mubr.f32.gmra.mxu0 %v3925
      %v4050 = vpop.f32.mrf.mxu0
      %v4051 = vadd.f32 0.0, %v4050
      %v4052 = vpop.f32.mrf.mxu0
      %4053 = vmatprep.mubr.f32.mxu0 0.0
      %4054 = vmatmul.mubr.f32.gmra.mxu0 %v3928
      %v4055 = vpop.f32.mrf.mxu0
      %v4056 = vadd.f32 0.0, %v4055
      %v4057 = vpop.f32.mrf.mxu0
      %4058 = vmatprep.mubr.f32.mxu0 0.0
      %4059 = vmatmul.mubr.f32.gmra.mxu0 %v3931
      %v4060 = vpop.f32.mrf.mxu0
      %v4061 = vadd.f32 0.0, %v4060
      %v4062 = vpop.f32.mrf.mxu0
      %4063 = vmatprep.mubr.f32.mxu0 0.0
      %4064 = vmatmul.mubr.f32.gmra.mxu0 %v3934
      %v4065 = vpop.f32.mrf.mxu0
      %v4066 = vadd.f32 0.0, %v4065
      %v4067 = vpop.f32.mrf.mxu0
      %4068 = vmatprep.mubr.f32.mxu0 0.0
      %4069 = vmatmul.mubr.f32.gmra.mxu0 %v3937
      %v4070 = vpop.f32.mrf.mxu0
      %v4071 = vadd.f32 0.0, %v4070
      %v4072 = vpop.f32.mrf.mxu0
      %4073 = vmatprep.mubr.f32.mxu0 0.0
      %4074 = vmatmul.mubr.f32.gmra.mxu0 %v3940
      %v4075 = vpop.f32.mrf.mxu0
      %v4076 = vadd.f32 0.0, %v4075
      %v4077 = vpop.f32.mrf.mxu0
      %4078 = vmatprep.mubr.f32.mxu0 0.0
      %4079 = vmatmul.mubr.f32.gmra.mxu0 %v3943
      %v4080 = vpop.f32.mrf.mxu0
      %v4081 = vadd.f32 0.0, %v4080
      %v4082 = vpop.f32.mrf.mxu0
      %4083 = vmatprep.mubr.f32.mxu0 0.0
      %4084 = vmatmul.mubr.f32.gmra.mxu0 %v3946
      %v4085 = vpop.f32.mrf.mxu0
      %v4086 = vadd.f32 0.0, %v4085
      %v4087 = vpop.f32.mrf.mxu0
      %4088 = vmatprep.mubr.f32.mxu0 0.0
      %4089 = vmatmul.mubr.f32.gmra.mxu0 %v3949
      %v4090 = vpop.f32.mrf.mxu0
      %v4091 = vadd.f32 0.0, %v4090
      %v4092 = vpop.f32.mrf.mxu0
      %4093 = vmatprep.mubr.f32.mxu0 0.0
      %4094 = vmatmul.mubr.f32.gmra.mxu0 %v3952
      %v4095 = vpop.f32.mrf.mxu0
      %v4096 = vadd.f32 0.0, %v4095
      %v4097 = vpop.f32.mrf.mxu0
      %4098 = vdwg.mxu0
      %v4100 = vsel %vm3905, %v2217, 0
      %v4103 = vsel %vm3905, %v2218, 0
      %v4106 = vsel %vm3905, %v2219, 0
      %v4109 = vsel %vm3905, %v2220, 0
      %v4112 = vsel %vm3905, %v2221, 0
      %v4115 = vsel %vm3905, %v2222, 0
      %v4118 = vsel %vm3905, %v2223, 0
      %v4121 = vsel %vm3905, %v2224, 0
      %v4124 = vsel %vm3905, %v2225, 0
      %v4127 = vsel %vm3905, %v2226, 0
      %v4130 = vsel %vm3905, %v2227, 0
      %v4133 = vsel %vm3905, %v2228, 0
      %v4136 = vsel %vm3905, %v2229, 0
      %v4139 = vsel %vm3905, %v2230, 0
      %v4142 = vsel %vm3905, %v2231, 0
      %v4145 = vsel %vm3905, %v2232, 0
      %4147 = vmatprep.subr.mxu0 0.0
      %4148 = vmatpush1.msra.mxu0 0.0
      %4149 = vmatprep.subr.mxu0 0.0
      %4150 = vmatpush1.msra.mxu0 0.0
      %4151 = vmatprep.subr.mxu0 0.0
      %4152 = vmatpush1.msra.mxu0 0.0
      %4153 = vmatprep.subr.mxu0 0.0
      %4154 = vmatpush1.msra.mxu0 0.0
      %4155 = vmatprep.subr.mxu0 0.0
      %4156 = vmatpush1.msra.mxu0 0.0
      %4157 = vmatprep.subr.mxu0 0.0
      %4158 = vmatpush1.msra.mxu0 0.0
      %4159 = vmatprep.subr.mxu0 0.0
      %4160 = vmatpush1.msra.mxu0 0.0
      %4161 = vmatprep.subr.mxu0 0.0
      %4162 = vmatpush1.msra.mxu0 0.0
      %4163 = vmatprep.subr.mxu0 0.0
      %4164 = vmatpush1.msra.mxu0 0.0
      %4165 = vmatprep.subr.mxu0 0.0
      %4166 = vmatpush1.msra.mxu0 0.0
      %4167 = vmatprep.subr.mxu0 0.0
      %4168 = vmatpush1.msra.mxu0 0.0
      %4169 = vmatprep.subr.mxu0 0.0
      %4170 = vmatpush1.msra.mxu0 0.0
      %4171 = vmatprep.subr.mxu0 0.0
      %4172 = vmatpush1.msra.mxu0 %v3900
      %4173 = vmatprep.subr.mxu0 0.0
      %4174 = vmatpush1.msra.mxu0 %v3899
      %4175 = vmatprep.subr.mxu0 0.0
      %4176 = vmatpush1.msra.mxu0 %v3898
      %4177 = vmatprep.subr.mxu0 0.0
      %4178 = vmatpush1.msra.mxu0 %v3897
      %4179 = vmatprep.subr.mxu0 0.0
      %4180 = vmatpush2.msra.mxu0 0.0
      %4181 = vmatprep.subr.mxu0 0.0
      %4182 = vmatpush2.msra.mxu0 0.0
      %4183 = vmatprep.subr.mxu0 0.0
      %4184 = vmatpush2.msra.mxu0 0.0
      %4185 = vmatprep.subr.mxu0 0.0
      %4186 = vmatpush2.msra.mxu0 0.0
      %4187 = vmatprep.subr.mxu0 0.0
      %4188 = vmatpush2.msra.mxu0 0.0
      %4189 = vmatprep.subr.mxu0 0.0
      %4190 = vmatpush2.msra.mxu0 0.0
      %4191 = vmatprep.subr.mxu0 0.0
      %4192 = vmatpush2.msra.mxu0 0.0
      %4193 = vmatprep.subr.mxu0 0.0
      %4194 = vmatpush2.msra.mxu0 0.0
      %4195 = vmatprep.subr.mxu0 0.0
      %4196 = vmatpush2.msra.mxu0 0.0
      %4197 = vmatprep.subr.mxu0 0.0
      %4198 = vmatpush2.msra.mxu0 0.0
      %4199 = vmatprep.subr.mxu0 0.0
      %4200 = vmatpush2.msra.mxu0 0.0
      %4201 = vmatprep.subr.mxu0 0.0
      %4202 = vmatpush2.msra.mxu0 0.0
      %4203 = vmatprep.subr.mxu0 0.0
      %4204 = vmatpush2.msra.mxu0 0.0
      %4205 = vmatprep.subr.mxu0 0.0
      %4206 = vmatpush2.msra.mxu0 0.0
      %4207 = vmatprep.subr.mxu0 0.0
      %4208 = vmatpush2.msra.mxu0 0.0
      %4209 = vmatprep.subr.mxu0 0.0
      %4210 = vmatpush2.msra.mxu0 0.0
      %4211 = vmatprep.mubr.f32.mxu0 0.0
      %4212 = vmatmul.mubr.f32.gmra.mxu0 %v4100
      %v4213 = vpop.f32.mrf.mxu0
      %v4214 = vadd.f32 %v4021, %v4213
      %v4215 = vpop.f32.mrf.mxu0
      %4216 = vmatprep.mubr.f32.mxu0 0.0
      %4217 = vmatmul.mubr.f32.gmra.mxu0 %v4103
      %v4218 = vpop.f32.mrf.mxu0
      %v4219 = vadd.f32 %v4026, %v4218
      %v4220 = vpop.f32.mrf.mxu0
      %4221 = vmatprep.mubr.f32.mxu0 0.0
      %4222 = vmatmul.mubr.f32.gmra.mxu0 %v4106
      %v4223 = vpop.f32.mrf.mxu0
      %v4224 = vadd.f32 %v4031, %v4223
      %v4225 = vpop.f32.mrf.mxu0
      %4226 = vmatprep.mubr.f32.mxu0 0.0
      %4227 = vmatmul.mubr.f32.gmra.mxu0 %v4109
      %v4228 = vpop.f32.mrf.mxu0
      %v4229 = vadd.f32 %v4036, %v4228
      %v4230 = vpop.f32.mrf.mxu0
      %4231 = vmatprep.mubr.f32.mxu0 0.0
      %4232 = vmatmul.mubr.f32.gmra.mxu0 %v4112
      %v4233 = vpop.f32.mrf.mxu0
      %v4234 = vadd.f32 %v4041, %v4233
      %v4235 = vpop.f32.mrf.mxu0
      %4236 = vmatprep.mubr.f32.mxu0 0.0
      %4237 = vmatmul.mubr.f32.gmra.mxu0 %v4115
      %v4238 = vpop.f32.mrf.mxu0
      %v4239 = vadd.f32 %v4046, %v4238
      %v4240 = vpop.f32.mrf.mxu0
      %4241 = vmatprep.mubr.f32.mxu0 0.0
      %4242 = vmatmul.mubr.f32.gmra.mxu0 %v4118
      %v4243 = vpop.f32.mrf.mxu0
      %v4244 = vadd.f32 %v4051, %v4243
      %v4245 = vpop.f32.mrf.mxu0
      %4246 = vmatprep.mubr.f32.mxu0 0.0
      %4247 = vmatmul.mubr.f32.gmra.mxu0 %v4121
      %v4248 = vpop.f32.mrf.mxu0
      %v4249 = vadd.f32 %v4056, %v4248
      %v4250 = vpop.f32.mrf.mxu0
      %4251 = vmatprep.mubr.f32.mxu0 0.0
      %4252 = vmatmul.mubr.f32.gmra.mxu0 %v4124
      %v4253 = vpop.f32.mrf.mxu0
      %v4254 = vadd.f32 %v4061, %v4253
      %v4255 = vpop.f32.mrf.mxu0
      %4256 = vmatprep.mubr.f32.mxu0 0.0
      %4257 = vmatmul.mubr.f32.gmra.mxu0 %v4127
      %v4258 = vpop.f32.mrf.mxu0
      %v4259 = vadd.f32 %v4066, %v4258
      %v4260 = vpop.f32.mrf.mxu0
      %4261 = vmatprep.mubr.f32.mxu0 0.0
      %4262 = vmatmul.mubr.f32.gmra.mxu0 %v4130
      %v4263 = vpop.f32.mrf.mxu0
      %v4264 = vadd.f32 %v4071, %v4263
      %v4265 = vpop.f32.mrf.mxu0
      %4266 = vmatprep.mubr.f32.mxu0 0.0
      %4267 = vmatmul.mubr.f32.gmra.mxu0 %v4133
      %v4268 = vpop.f32.mrf.mxu0
      %v4269 = vadd.f32 %v4076, %v4268
      %v4270 = vpop.f32.mrf.mxu0
      %4271 = vmatprep.mubr.f32.mxu0 0.0
      %4272 = vmatmul.mubr.f32.gmra.mxu0 %v4136
      %v4273 = vpop.f32.mrf.mxu0
      %v4274 = vadd.f32 %v4081, %v4273
      %v4275 = vpop.f32.mrf.mxu0
      %4276 = vmatprep.mubr.f32.mxu0 0.0
      %4277 = vmatmul.mubr.f32.gmra.mxu0 %v4139
      %v4278 = vpop.f32.mrf.mxu0
      %v4279 = vadd.f32 %v4086, %v4278
      %v4280 = vpop.f32.mrf.mxu0
      %4281 = vmatprep.mubr.f32.mxu0 0.0
      %4282 = vmatmul.mubr.f32.gmra.mxu0 %v4142
      %v4283 = vpop.f32.mrf.mxu0
      %v4284 = vadd.f32 %v4091, %v4283
      %v4285 = vpop.f32.mrf.mxu0
      %4286 = vmatprep.mubr.f32.mxu0 0.0
      %4287 = vmatmul.mubr.f32.gmra.mxu0 %v4145
      %v4288 = vpop.f32.mrf.mxu0
      %v4289 = vadd.f32 %v4096, %v4288
      %v4290 = vpop.f32.mrf.mxu0
      %4291 = vdwg.mxu0
      %v4292 = vld [vmem:[%s4] sm:$0x1]
      %v4294 = vlaneseq
      %v4295 = vshrl.u32 %v4294, 7
      %v4296 = vsub.s32 0, %v4295
      %v4297 = vrot.slane %v4292, %v4296
      %v4299 = vadd.f32 %v4214, %v4297
      %v4300 = vadd.f32 %v4219, %v4297
      %v4301 = vadd.f32 %v4224, %v4297
      %v4302 = vadd.f32 %v4229, %v4297
      %v4303 = vadd.f32 %v4234, %v4297
      %v4304 = vadd.f32 %v4239, %v4297
      %v4305 = vadd.f32 %v4244, %v4297
      %v4306 = vadd.f32 %v4249, %v4297
      %v4307 = vadd.f32 %v4254, %v4297
      %v4308 = vadd.f32 %v4259, %v4297
      %v4309 = vadd.f32 %v4264, %v4297
      %v4310 = vadd.f32 %v4269, %v4297
      %v4311 = vadd.f32 %v4274, %v4297
      %v4312 = vadd.f32 %v4279, %v4297
      %v4313 = vadd.f32 %v4284, %v4297
      %v4314 = vadd.f32 %v4289, %v4297
      %v4315 = vtanh.pop %v4299
      %v4316 = vtanh.pop %v4300
      %v4317 = vtanh.pop %v4301
      %v4318 = vtanh.pop %v4302
      %v4319 = vtanh.pop %v4303
      %v4320 = vtanh.pop %v4304
      %v4321 = vtanh.pop %v4305
      %v4322 = vtanh.pop %v4306
      %v4323 = vtanh.pop %v4307
      %v4324 = vtanh.pop %v4308
      %v4325 = vtanh.pop %v4309
      %v4326 = vtanh.pop %v4310
      %v4327 = vtanh.pop %v4311
      %v4328 = vtanh.pop %v4312
      %v4329 = vtanh.pop %v4313
      %v4330 = vtanh.pop %v4314
      %v4331 = vld [vmem:[%s5] sm:$0xff]
      %v4332 = vld [vmem:[%s5 + $0x8] sm:$0xff]
      %v4333 = vld [vmem:[%s5 + $0x10] sm:$0xff]
      %v4334 = vld [vmem:[%s5 + $0x18] sm:$0xff]
      %v4335 = vld [vmem:[%s5 + $0x20] sm:$0xff]
      %v4336 = vld [vmem:[%s5 + $0x28] sm:$0xff]
      %v4337 = vld [vmem:[%s5 + $0x30] sm:$0xff]
      %v4338 = vld [vmem:[%s5 + $0x38] sm:$0xff]
      %v4339 = vld [vmem:[%s6] sm:$0x1]
      %v4341 = vlaneseq
      %v4342 = vshrl.u32 %v4341, 7
      %v4343 = vsub.s32 0, %v4342
      %v4344 = vrot.slane %v4339, %v4343
      %vm4346 = vcmask 523264
      %v4348 = vsel %vm4346, %v4315, 0
      %v4351 = vsel %vm4346, %v4316, 0
      %v4354 = vsel %vm4346, %v4317, 0
      %v4357 = vsel %vm4346, %v4318, 0
      %v4360 = vsel %vm4346, %v4319, 0
      %v4363 = vsel %vm4346, %v4320, 0
      %v4366 = vsel %vm4346, %v4321, 0
      %v4369 = vsel %vm4346, %v4322, 0
      %v4372 = vsel %vm4346, %v4323, 0
      %v4375 = vsel %vm4346, %v4324, 0
      %v4378 = vsel %vm4346, %v4325, 0
      %v4381 = vsel %vm4346, %v4326, 0
      %v4384 = vsel %vm4346, %v4327, 0
      %v4387 = vsel %vm4346, %v4328, 0
      %v4390 = vsel %vm4346, %v4329, 0
      %v4393 = vsel %vm4346, %v4330, 0
      %4395 = vmatprep.subr.mxu0 0.0
      %4396 = vmatpush1.msra.mxu0 0.0
      %4397 = vmatprep.subr.mxu0 0.0
      %4398 = vmatpush1.msra.mxu0 0.0
      %4399 = vmatprep.subr.mxu0 0.0
      %4400 = vmatpush1.msra.mxu0 0.0
      %4401 = vmatprep.subr.mxu0 0.0
      %4402 = vmatpush1.msra.mxu0 0.0
      %4403 = vmatprep.subr.mxu0 0.0
      %4404 = vmatpush1.msra.mxu0 0.0
      %4405 = vmatprep.subr.mxu0 0.0
      %4406 = vmatpush1.msra.mxu0 0.0
      %4407 = vmatprep.subr.mxu0 0.0
      %4408 = vmatpush1.msra.mxu0 0.0
      %4409 = vmatprep.subr.mxu0 0.0
      %4410 = vmatpush1.msra.mxu0 0.0
      %4411 = vmatprep.subr.mxu0 0.0
      %4412 = vmatpush1.msra.mxu0 %v4338
      %4413 = vmatprep.subr.mxu0 0.0
      %4414 = vmatpush1.msra.mxu0 %v4337
      %4415 = vmatprep.subr.mxu0 0.0
      %4416 = vmatpush1.msra.mxu0 %v4336
      %4417 = vmatprep.subr.mxu0 0.0
      %4418 = vmatpush1.msra.mxu0 %v4335
      %4419 = vmatprep.subr.mxu0 0.0
      %4420 = vmatpush1.msra.mxu0 %v4334
      %4421 = vmatprep.subr.mxu0 0.0
      %4422 = vmatpush1.msra.mxu0 %v4333
      %4423 = vmatprep.subr.mxu0 0.0
      %4424 = vmatpush1.msra.mxu0 %v4332
      %4425 = vmatprep.subr.mxu0 0.0
      %4426 = vmatpush1.msra.mxu0 %v4331
      %4427 = vmatprep.subr.mxu0 0.0
      %4428 = vmatpush2.msra.mxu0 0.0
      %4429 = vmatprep.subr.mxu0 0.0
      %4430 = vmatpush2.msra.mxu0 0.0
      %4431 = vmatprep.subr.mxu0 0.0
      %4432 = vmatpush2.msra.mxu0 0.0
      %4433 = vmatprep.subr.mxu0 0.0
      %4434 = vmatpush2.msra.mxu0 0.0
      %4435 = vmatprep.subr.mxu0 0.0
      %4436 = vmatpush2.msra.mxu0 0.0
      %4437 = vmatprep.subr.mxu0 0.0
      %4438 = vmatpush2.msra.mxu0 0.0
      %4439 = vmatprep.subr.mxu0 0.0
      %4440 = vmatpush2.msra.mxu0 0.0
      %4441 = vmatprep.subr.mxu0 0.0
      %4442 = vmatpush2.msra.mxu0 0.0
      %4443 = vmatprep.subr.mxu0 0.0
      %4444 = vmatpush2.msra.mxu0 0.0
      %4445 = vmatprep.subr.mxu0 0.0
      %4446 = vmatpush2.msra.mxu0 0.0
      %4447 = vmatprep.subr.mxu0 0.0
      %4448 = vmatpush2.msra.mxu0 0.0
      %4449 = vmatprep.subr.mxu0 0.0
      %4450 = vmatpush2.msra.mxu0 0.0
      %4451 = vmatprep.subr.mxu0 0.0
      %4452 = vmatpush2.msra.mxu0 0.0
      %4453 = vmatprep.subr.mxu0 0.0
      %4454 = vmatpush2.msra.mxu0 0.0
      %4455 = vmatprep.subr.mxu0 0.0
      %4456 = vmatpush2.msra.mxu0 0.0
      %4457 = vmatprep.subr.mxu0 0.0
      %4458 = vmatpush2.msra.mxu0 0.0
      %4459 = vmatprep.mubr.f32.mxu0 0.0
      %4460 = vmatmul.mubr.f32.gmra.mxu0 %v4348
      %v4461 = vpop.f32.mrf.mxu0
      %v4462 = vadd.f32 %v4344, %v4461
      %v4463 = vpop.f32.mrf.mxu0
      %4464 = vmatprep.mubr.f32.mxu0 0.0
      %4465 = vmatmul.mubr.f32.gmra.mxu0 %v4351
      %v4466 = vpop.f32.mrf.mxu0
      %v4467 = vadd.f32 %v4344, %v4466
      %v4468 = vpop.f32.mrf.mxu0
      %4469 = vmatprep.mubr.f32.mxu0 0.0
      %4470 = vmatmul.mubr.f32.gmra.mxu0 %v4354
      %v4471 = vpop.f32.mrf.mxu0
      %v4472 = vadd.f32 %v4344, %v4471
      %v4473 = vpop.f32.mrf.mxu0
      %4474 = vmatprep.mubr.f32.mxu0 0.0
      %4475 = vmatmul.mubr.f32.gmra.mxu0 %v4357
      %v4476 = vpop.f32.mrf.mxu0
      %v4477 = vadd.f32 %v4344, %v4476
      %v4478 = vpop.f32.mrf.mxu0
      %4479 = vmatprep.mubr.f32.mxu0 0.0
      %4480 = vmatmul.mubr.f32.gmra.mxu0 %v4360
      %v4481 = vpop.f32.mrf.mxu0
      %v4482 = vadd.f32 %v4344, %v4481
      %v4483 = vpop.f32.mrf.mxu0
      %4484 = vmatprep.mubr.f32.mxu0 0.0
      %4485 = vmatmul.mubr.f32.gmra.mxu0 %v4363
      %v4486 = vpop.f32.mrf.mxu0
      %v4487 = vadd.f32 %v4344, %v4486
      %v4488 = vpop.f32.mrf.mxu0
      %4489 = vmatprep.mubr.f32.mxu0 0.0
      %4490 = vmatmul.mubr.f32.gmra.mxu0 %v4366
      %v4491 = vpop.f32.mrf.mxu0
      %v4492 = vadd.f32 %v4344, %v4491
      %v4493 = vpop.f32.mrf.mxu0
      %4494 = vmatprep.mubr.f32.mxu0 0.0
      %4495 = vmatmul.mubr.f32.gmra.mxu0 %v4369
      %v4496 = vpop.f32.mrf.mxu0
      %v4497 = vadd.f32 %v4344, %v4496
      %v4498 = vpop.f32.mrf.mxu0
      %4499 = vmatprep.mubr.f32.mxu0 0.0
      %4500 = vmatmul.mubr.f32.gmra.mxu0 %v4372
      %v4501 = vpop.f32.mrf.mxu0
      %v4502 = vadd.f32 %v4344, %v4501
      %v4503 = vpop.f32.mrf.mxu0
      %4504 = vmatprep.mubr.f32.mxu0 0.0
      %4505 = vmatmul.mubr.f32.gmra.mxu0 %v4375
      %v4506 = vpop.f32.mrf.mxu0
      %v4507 = vadd.f32 %v4344, %v4506
      %v4508 = vpop.f32.mrf.mxu0
      %4509 = vmatprep.mubr.f32.mxu0 0.0
      %4510 = vmatmul.mubr.f32.gmra.mxu0 %v4378
      %v4511 = vpop.f32.mrf.mxu0
      %v4512 = vadd.f32 %v4344, %v4511
      %v4513 = vpop.f32.mrf.mxu0
      %4514 = vmatprep.mubr.f32.mxu0 0.0
      %4515 = vmatmul.mubr.f32.gmra.mxu0 %v4381
      %v4516 = vpop.f32.mrf.mxu0
      %v4517 = vadd.f32 %v4344, %v4516
      %v4518 = vpop.f32.mrf.mxu0
      %4519 = vmatprep.mubr.f32.mxu0 0.0
      %4520 = vmatmul.mubr.f32.gmra.mxu0 %v4384
      %v4521 = vpop.f32.mrf.mxu0
      %v4522 = vadd.f32 %v4344, %v4521
      %v4523 = vpop.f32.mrf.mxu0
      %4524 = vmatprep.mubr.f32.mxu0 0.0
      %4525 = vmatmul.mubr.f32.gmra.mxu0 %v4387
      %v4526 = vpop.f32.mrf.mxu0
      %v4527 = vadd.f32 %v4344, %v4526
      %v4528 = vpop.f32.mrf.mxu0
      %4529 = vmatprep.mubr.f32.mxu0 0.0
      %4530 = vmatmul.mubr.f32.gmra.mxu0 %v4390
      %v4531 = vpop.f32.mrf.mxu0
      %v4532 = vadd.f32 %v4344, %v4531
      %v4533 = vpop.f32.mrf.mxu0
      %4534 = vmatprep.mubr.f32.mxu0 0.0
      %4535 = vmatmul.mubr.f32.gmra.mxu0 %v4393
      %v4536 = vpop.f32.mrf.mxu0
      %v4537 = vadd.f32 %v4344, %v4536
      %v4538 = vpop.f32.mrf.mxu0
      %4539 = vdwg.mxu0
      %v4540 = vtanh.pop %v4462
      %v4541 = vtanh.pop %v4467
      %v4542 = vtanh.pop %v4472
      %v4543 = vtanh.pop %v4477
      %v4544 = vtanh.pop %v4482
      %v4545 = vtanh.pop %v4487
      %v4546 = vtanh.pop %v4492
      %v4547 = vtanh.pop %v4497
      %v4548 = vtanh.pop %v4502
      %v4549 = vtanh.pop %v4507
      %v4550 = vtanh.pop %v4512
      %v4551 = vtanh.pop %v4517
      %v4552 = vtanh.pop %v4522
      %v4553 = vtanh.pop %v4527
      %v4554 = vtanh.pop %v4532
      %v4555 = vtanh.pop %v4537
      %v4556 = vld [vmem:[%s7] sm:$0xff]
      %v4557 = vld [vmem:[%s7 + $0x8] sm:$0xff]
      %v4558 = vld [vmem:[%s7 + $0x10] sm:$0xff]
      %v4559 = vld [vmem:[%s7 + $0x18] sm:$0xff]
      %v4560 = vld [vmem:[%s7 + $0x20] sm:$0xff]
      %v4561 = vld [vmem:[%s7 + $0x28] sm:$0xff]
      %v4562 = vld [vmem:[%s7 + $0x30] sm:$0xff]
      %v4563 = vld [vmem:[%s7 + $0x38] sm:$0xff]
      %v4564 = vld [vmem:[%s8] sm:$0x1]
      %v4566 = vlaneseq
      %v4567 = vshrl.u32 %v4566, 7
      %v4568 = vsub.s32 0, %v4567
      %v4569 = vrot.slane %v4564, %v4568
      %v4572 = vsel %vm4346, %v4540, 0
      %v4575 = vsel %vm4346, %v4541, 0
      %v4578 = vsel %vm4346, %v4542, 0
      %v4581 = vsel %vm4346, %v4543, 0
      %v4584 = vsel %vm4346, %v4544, 0
      %v4587 = vsel %vm4346, %v4545, 0
      %v4590 = vsel %vm4346, %v4546, 0
      %v4593 = vsel %vm4346, %v4547, 0
      %v4596 = vsel %vm4346, %v4548, 0
      %v4599 = vsel %vm4346, %v4549, 0
      %v4602 = vsel %vm4346, %v4550, 0
      %v4605 = vsel %vm4346, %v4551, 0
      %v4608 = vsel %vm4346, %v4552, 0
      %v4611 = vsel %vm4346, %v4553, 0
      %v4614 = vsel %vm4346, %v4554, 0
      %v4617 = vsel %vm4346, %v4555, 0
      %4619 = vmatprep.subr.mxu0 0.0
      %4620 = vmatpush1.msra.mxu0 0.0
      %4621 = vmatprep.subr.mxu0 0.0
      %4622 = vmatpush1.msra.mxu0 0.0
      %4623 = vmatprep.subr.mxu0 0.0
      %4624 = vmatpush1.msra.mxu0 0.0
      %4625 = vmatprep.subr.mxu0 0.0
      %4626 = vmatpush1.msra.mxu0 0.0
      %4627 = vmatprep.subr.mxu0 0.0
      %4628 = vmatpush1.msra.mxu0 0.0
      %4629 = vmatprep.subr.mxu0 0.0
      %4630 = vmatpush1.msra.mxu0 0.0
      %4631 = vmatprep.subr.mxu0 0.0
      %4632 = vmatpush1.msra.mxu0 0.0
      %4633 = vmatprep.subr.mxu0 0.0
      %4634 = vmatpush1.msra.mxu0 0.0
      %4635 = vmatprep.subr.mxu0 0.0
      %4636 = vmatpush1.msra.mxu0 %v4563
      %4637 = vmatprep.subr.mxu0 0.0
      %4638 = vmatpush1.msra.mxu0 %v4562
      %4639 = vmatprep.subr.mxu0 0.0
      %4640 = vmatpush1.msra.mxu0 %v4561
      %4641 = vmatprep.subr.mxu0 0.0
      %4642 = vmatpush1.msra.mxu0 %v4560
      %4643 = vmatprep.subr.mxu0 0.0
      %4644 = vmatpush1.msra.mxu0 %v4559
      %4645 = vmatprep.subr.mxu0 0.0
      %4646 = vmatpush1.msra.mxu0 %v4558
      %4647 = vmatprep.subr.mxu0 0.0
      %4648 = vmatpush1.msra.mxu0 %v4557
      %4649 = vmatprep.subr.mxu0 0.0
      %4650 = vmatpush1.msra.mxu0 %v4556
      %4651 = vmatprep.subr.mxu0 0.0
      %4652 = vmatpush2.msra.mxu0 0.0
      %4653 = vmatprep.subr.mxu0 0.0
      %4654 = vmatpush2.msra.mxu0 0.0
      %4655 = vmatprep.subr.mxu0 0.0
      %4656 = vmatpush2.msra.mxu0 0.0
      %4657 = vmatprep.subr.mxu0 0.0
      %4658 = vmatpush2.msra.mxu0 0.0
      %4659 = vmatprep.subr.mxu0 0.0
      %4660 = vmatpush2.msra.mxu0 0.0
      %4661 = vmatprep.subr.mxu0 0.0
      %4662 = vmatpush2.msra.mxu0 0.0
      %4663 = vmatprep.subr.mxu0 0.0
      %4664 = vmatpush2.msra.mxu0 0.0
      %4665 = vmatprep.subr.mxu0 0.0
      %4666 = vmatpush2.msra.mxu0 0.0
      %4667 = vmatprep.subr.mxu0 0.0
      %4668 = vmatpush2.msra.mxu0 0.0
      %4669 = vmatprep.subr.mxu0 0.0
      %4670 = vmatpush2.msra.mxu0 0.0
      %4671 = vmatprep.subr.mxu0 0.0
      %4672 = vmatpush2.msra.mxu0 0.0
      %4673 = vmatprep.subr.mxu0 0.0
      %4674 = vmatpush2.msra.mxu0 0.0
      %4675 = vmatprep.subr.mxu0 0.0
      %4676 = vmatpush2.msra.mxu0 0.0
      %4677 = vmatprep.subr.mxu0 0.0
      %4678 = vmatpush2.msra.mxu0 0.0
      %4679 = vmatprep.subr.mxu0 0.0
      %4680 = vmatpush2.msra.mxu0 0.0
      %4681 = vmatprep.subr.mxu0 0.0
      %4682 = vmatpush2.msra.mxu0 0.0
      %4683 = vmatprep.mubr.f32.mxu0 0.0
      %4684 = vmatmul.mubr.f32.gmra.mxu0 %v4572
      %v4685 = vpop.f32.mrf.mxu0
      %v4686 = vadd.f32 %v4569, %v4685
      %v4687 = vpop.f32.mrf.mxu0
      %4688 = vmatprep.mubr.f32.mxu0 0.0
      %4689 = vmatmul.mubr.f32.gmra.mxu0 %v4575
      %v4690 = vpop.f32.mrf.mxu0
      %v4691 = vadd.f32 %v4569, %v4690
      %v4692 = vpop.f32.mrf.mxu0
      %4693 = vmatprep.mubr.f32.mxu0 0.0
      %4694 = vmatmul.mubr.f32.gmra.mxu0 %v4578
      %v4695 = vpop.f32.mrf.mxu0
      %v4696 = vadd.f32 %v4569, %v4695
      %v4697 = vpop.f32.mrf.mxu0
      %4698 = vmatprep.mubr.f32.mxu0 0.0
      %4699 = vmatmul.mubr.f32.gmra.mxu0 %v4581
      %v4700 = vpop.f32.mrf.mxu0
      %v4701 = vadd.f32 %v4569, %v4700
      %v4702 = vpop.f32.mrf.mxu0
      %4703 = vmatprep.mubr.f32.mxu0 0.0
      %4704 = vmatmul.mubr.f32.gmra.mxu0 %v4584
      %v4705 = vpop.f32.mrf.mxu0
      %v4706 = vadd.f32 %v4569, %v4705
      %v4707 = vpop.f32.mrf.mxu0
      %4708 = vmatprep.mubr.f32.mxu0 0.0
      %4709 = vmatmul.mubr.f32.gmra.mxu0 %v4587
      %v4710 = vpop.f32.mrf.mxu0
      %v4711 = vadd.f32 %v4569, %v4710
      %v4712 = vpop.f32.mrf.mxu0
      %4713 = vmatprep.mubr.f32.mxu0 0.0
      %4714 = vmatmul.mubr.f32.gmra.mxu0 %v4590
      %v4715 = vpop.f32.mrf.mxu0
      %v4716 = vadd.f32 %v4569, %v4715
      %v4717 = vpop.f32.mrf.mxu0
      %4718 = vmatprep.mubr.f32.mxu0 0.0
      %4719 = vmatmul.mubr.f32.gmra.mxu0 %v4593
      %v4720 = vpop.f32.mrf.mxu0
      %v4721 = vadd.f32 %v4569, %v4720
      %v4722 = vpop.f32.mrf.mxu0
      %4723 = vmatprep.mubr.f32.mxu0 0.0
      %4724 = vmatmul.mubr.f32.gmra.mxu0 %v4596
      %v4725 = vpop.f32.mrf.mxu0
      %v4726 = vadd.f32 %v4569, %v4725
      %v4727 = vpop.f32.mrf.mxu0
      %4728 = vmatprep.mubr.f32.mxu0 0.0
      %4729 = vmatmul.mubr.f32.gmra.mxu0 %v4599
      %v4730 = vpop.f32.mrf.mxu0
      %v4731 = vadd.f32 %v4569, %v4730
      %v4732 = vpop.f32.mrf.mxu0
      %4733 = vmatprep.mubr.f32.mxu0 0.0
      %4734 = vmatmul.mubr.f32.gmra.mxu0 %v4602
      %v4735 = vpop.f32.mrf.mxu0
      %v4736 = vadd.f32 %v4569, %v4735
      %v4737 = vpop.f32.mrf.mxu0
      %4738 = vmatprep.mubr.f32.mxu0 0.0
      %4739 = vmatmul.mubr.f32.gmra.mxu0 %v4605
      %v4740 = vpop.f32.mrf.mxu0
      %v4741 = vadd.f32 %v4569, %v4740
      %v4742 = vpop.f32.mrf.mxu0
      %4743 = vmatprep.mubr.f32.mxu0 0.0
      %4744 = vmatmul.mubr.f32.gmra.mxu0 %v4608
      %v4745 = vpop.f32.mrf.mxu0
      %v4746 = vadd.f32 %v4569, %v4745
      %v4747 = vpop.f32.mrf.mxu0
      %4748 = vmatprep.mubr.f32.mxu0 0.0
      %4749 = vmatmul.mubr.f32.gmra.mxu0 %v4611
      %v4750 = vpop.f32.mrf.mxu0
      %v4751 = vadd.f32 %v4569, %v4750
      %v4752 = vpop.f32.mrf.mxu0
      %4753 = vmatprep.mubr.f32.mxu0 0.0
      %4754 = vmatmul.mubr.f32.gmra.mxu0 %v4614
      %v4755 = vpop.f32.mrf.mxu0
      %v4756 = vadd.f32 %v4569, %v4755
      %v4757 = vpop.f32.mrf.mxu0
      %4758 = vmatprep.mubr.f32.mxu0 0.0
      %4759 = vmatmul.mubr.f32.gmra.mxu0 %v4617
      %v4760 = vpop.f32.mrf.mxu0
      %v4761 = vadd.f32 %v4569, %v4760
      %v4762 = vpop.f32.mrf.mxu0
      %4763 = vdwg.mxu0
      %vm4764 = vcmask 31744
      %4765 = vst.msk [vmem:[%s334] sm:$0xff] %vm4764, %v4686
      %4766 = vst.msk [vmem:[%s334 + $0x8] sm:$0xff] %vm4764, %v4691
      %4767 = vst.msk [vmem:[%s334 + $0x10] sm:$0xff] %vm4764, %v4696
      %4768 = vst.msk [vmem:[%s334 + $0x18] sm:$0xff] %vm4764, %v4701
      %4769 = vst.msk [vmem:[%s334 + $0x20] sm:$0xff] %vm4764, %v4706
      %4770 = vst.msk [vmem:[%s334 + $0x28] sm:$0xff] %vm4764, %v4711
      %4771 = vst.msk [vmem:[%s334 + $0x30] sm:$0xff] %vm4764, %v4716
      %4772 = vst.msk [vmem:[%s334 + $0x38] sm:$0xff] %vm4764, %v4721
      %4773 = vst.msk [vmem:[%s334 + $0x40] sm:$0xff] %vm4764, %v4726
      %4774 = vst.msk [vmem:[%s334 + $0x48] sm:$0xff] %vm4764, %v4731
      %4775 = vst.msk [vmem:[%s334 + $0x50] sm:$0xff] %vm4764, %v4736
      %4776 = vst.msk [vmem:[%s334 + $0x58] sm:$0xff] %vm4764, %v4741
      %4777 = vst.msk [vmem:[%s334 + $0x60] sm:$0xff] %vm4764, %v4746
      %4778 = vst.msk [vmem:[%s334 + $0x68] sm:$0xff] %vm4764, %v4751
      %4779 = vst.msk [vmem:[%s334 + $0x70] sm:$0xff] %vm4764, %v4756
      %4780 = vst.msk [vmem:[%s334 + $0x78] sm:$0xff] %vm4764, %v4761
      %s4781 = smul.u32 16, %s20
      %p4782 = scmp.lt.s32.totalorder %s4781, 31
      %s4783 = scalar_select %p4782, %s4781, 31
      %s4784 = smul.addr %s4783, 8
      %s4785 = scalar_lea.vmem %s9, %s4784
      // Predicated region
      $region57: #{tpu_custom_call.1} parent=55 // pred_check
        %p4786 = pneg %p232
      $region58: #{tpu_custom_call.1} parent=55 // pred_check_branch
        %4788 = sbr.rel (%p4786) target = $region60
      $region59: #{tpu_custom_call.1} parent=55 // pred_region
        %s4789 = smul.u32 16, %s20
      $region60: #{tpu_custom_call.1} parent=55 // pred_fallthru
        _
    $region56: #{tpu_custom_call.1} parent=5 // pred_fallthru
      _
    %p4790 = scmp.le.s32.totalorder 2, %s15
    // Predicated region
    $region61: #{tpu_custom_call.1} parent=5 // pred_check
      %p4791 = pneg %p4790
    $region62: #{tpu_custom_call.1} parent=5 // pred_check_branch
      %4793 = sbr.rel (%p4791) target = $region64
    $region63: #{tpu_custom_call.1} parent=5 // pred_region
      %s4794 = ssub.s32 %s15, 2
      // Predicated region
      $region65: #{tpu_custom_call.1} parent=63 // pred_check
        %p4795 = pneg %p238
      $region66: #{tpu_custom_call.1} parent=63 // pred_check_branch
        %4797 = sbr.rel (%p4795) target = $region68
      $region67: #{tpu_custom_call.1} parent=63 // pred_region
        %s4798 = smul.u32 16, %s21
        %p4799 = scmp.lt.s32.totalorder %s4798, 31
        %s4800 = scalar_select %p4799, %s4798, 31
        %s4801 = smul.addr %s4800, 8
        %s4802 = scalar_lea.vmem %s9, %s4801
      $region68: #{tpu_custom_call.1} parent=63 // pred_fallthru
        _
    $region64: #{tpu_custom_call.1} parent=5 // pred_fallthru
      _
  $region6: #{tpu_custom_call.1} parent=0 // loop_footer
    %s19 = sadd.s32 1, %s15
  $region7: #{tpu_custom_call.1} parent=0 // loop_footer_branch
    %14 = sbr.rel target = $region3
  $region8: #{tpu_custom_call.1} parent=0 // loop_exit
    _

</llo_original>
